<compile_context>
chip_gen: v5e
topology: v5e:2x2
jax: 0.10.0
libtpu: 0.0.40
codegen_flags: <defaults>
</compile_context>

<pallas_src>
import jax
import jax.numpy as jnp
from jax.experimental import pallas as pl
from jax.experimental.pallas import tpu as pltpu


_VMEM_LIMIT = 32 * 1024 * 1024   # explicit scoped-VMEM limit (fits v5e/v6e/v7x)


def _round_up(x, m):
    return (x + m - 1) // m * m


def _choose_row_tile(m, *, max_tile=512, align=128):
    """Lane-axis tile: multiple of 128, capped so grid >= 2 when m allows (v7x)."""
    if m <= align:
        return align
    half = _round_up((m + 1) // 2, align)
    return min(max_tile, half)


def _choose_batch_tile(n, *, max_tile=64, align=16):
    """Batch tile: multiple of 16 (bf16 sublane packing), grid >= 2 when possible."""
    if n <= align:
        return align
    half = _round_up((n + 1) // 2, align)
    return min(max_tile, half)


# ----------------------------- Pallas kernels ------------------------------ #

def _conv1_kernel(p_ref, w_ref, b_ref, o_ref):
    # p_ref: (4, 25, TM) bf16  pool-offset-major, transposed im2col patches
    # w_ref: (10, 25) bf16     b_ref: (10, 1) f32     o_ref: (10, TM) bf16
    w = w_ref[...]
    z = jnp.dot(w, p_ref[0], preferred_element_type=jnp.float32)
    for t in range(1, 4):                      # running max over 2x2 pool offsets
        z = jnp.maximum(z, jnp.dot(w, p_ref[t], preferred_element_type=jnp.float32))
    # per-channel bias commutes with the max-pool; ReLU after pool (PyTorch order)
    o_ref[...] = jnp.maximum(z + b_ref[...], 0.0).astype(o_ref.dtype)


def _conv2_mlp_kernel(p_ref, w2_ref, b2_ref, w1_ref, b1_ref, w3_ref, b3_ref, o_ref):
    # p_ref:  (4, 16, TB, 256) bf16  conv2 patches (pool-offset, position, batch, K)
    # w2_ref: (256, 32) bf16   b2_ref: (1, 32) f32
    # w1_ref: (16, 32, 64) bf16 (per-position fc1 weights)   b1_ref: (1, 64) f32
    # w3_ref: (64, 10) bf16    b3_ref: (1, 10) f32           o_ref: (TB, 10) f32
    _, npos, tb, k2 = p_ref.shape
    cout = w2_ref.shape[1]
    w2 = w2_ref[...]

    def offset_mm(t):
        return jnp.dot(p_ref[t].reshape(npos * tb, k2), w2,
                       preferred_element_type=jnp.float32)

    z = offset_mm(0)
    for t in range(1, 4):                      # 2x2 max-pool as running max
        z = jnp.maximum(z, offset_mm(t))
    # bias commutes with max; ReLU after pool.
    # TODO(synk): nn.Dropout2d after conv2 is identity (eval mode).
    a2 = jnp.maximum(z + b2_ref[...], 0.0).reshape(npos, tb, cout)   # (16, TB, 32)

    # fc1 with the NCHW flatten folded into 16 per-position matmuls (no reshape
    # across tiled dims needed): h[b,j] = sum_p a2[p,b,:] @ w1[p,:,j]
    h = jnp.zeros((tb, b1_ref.shape[-1]), jnp.float32) + b1_ref[...]
    for p in range(npos):
        h = h + jnp.dot(a2[p].astype(w1_ref.dtype), w1_ref[p],
                        preferred_element_type=jnp.float32)
    h = jnp.maximum(h, 0.0)
    # TODO(synk): F.dropout(x, training=self.training) -> identity at inference.

    logits = jnp.dot(h.astype(w3_ref.dtype), w3_ref[...],
                     preferred_element_type=jnp.float32) + b3_ref[...]
    m = jnp.max(logits, axis=-1, keepdims=True)
    lse = m + jnp.log(jnp.sum(jnp.exp(logits - m), axis=-1, keepdims=True))
    o_ref[...] = logits - lse                  # log_softmax over dim=1 (stable, f32)


# ------------------------------ wrappers ----------------------------------- #

def conv1_stage(p1t, w, b, *, tile):
    _, k, mpad = p1t.shape
    cout = w.shape[0]
    return pl.pallas_call(
        _conv1_kernel,
        out_shape=jax.ShapeDtypeStruct((cout, mpad), jnp.bfloat16),
        grid=(mpad // tile,),
        in_specs=[
            pl.BlockSpec((4, k, tile), lambda i: (0, 0, i)),
            pl.BlockSpec((cout, k), lambda i: (0, 0)),
            pl.BlockSpec((cout, 1), lambda i: (0, 0)),
        ],
        out_specs=pl.BlockSpec((cout, tile), lambda i: (0, i)),
        compiler_params=pltpu.CompilerParams(
            dimension_semantics=("parallel",),
            vmem_limit_bytes=_VMEM_LIMIT,
        ),
    )(p1t, w, b)


def conv2_mlp_stage(p2, w2, b2, w1f, b1, w3, b3, *, tile):
    _, npos, npad, k2 = p2.shape
    nclass = w3.shape[1]
    return pl.pallas_call(
        _conv2_mlp_kernel,
        out_shape=jax.ShapeDtypeStruct((npad, nclass), jnp.float32),
        grid=(npad // tile,),
        in_specs=[
            pl.BlockSpec((4, npos, tile, k2), lambda i: (0, 0, i, 0)),
            pl.BlockSpec(w2.shape, lambda i: (0, 0)),
            pl.BlockSpec(b2.shape, lambda i: (0, 0)),
            pl.BlockSpec(w1f.shape, lambda i: (0, 0, 0)),
            pl.BlockSpec(b1.shape, lambda i: (0, 0)),
            pl.BlockSpec(w3.shape, lambda i: (0, 0)),
            pl.BlockSpec(b3.shape, lambda i: (0, 0)),
        ],
        out_specs=pl.BlockSpec((tile, nclass), lambda i: (i, 0)),
        compiler_params=pltpu.CompilerParams(
            dimension_semantics=("parallel",),
            vmem_limit_bytes=_VMEM_LIMIT,
        ),
    )(p2, w2, b2, w1f, b1, w3, b3)


# ------------------------------ params & glue ------------------------------- #

def init_params(key):
    ks = jax.random.split(key, 8)
    conv1_w = jax.random.normal(ks[0], (10, 1, 5, 5), jnp.float32) * 0.2   # PyTorch (Cout,Cin,KH,KW)
    conv1_b = jax.random.normal(ks[1], (10,), jnp.float32) * 0.1
    conv2_w = jax.random.normal(ks[2], (20, 10, 5, 5), jnp.float32) * 0.1
    conv2_b = jax.random.normal(ks[3], (20,), jnp.float32) * 0.1
    fc1_w = jax.random.normal(ks[4], (50, 320), jnp.float32) * 0.05        # PyTorch (out,in)
    fc1_b = jax.random.normal(ks[5], (50,), jnp.float32) * 0.05
    fc2_w = jax.random.normal(ks[6], (10, 50), jnp.float32) * 0.1
    fc2_b = jax.random.normal(ks[7], (10,), jnp.float32) * 0.1

    # conv1 weights as (Cout=10, K=25), K index = di*5 + dj.
    w1m = conv1_w.reshape(10, 25).astype(jnp.bfloat16)
    b1c = conv1_b.reshape(10, 1)

    # conv2 weights as (K2, Cout): K2 index = c*25 + di*5 + dj; pad 250->256
    # rows (MXU depth) and 20->32 output channels (zeros).
    w2m = jnp.transpose(conv2_w, (1, 2, 3, 0)).reshape(250, 20)
    w2m = jnp.pad(w2m, ((0, 6), (0, 12))).astype(jnp.bfloat16)
    b2c = jnp.pad(conv2_b, (0, 12)).reshape(1, 32)

    # fc1: PyTorch NCHW flatten index = c*16 + (h2*4 + w2).  Kernel consumes
    # the pooled activations as (pos=16, batch, channel), so store the weights
    # as (pos, channel, hidden) and pad channel 20->32, hidden 50->64.
    w1f = fc1_w.reshape(50, 20, 16).transpose(2, 1, 0)       # (16, 20, 50)
    w1f = jnp.pad(w1f, ((0, 0), (0, 12), (0, 14))).astype(jnp.bfloat16)
    fc1b = jnp.pad(fc1_b, (0, 14)).reshape(1, 64)

    # fc2: (10, 50) -> (64, 10) with zero rows for the padded hidden units.
    fc2w = jnp.pad(fc2_w.T, ((0, 14), (0, 0))).astype(jnp.bfloat16)
    fc2b = fc2_b.reshape(1, 10)

    return {"w1m": w1m, "b1": b1c, "w2m": w2m, "b2": b2c,
            "fc1w": w1f, "fc1b": fc1b, "fc2w": fc2w, "fc2b": fc2b}


def net_forward(params, x_nchw):
    n = x_nchw.shape[0]
    x = x_nchw[:, 0].astype(jnp.bfloat16)                    # (N, 28, 28), Cin=1

    # ---- stage-1 glue: im2col + 2x2-pool arrangement, transposed so the row
    #      dimension (N*12*12) is the lane axis of the kernel operands.
    cols = [x[:, i:i + 24, j:j + 24] for i in range(5) for j in range(5)]
    pat = jnp.stack(cols, axis=0)                            # (25, N, 24, 24)
    pat = pat.reshape(25, n, 12, 2, 12, 2)                   # (off, N, h1, pi, w1, pj)
    pat = pat.transpose(3, 5, 0, 1, 2, 4)                    # (pi, pj, off, N, h1, w1)
    m1 = n * 144
    tm = _choose_row_tile(m1)
    mpad = _round_up(m1, tm)
    p1t = pat.reshape(4, 25, m1)
    p1t = jnp.pad(p1t, ((0, 0), (0, 0), (0, mpad - m1)))

    # conv1 -> maxpool(2) -> relu   (lane-dense (10, M) output)
    a1t = conv1_stage(p1t, params["w1m"], params["b1"], tile=tm)   # (10, mpad) bf16
    a1 = a1t[:, :m1].reshape(10, n, 12, 12)                  # channel-major activations

    # ---- stage-2 glue: conv2 im2col + pool arrangement, batch on its own axis
    #      so the fused conv2+MLP kernel can be tiled over the batch.
    cols2 = [a1[:, :, i:i + 8, j:j + 8] for i in range(5) for j in range(5)]
    pat2 = jnp.stack(cols2, axis=-1)                         # (10, N, 8, 8, 25)
    pat2 = pat2.reshape(10, n, 4, 2, 4, 2, 25)               # (C, N, h2, pi, w2, pj, off)
    pat2 = pat2.transpose(3, 5, 2, 4, 1, 0, 6)               # (pi, pj, h2, w2, N, C, off)
    p2 = pat2.reshape(4, 16, n, 250)
    tb = _choose_batch_tile(n)
    npad = _round_up(n, tb)
    p2 = jnp.pad(p2, ((0, 0), (0, 0), (0, npad - n), (0, 6)))  # batch pad, K 250->256

    # conv2 -> dropout2d(identity) -> maxpool(2) -> relu -> flatten -> fc1 ->
    # relu -> dropout(identity) -> fc2 -> log_softmax, all in one kernel.
    out = conv2_mlp_stage(p2, params["w2m"], params["b2"],
                          params["fc1w"], params["fc1b"],
                          params["fc2w"], params["fc2b"], tile=tb)
    return out[:n]


if __name__ == "__main__":
    key = jax.random.PRNGKey(0)
    k_param, k_x = jax.random.split(key)
    params = init_params(k_param)
    x = jax.random.normal(k_x, (2, 1, 28, 28), jnp.float32)   # NCHW, MNIST-sized

    out = jax.jit(net_forward)(params, x)
    out = jax.block_until_ready(out)

    assert out.shape == (2, 10), out.shape
    assert bool(jnp.all(jnp.isfinite(out)))
    # log_softmax rows must exponentiate-sum to 1
    assert bool(jnp.allclose(jnp.sum(jnp.exp(out), axis=-1), 1.0, atol=1e-4))
    print("KERNEL_OK")
</pallas_src>

<mosaic_0001>
module attributes {stable_mosaic.version = 11 : i64} {
  func.func @_conv1_kernel(%arg0: i32, %arg1: memref<4x25x256xbf16, #tpu.memory_space<vmem>>, %arg2: memref<10x25xbf16, #tpu.memory_space<vmem>>, %arg3: memref<10x1xf32, #tpu.memory_space<vmem>>, %arg4: memref<10x256xbf16, #tpu.memory_space<vmem>>) attributes {dimension_semantics = [#tpu.dimension_semantics<parallel>], iteration_bounds = array<i64: 2>, scalar_prefetch = 0 : i64, scratch_operands = 0 : i64, tpu.core_type = #tpu.core_type<tc>, window_params = [{transform_indices = @transform_0, window_bounds = array<i64: 4, 25, 256>}, {pipeline_mode = #tpu.pipeline_mode<synchronous>, transform_indices = @transform_1, window_bounds = array<i64: 10, 25>}, {pipeline_mode = #tpu.pipeline_mode<synchronous>, transform_indices = @transform_2, window_bounds = array<i64: 10, 1>}, {transform_indices = @transform_3, window_bounds = array<i64: 10, 256>}]} {
    %c0 = arith.constant 0 : index
    %c0_0 = arith.constant 0 : index
    %0 = vector.load %arg2[%c0, %c0_0] : memref<10x25xbf16, #tpu.memory_space<vmem>>, vector<10x25xbf16>
    %c0_1 = arith.constant 0 : index
    %c0_2 = arith.constant 0 : index
    %c0_3 = arith.constant 0 : index
    %1 = vector.load %arg1[%c0_1, %c0_2, %c0_3] : memref<4x25x256xbf16, #tpu.memory_space<vmem>>, vector<1x25x256xbf16>
    %2 = vector.shape_cast %1 : vector<1x25x256xbf16> to vector<25x256xbf16>
    %cst = arith.constant dense<0.000000e+00> : vector<10x256xf32>
    %3 = tpu.matmul %0, %2, %cst {dimension_numbers = #tpu.dot_dimension_numbers<[1], [0], [0], [1], [0, 0, 1, 1], [], []>} : vector<10x25xbf16>, vector<25x256xbf16>, vector<10x256xf32> -> vector<10x256xf32>
    %c1 = arith.constant 1 : index
    %c0_4 = arith.constant 0 : index
    %c0_5 = arith.constant 0 : index
    %4 = vector.load %arg1[%c1, %c0_4, %c0_5] : memref<4x25x256xbf16, #tpu.memory_space<vmem>>, vector<1x25x256xbf16>
    %5 = vector.shape_cast %4 : vector<1x25x256xbf16> to vector<25x256xbf16>
    %cst_6 = arith.constant dense<0.000000e+00> : vector<10x256xf32>
    %6 = tpu.matmul %0, %5, %cst_6 {dimension_numbers = #tpu.dot_dimension_numbers<[1], [0], [0], [1], [0, 0, 1, 1], [], []>} : vector<10x25xbf16>, vector<25x256xbf16>, vector<10x256xf32> -> vector<10x256xf32>
    %7 = arith.maximumf %3, %6 : vector<10x256xf32>
    %c2 = arith.constant 2 : index
    %c0_7 = arith.constant 0 : index
    %c0_8 = arith.constant 0 : index
    %8 = vector.load %arg1[%c2, %c0_7, %c0_8] : memref<4x25x256xbf16, #tpu.memory_space<vmem>>, vector<1x25x256xbf16>
    %9 = vector.shape_cast %8 : vector<1x25x256xbf16> to vector<25x256xbf16>
    %cst_9 = arith.constant dense<0.000000e+00> : vector<10x256xf32>
    %10 = tpu.matmul %0, %9, %cst_9 {dimension_numbers = #tpu.dot_dimension_numbers<[1], [0], [0], [1], [0, 0, 1, 1], [], []>} : vector<10x25xbf16>, vector<25x256xbf16>, vector<10x256xf32> -> vector<10x256xf32>
    %11 = arith.maximumf %7, %10 : vector<10x256xf32>
    %c3 = arith.constant 3 : index
    %c0_10 = arith.constant 0 : index
    %c0_11 = arith.constant 0 : index
    %12 = vector.load %arg1[%c3, %c0_10, %c0_11] : memref<4x25x256xbf16, #tpu.memory_space<vmem>>, vector<1x25x256xbf16>
    %13 = vector.shape_cast %12 : vector<1x25x256xbf16> to vector<25x256xbf16>
    %cst_12 = arith.constant dense<0.000000e+00> : vector<10x256xf32>
    %14 = tpu.matmul %0, %13, %cst_12 {dimension_numbers = #tpu.dot_dimension_numbers<[1], [0], [0], [1], [0, 0, 1, 1], [], []>} : vector<10x25xbf16>, vector<25x256xbf16>, vector<10x256xf32> -> vector<10x256xf32>
    %15 = arith.maximumf %11, %14 : vector<10x256xf32>
    %c0_13 = arith.constant 0 : index
    %c0_14 = arith.constant 0 : index
    %16 = vector.load %arg3[%c0_13, %c0_14] : memref<10x1xf32, #tpu.memory_space<vmem>>, vector<10x1xf32>
    %17 = vector.broadcast %16 : vector<10x1xf32> to vector<10x256xf32>
    %18 = arith.addf %15, %17 : vector<10x256xf32>
    %cst_15 = arith.constant 0.000000e+00 : f32
    %19 = vector.broadcast %cst_15 : f32 to vector<10x256xf32>
    %20 = arith.maximumf %18, %19 : vector<10x256xf32>
    %21 = arith.truncf %20 : vector<10x256xf32> to vector<10x256xbf16>
    %c0_16 = arith.constant 0 : index
    %c0_17 = arith.constant 0 : index
    %22 = vector.load %arg4[%c0_16, %c0_17] : memref<10x256xbf16, #tpu.memory_space<vmem>>, vector<10x256xbf16>
    tpu.vector_store %arg4[%c0_16, %c0_17], %21 {strides = array<i32>} : memref<10x256xbf16, #tpu.memory_space<vmem>>, vector<10x256xbf16>,
    return
  }
  func.func @transform_0(%arg0: i32) -> (i32, i32, i32) {
    %c0_i32 = arith.constant 0 : i32
    %c0_i32_0 = arith.constant 0 : i32
    %c0_i32_1 = arith.constant 0 : i32
    return %c0_i32, %c0_i32_0, %arg0 : i32, i32, i32
  }
  func.func @transform_1(%arg0: i32) -> (i32, i32) {
    %c0_i32 = arith.constant 0 : i32
    %c0_i32_0 = arith.constant 0 : i32
    %c0_i32_1 = arith.constant 0 : i32
    return %c0_i32, %c0_i32_0 : i32, i32
  }
  func.func @transform_2(%arg0: i32) -> (i32, i32) {
    %c0_i32 = arith.constant 0 : i32
    %c0_i32_0 = arith.constant 0 : i32
    %c0_i32_1 = arith.constant 0 : i32
    return %c0_i32, %c0_i32_0 : i32, i32
  }
  func.func @transform_3(%arg0: i32) -> (i32, i32) {
    %c0_i32 = arith.constant 0 : i32
    %c0_i32_0 = arith.constant 0 : i32
    return %c0_i32, %arg0 : i32, i32
  }
}

module attributes {stable_mosaic.version = 11 : i64} {
  func.func @_conv2_mlp_kernel(%arg0: i32, %arg1: memref<4x16x16x256xbf16, #tpu.memory_space<vmem>>, %arg2: memref<256x32xbf16, #tpu.memory_space<vmem>>, %arg3: memref<1x32xf32, #tpu.memory_space<vmem>>, %arg4: memref<16x32x64xbf16, #tpu.memory_space<vmem>>, %arg5: memref<1x64xf32, #tpu.memory_space<vmem>>, %arg6: memref<64x10xbf16, #tpu.memory_space<vmem>>, %arg7: memref<1x10xf32, #tpu.memory_space<vmem>>, %arg8: memref<16x10xf32, #tpu.memory_space<vmem>>) attributes {dimension_semantics = [#tpu.dimension_semantics<parallel>], iteration_bounds = array<i64: 1>, scalar_prefetch = 0 : i64, scratch_operands = 0 : i64, tpu.core_type = #tpu.core_type<tc>, window_params = [{transform_indices = @transform_0, window_bounds = array<i64: 4, 16, 16, 256>}, {pipeline_mode = #tpu.pipeline_mode<synchronous>, transform_indices = @transform_1, window_bounds = array<i64: 256, 32>}, {pipeline_mode = #tpu.pipeline_mode<synchronous>, transform_indices = @transform_2, window_bounds = array<i64: 1, 32>}, {pipeline_mode = #tpu.pipeline_mode<synchronous>, transform_indices = @transform_3, window_bounds = array<i64: 16, 32, 64>}, {pipeline_mode = #tpu.pipeline_mode<synchronous>, transform_indices = @transform_4, window_bounds = array<i64: 1, 64>}, {pipeline_mode = #tpu.pipeline_mode<synchronous>, transform_indices = @transform_5, window_bounds = array<i64: 64, 10>}, {pipeline_mode = #tpu.pipeline_mode<synchronous>, transform_indices = @transform_6, window_bounds = array<i64: 1, 10>}, {transform_indices = @transform_7, window_bounds = array<i64: 16, 10>}]} {
    %c0 = arith.constant 0 : index
    %c0_0 = arith.constant 0 : index
    %0 = vector.load %arg2[%c0, %c0_0] : memref<256x32xbf16, #tpu.memory_space<vmem>>, vector<256x32xbf16>
    %c0_1 = arith.constant 0 : index
    %c0_2 = arith.constant 0 : index
    %c0_3 = arith.constant 0 : index
    %c0_4 = arith.constant 0 : index
    %1 = vector.load %arg1[%c0_1, %c0_2, %c0_3, %c0_4] : memref<4x16x16x256xbf16, #tpu.memory_space<vmem>>, vector<1x16x16x256xbf16>
    %2 = vector.shape_cast %1 : vector<1x16x16x256xbf16> to vector<16x16x256xbf16>
    %3 = vector.shape_cast %2 : vector<16x16x256xbf16> to vector<256x256xbf16>
    %cst = arith.constant dense<0.000000e+00> : vector<256x32xf32>
    %4 = tpu.matmul %3, %0, %cst {dimension_numbers = #tpu.dot_dimension_numbers<[1], [0], [0], [1], [0, 0, 1, 1], [], []>} : vector<256x256xbf16>, vector<256x32xbf16>, vector<256x32xf32> -> vector<256x32xf32>
    %c1 = arith.constant 1 : index
    %c0_5 = arith.constant 0 : index
    %c0_6 = arith.constant 0 : index
    %c0_7 = arith.constant 0 : index
    %5 = vector.load %arg1[%c1, %c0_5, %c0_6, %c0_7] : memref<4x16x16x256xbf16, #tpu.memory_space<vmem>>, vector<1x16x16x256xbf16>
    %6 = vector.shape_cast %5 : vector<1x16x16x256xbf16> to vector<16x16x256xbf16>
    %7 = vector.shape_cast %6 : vector<16x16x256xbf16> to vector<256x256xbf16>
    %cst_8 = arith.constant dense<0.000000e+00> : vector<256x32xf32>
    %8 = tpu.matmul %7, %0, %cst_8 {dimension_numbers = #tpu.dot_dimension_numbers<[1], [0], [0], [1], [0, 0, 1, 1], [], []>} : vector<256x256xbf16>, vector<256x32xbf16>, vector<256x32xf32> -> vector<256x32xf32>
    %9 = arith.maximumf %4, %8 : vector<256x32xf32>
    %c2 = arith.constant 2 : index
    %c0_9 = arith.constant 0 : index
    %c0_10 = arith.constant 0 : index
    %c0_11 = arith.constant 0 : index
    %10 = vector.load %arg1[%c2, %c0_9, %c0_10, %c0_11] : memref<4x16x16x256xbf16, #tpu.memory_space<vmem>>, vector<1x16x16x256xbf16>
    %11 = vector.shape_cast %10 : vector<1x16x16x256xbf16> to vector<16x16x256xbf16>
    %12 = vector.shape_cast %11 : vector<16x16x256xbf16> to vector<256x256xbf16>
    %cst_12 = arith.constant dense<0.000000e+00> : vector<256x32xf32>
    %13 = tpu.matmul %12, %0, %cst_12 {dimension_numbers = #tpu.dot_dimension_numbers<[1], [0], [0], [1], [0, 0, 1, 1], [], []>} : vector<256x256xbf16>, vector<256x32xbf16>, vector<256x32xf32> -> vector<256x32xf32>
    %14 = arith.maximumf %9, %13 : vector<256x32xf32>
    %c3 = arith.constant 3 : index
    %c0_13 = arith.constant 0 : index
    %c0_14 = arith.constant 0 : index
    %c0_15 = arith.constant 0 : index
    %15 = vector.load %arg1[%c3, %c0_13, %c0_14, %c0_15] : memref<4x16x16x256xbf16, #tpu.memory_space<vmem>>, vector<1x16x16x256xbf16>
    %16 = vector.shape_cast %15 : vector<1x16x16x256xbf16> to vector<16x16x256xbf16>
    %17 = vector.shape_cast %16 : vector<16x16x256xbf16> to vector<256x256xbf16>
    %cst_16 = arith.constant dense<0.000000e+00> : vector<256x32xf32>
    %18 = tpu.matmul %17, %0, %cst_16 {dimension_numbers = #tpu.dot_dimension_numbers<[1], [0], [0], [1], [0, 0, 1, 1], [], []>} : vector<256x256xbf16>, vector<256x32xbf16>, vector<256x32xf32> -> vector<256x32xf32>
    %19 = arith.maximumf %14, %18 : vector<256x32xf32>
    %c0_17 = arith.constant 0 : index
    %c0_18 = arith.constant 0 : index
    %20 = vector.load %arg3[%c0_17, %c0_18] : memref<1x32xf32, #tpu.memory_space<vmem>>, vector<1x32xf32>
    %21 = vector.broadcast %20 : vector<1x32xf32> to vector<256x32xf32>
    %22 = arith.addf %19, %21 : vector<256x32xf32>
    %cst_19 = arith.constant 0.000000e+00 : f32
    %23 = vector.broadcast %cst_19 : f32 to vector<256x32xf32>
    %24 = arith.maximumf %22, %23 : vector<256x32xf32>
    %25 = vector.shape_cast %24 : vector<256x32xf32> to vector<16x16x32xf32>
    %cst_20 = arith.constant 0.000000e+00 : f32
    %26 = vector.broadcast %cst_20 : f32 to vector<16x64xf32>
    %c0_21 = arith.constant 0 : index
    %c0_22 = arith.constant 0 : index
    %27 = vector.load %arg5[%c0_21, %c0_22] : memref<1x64xf32, #tpu.memory_space<vmem>>, vector<1x64xf32>
    %28 = vector.broadcast %27 : vector<1x64xf32> to vector<16x64xf32>
    %29 = arith.addf %26, %28 : vector<16x64xf32>
    %30 = vector.extract_strided_slice %25 {offsets = [0, 0, 0], sizes = [1, 16, 32], strides = [1, 1, 1]} : vector<16x16x32xf32> to vector<1x16x32xf32>
    %31 = vector.shape_cast %30 : vector<1x16x32xf32> to vector<16x32xf32>
    %32 = arith.truncf %31 : vector<16x32xf32> to vector<16x32xbf16>
    %c0_23 = arith.constant 0 : index
    %c0_24 = arith.constant 0 : index
    %c0_25 = arith.constant 0 : index
    %33 = vector.load %arg4[%c0_23, %c0_24, %c0_25] : memref<16x32x64xbf16, #tpu.memory_space<vmem>>, vector<1x32x64xbf16>
    %34 = vector.shape_cast %33 : vector<1x32x64xbf16> to vector<32x64xbf16>
    %cst_26 = arith.constant dense<0.000000e+00> : vector<16x64xf32>
    %35 = tpu.matmul %32, %34, %cst_26 {dimension_numbers = #tpu.dot_dimension_numbers<[1], [0], [0], [1], [0, 0, 1, 1], [], []>} : vector<16x32xbf16>, vector<32x64xbf16>, vector<16x64xf32> -> vector<16x64xf32>
    %36 = arith.addf %29, %35 : vector<16x64xf32>
    %37 = vector.extract_strided_slice %25 {offsets = [1, 0, 0], sizes = [1, 16, 32], strides = [1, 1, 1]} : vector<16x16x32xf32> to vector<1x16x32xf32>
    %38 = vector.shape_cast %37 : vector<1x16x32xf32> to vector<16x32xf32>
    %39 = arith.truncf %38 : vector<16x32xf32> to vector<16x32xbf16>
    %c1_27 = arith.constant 1 : index
    %c0_28 = arith.constant 0 : index
    %c0_29 = arith.constant 0 : index
    %40 = vector.load %arg4[%c1_27, %c0_28, %c0_29] : memref<16x32x64xbf16, #tpu.memory_space<vmem>>, vector<1x32x64xbf16>
    %41 = vector.shape_cast %40 : vector<1x32x64xbf16> to vector<32x64xbf16>
    %cst_30 = arith.constant dense<0.000000e+00> : vector<16x64xf32>
    %42 = tpu.matmul %39, %41, %cst_30 {dimension_numbers = #tpu.dot_dimension_numbers<[1], [0], [0], [1], [0, 0, 1, 1], [], []>} : vector<16x32xbf16>, vector<32x64xbf16>, vector<16x64xf32> -> vector<16x64xf32>
    %43 = arith.addf %36, %42 : vector<16x64xf32>
    %44 = vector.extract_strided_slice %25 {offsets = [2, 0, 0], sizes = [1, 16, 32], strides = [1, 1, 1]} : vector<16x16x32xf32> to vector<1x16x32xf32>
    %45 = vector.shape_cast %44 : vector<1x16x32xf32> to vector<16x32xf32>
    %46 = arith.truncf %45 : vector<16x32xf32> to vector<16x32xbf16>
    %c2_31 = arith.constant 2 : index
    %c0_32 = arith.constant 0 : index
    %c0_33 = arith.constant 0 : index
    %47 = vector.load %arg4[%c2_31, %c0_32, %c0_33] : memref<16x32x64xbf16, #tpu.memory_space<vmem>>, vector<1x32x64xbf16>
    %48 = vector.shape_cast %47 : vector<1x32x64xbf16> to vector<32x64xbf16>
    %cst_34 = arith.constant dense<0.000000e+00> : vector<16x64xf32>
    %49 = tpu.matmul %46, %48, %cst_34 {dimension_numbers = #tpu.dot_dimension_numbers<[1], [0], [0], [1], [0, 0, 1, 1], [], []>} : vector<16x32xbf16>, vector<32x64xbf16>, vector<16x64xf32> -> vector<16x64xf32>
    %50 = arith.addf %43, %49 : vector<16x64xf32>
    %51 = vector.extract_strided_slice %25 {offsets = [3, 0, 0], sizes = [1, 16, 32], strides = [1, 1, 1]} : vector<16x16x32xf32> to vector<1x16x32xf32>
    %52 = vector.shape_cast %51 : vector<1x16x32xf32> to vector<16x32xf32>
    %53 = arith.truncf %52 : vector<16x32xf32> to vector<16x32xbf16>
    %c3_35 = arith.constant 3 : index
    %c0_36 = arith.constant 0 : index
    %c0_37 = arith.constant 0 : index
    %54 = vector.load %arg4[%c3_35, %c0_36, %c0_37] : memref<16x32x64xbf16, #tpu.memory_space<vmem>>, vector<1x32x64xbf16>
    %55 = vector.shape_cast %54 : vector<1x32x64xbf16> to vector<32x64xbf16>
    %cst_38 = arith.constant dense<0.000000e+00> : vector<16x64xf32>
    %56 = tpu.matmul %53, %55, %cst_38 {dimension_numbers = #tpu.dot_dimension_numbers<[1], [0], [0], [1], [0, 0, 1, 1], [], []>} : vector<16x32xbf16>, vector<32x64xbf16>, vector<16x64xf32> -> vector<16x64xf32>
    %57 = arith.addf %50, %56 : vector<16x64xf32>
    %58 = vector.extract_strided_slice %25 {offsets = [4, 0, 0], sizes = [1, 16, 32], strides = [1, 1, 1]} : vector<16x16x32xf32> to vector<1x16x32xf32>
    %59 = vector.shape_cast %58 : vector<1x16x32xf32> to vector<16x32xf32>
    %60 = arith.truncf %59 : vector<16x32xf32> to vector<16x32xbf16>
    %c4 = arith.constant 4 : index
    %c0_39 = arith.constant 0 : index
    %c0_40 = arith.constant 0 : index
    %61 = vector.load %arg4[%c4, %c0_39, %c0_40] : memref<16x32x64xbf16, #tpu.memory_space<vmem>>, vector<1x32x64xbf16>
    %62 = vector.shape_cast %61 : vector<1x32x64xbf16> to vector<32x64xbf16>
    %cst_41 = arith.constant dense<0.000000e+00> : vector<16x64xf32>
    %63 = tpu.matmul %60, %62, %cst_41 {dimension_numbers = #tpu.dot_dimension_numbers<[1], [0], [0], [1], [0, 0, 1, 1], [], []>} : vector<16x32xbf16>, vector<32x64xbf16>, vector<16x64xf32> -> vector<16x64xf32>
    %64 = arith.addf %57, %63 : vector<16x64xf32>
    %65 = vector.extract_strided_slice %25 {offsets = [5, 0, 0], sizes = [1, 16, 32], strides = [1, 1, 1]} : vector<16x16x32xf32> to vector<1x16x32xf32>
    %66 = vector.shape_cast %65 : vector<1x16x32xf32> to vector<16x32xf32>
    %67 = arith.truncf %66 : vector<16x32xf32> to vector<16x32xbf16>
    %c5 = arith.constant 5 : index
    %c0_42 = arith.constant 0 : index
    %c0_43 = arith.constant 0 : index
    %68 = vector.load %arg4[%c5, %c0_42, %c0_43] : memref<16x32x64xbf16, #tpu.memory_space<vmem>>, vector<1x32x64xbf16>
    %69 = vector.shape_cast %68 : vector<1x32x64xbf16> to vector<32x64xbf16>
    %cst_44 = arith.constant dense<0.000000e+00> : vector<16x64xf32>
    %70 = tpu.matmul %67, %69, %cst_44 {dimension_numbers = #tpu.dot_dimension_numbers<[1], [0], [0], [1], [0, 0, 1, 1], [], []>} : vector<16x32xbf16>, vector<32x64xbf16>, vector<16x64xf32> -> vector<16x64xf32>
    %71 = arith.addf %64, %70 : vector<16x64xf32>
    %72 = vector.extract_strided_slice %25 {offsets = [6, 0, 0], sizes = [1, 16, 32], strides = [1, 1, 1]} : vector<16x16x32xf32> to vector<1x16x32xf32>
    %73 = vector.shape_cast %72 : vector<1x16x32xf32> to vector<16x32xf32>
    %74 = arith.truncf %73 : vector<16x32xf32> to vector<16x32xbf16>
    %c6 = arith.constant 6 : index
    %c0_45 = arith.constant 0 : index
    %c0_46 = arith.constant 0 : index
    %75 = vector.load %arg4[%c6, %c0_45, %c0_46] : memref<16x32x64xbf16, #tpu.memory_space<vmem>>, vector<1x32x64xbf16>
    %76 = vector.shape_cast %75 : vector<1x32x64xbf16> to vector<32x64xbf16>
    %cst_47 = arith.constant dense<0.000000e+00> : vector<16x64xf32>
    %77 = tpu.matmul %74, %76, %cst_47 {dimension_numbers = #tpu.dot_dimension_numbers<[1], [0], [0], [1], [0, 0, 1, 1], [], []>} : vector<16x32xbf16>, vector<32x64xbf16>, vector<16x64xf32> -> vector<16x64xf32>
    %78 = arith.addf %71, %77 : vector<16x64xf32>
    %79 = vector.extract_strided_slice %25 {offsets = [7, 0, 0], sizes = [1, 16, 32], strides = [1, 1, 1]} : vector<16x16x32xf32> to vector<1x16x32xf32>
    %80 = vector.shape_cast %79 : vector<1x16x32xf32> to vector<16x32xf32>
    %81 = arith.truncf %80 : vector<16x32xf32> to vector<16x32xbf16>
    %c7 = arith.constant 7 : index
    %c0_48 = arith.constant 0 : index
    %c0_49 = arith.constant 0 : index
    %82 = vector.load %arg4[%c7, %c0_48, %c0_49] : memref<16x32x64xbf16, #tpu.memory_space<vmem>>, vector<1x32x64xbf16>
    %83 = vector.shape_cast %82 : vector<1x32x64xbf16> to vector<32x64xbf16>
    %cst_50 = arith.constant dense<0.000000e+00> : vector<16x64xf32>
    %84 = tpu.matmul %81, %83, %cst_50 {dimension_numbers = #tpu.dot_dimension_numbers<[1], [0], [0], [1], [0, 0, 1, 1], [], []>} : vector<16x32xbf16>, vector<32x64xbf16>, vector<16x64xf32> -> vector<16x64xf32>
    %85 = arith.addf %78, %84 : vector<16x64xf32>
    %86 = vector.extract_strided_slice %25 {offsets = [8, 0, 0], sizes = [1, 16, 32], strides = [1, 1, 1]} : vector<16x16x32xf32> to vector<1x16x32xf32>
    %87 = vector.shape_cast %86 : vector<1x16x32xf32> to vector<16x32xf32>
    %88 = arith.truncf %87 : vector<16x32xf32> to vector<16x32xbf16>
    %c8 = arith.constant 8 : index
    %c0_51 = arith.constant 0 : index
    %c0_52 = arith.constant 0 : index
    %89 = vector.load %arg4[%c8, %c0_51, %c0_52] : memref<16x32x64xbf16, #tpu.memory_space<vmem>>, vector<1x32x64xbf16>
    %90 = vector.shape_cast %89 : vector<1x32x64xbf16> to vector<32x64xbf16>
    %cst_53 = arith.constant dense<0.000000e+00> : vector<16x64xf32>
    %91 = tpu.matmul %88, %90, %cst_53 {dimension_numbers = #tpu.dot_dimension_numbers<[1], [0], [0], [1], [0, 0, 1, 1], [], []>} : vector<16x32xbf16>, vector<32x64xbf16>, vector<16x64xf32> -> vector<16x64xf32>
    %92 = arith.addf %85, %91 : vector<16x64xf32>
    %93 = vector.extract_strided_slice %25 {offsets = [9, 0, 0], sizes = [1, 16, 32], strides = [1, 1, 1]} : vector<16x16x32xf32> to vector<1x16x32xf32>
    %94 = vector.shape_cast %93 : vector<1x16x32xf32> to vector<16x32xf32>
    %95 = arith.truncf %94 : vector<16x32xf32> to vector<16x32xbf16>
    %c9 = arith.constant 9 : index
    %c0_54 = arith.constant 0 : index
    %c0_55 = arith.constant 0 : index
    %96 = vector.load %arg4[%c9, %c0_54, %c0_55] : memref<16x32x64xbf16, #tpu.memory_space<vmem>>, vector<1x32x64xbf16>
    %97 = vector.shape_cast %96 : vector<1x32x64xbf16> to vector<32x64xbf16>
    %cst_56 = arith.constant dense<0.000000e+00> : vector<16x64xf32>
    %98 = tpu.matmul %95, %97, %cst_56 {dimension_numbers = #tpu.dot_dimension_numbers<[1], [0], [0], [1], [0, 0, 1, 1], [], []>} : vector<16x32xbf16>, vector<32x64xbf16>, vector<16x64xf32> -> vector<16x64xf32>
    %99 = arith.addf %92, %98 : vector<16x64xf32>
    %100 = vector.extract_strided_slice %25 {offsets = [10, 0, 0], sizes = [1, 16, 32], strides = [1, 1, 1]} : vector<16x16x32xf32> to vector<1x16x32xf32>
    %101 = vector.shape_cast %100 : vector<1x16x32xf32> to vector<16x32xf32>
    %102 = arith.truncf %101 : vector<16x32xf32> to vector<16x32xbf16>
    %c10 = arith.constant 10 : index
    %c0_57 = arith.constant 0 : index
    %c0_58 = arith.constant 0 : index
    %103 = vector.load %arg4[%c10, %c0_57, %c0_58] : memref<16x32x64xbf16, #tpu.memory_space<vmem>>, vector<1x32x64xbf16>
    %104 = vector.shape_cast %103 : vector<1x32x64xbf16> to vector<32x64xbf16>
    %cst_59 = arith.constant dense<0.000000e+00> : vector<16x64xf32>
    %105 = tpu.matmul %102, %104, %cst_59 {dimension_numbers = #tpu.dot_dimension_numbers<[1], [0], [0], [1], [0, 0, 1, 1], [], []>} : vector<16x32xbf16>, vector<32x64xbf16>, vector<16x64xf32> -> vector<16x64xf32>
    %106 = arith.addf %99, %105 : vector<16x64xf32>
    %107 = vector.extract_strided_slice %25 {offsets = [11, 0, 0], sizes = [1, 16, 32], strides = [1, 1, 1]} : vector<16x16x32xf32> to vector<1x16x32xf32>
    %108 = vector.shape_cast %107 : vector<1x16x32xf32> to vector<16x32xf32>
    %109 = arith.truncf %108 : vector<16x32xf32> to vector<16x32xbf16>
    %c11 = arith.constant 11 : index
    %c0_60 = arith.constant 0 : index
    %c0_61 = arith.constant 0 : index
    %110 = vector.load %arg4[%c11, %c0_60, %c0_61] : memref<16x32x64xbf16, #tpu.memory_space<vmem>>, vector<1x32x64xbf16>
    %111 = vector.shape_cast %110 : vector<1x32x64xbf16> to vector<32x64xbf16>
    %cst_62 = arith.constant dense<0.000000e+00> : vector<16x64xf32>
    %112 = tpu.matmul %109, %111, %cst_62 {dimension_numbers = #tpu.dot_dimension_numbers<[1], [0], [0], [1], [0, 0, 1, 1], [], []>} : vector<16x32xbf16>, vector<32x64xbf16>, vector<16x64xf32> -> vector<16x64xf32>
    %113 = arith.addf %106, %112 : vector<16x64xf32>
    %114 = vector.extract_strided_slice %25 {offsets = [12, 0, 0], sizes = [1, 16, 32], strides = [1, 1, 1]} : vector<16x16x32xf32> to vector<1x16x32xf32>
    %115 = vector.shape_cast %114 : vector<1x16x32xf32> to vector<16x32xf32>
    %116 = arith.truncf %115 : vector<16x32xf32> to vector<16x32xbf16>
    %c12 = arith.constant 12 : index
    %c0_63 = arith.constant 0 : index
    %c0_64 = arith.constant 0 : index
    %117 = vector.load %arg4[%c12, %c0_63, %c0_64] : memref<16x32x64xbf16, #tpu.memory_space<vmem>>, vector<1x32x64xbf16>
    %118 = vector.shape_cast %117 : vector<1x32x64xbf16> to vector<32x64xbf16>
    %cst_65 = arith.constant dense<0.000000e+00> : vector<16x64xf32>
    %119 = tpu.matmul %116, %118, %cst_65 {dimension_numbers = #tpu.dot_dimension_numbers<[1], [0], [0], [1], [0, 0, 1, 1], [], []>} : vector<16x32xbf16>, vector<32x64xbf16>, vector<16x64xf32> -> vector<16x64xf32>
    %120 = arith.addf %113, %119 : vector<16x64xf32>
    %121 = vector.extract_strided_slice %25 {offsets = [13, 0, 0], sizes = [1, 16, 32], strides = [1, 1, 1]} : vector<16x16x32xf32> to vector<1x16x32xf32>
    %122 = vector.shape_cast %121 : vector<1x16x32xf32> to vector<16x32xf32>
    %123 = arith.truncf %122 : vector<16x32xf32> to vector<16x32xbf16>
    %c13 = arith.constant 13 : index
    %c0_66 = arith.constant 0 : index
    %c0_67 = arith.constant 0 : index
    %124 = vector.load %arg4[%c13, %c0_66, %c0_67] : memref<16x32x64xbf16, #tpu.memory_space<vmem>>, vector<1x32x64xbf16>
    %125 = vector.shape_cast %124 : vector<1x32x64xbf16> to vector<32x64xbf16>
    %cst_68 = arith.constant dense<0.000000e+00> : vector<16x64xf32>
    %126 = tpu.matmul %123, %125, %cst_68 {dimension_numbers = #tpu.dot_dimension_numbers<[1], [0], [0], [1], [0, 0, 1, 1], [], []>} : vector<16x32xbf16>, vector<32x64xbf16>, vector<16x64xf32> -> vector<16x64xf32>
    %127 = arith.addf %120, %126 : vector<16x64xf32>
    %128 = vector.extract_strided_slice %25 {offsets = [14, 0, 0], sizes = [1, 16, 32], strides = [1, 1, 1]} : vector<16x16x32xf32> to vector<1x16x32xf32>
    %129 = vector.shape_cast %128 : vector<1x16x32xf32> to vector<16x32xf32>
    %130 = arith.truncf %129 : vector<16x32xf32> to vector<16x32xbf16>
    %c14 = arith.constant 14 : index
    %c0_69 = arith.constant 0 : index
    %c0_70 = arith.constant 0 : index
    %131 = vector.load %arg4[%c14, %c0_69, %c0_70] : memref<16x32x64xbf16, #tpu.memory_space<vmem>>, vector<1x32x64xbf16>
    %132 = vector.shape_cast %131 : vector<1x32x64xbf16> to vector<32x64xbf16>
    %cst_71 = arith.constant dense<0.000000e+00> : vector<16x64xf32>
    %133 = tpu.matmul %130, %132, %cst_71 {dimension_numbers = #tpu.dot_dimension_numbers<[1], [0], [0], [1], [0, 0, 1, 1], [], []>} : vector<16x32xbf16>, vector<32x64xbf16>, vector<16x64xf32> -> vector<16x64xf32>
    %134 = arith.addf %127, %133 : vector<16x64xf32>
    %135 = vector.extract_strided_slice %25 {offsets = [15, 0, 0], sizes = [1, 16, 32], strides = [1, 1, 1]} : vector<16x16x32xf32> to vector<1x16x32xf32>
    %136 = vector.shape_cast %135 : vector<1x16x32xf32> to vector<16x32xf32>
    %137 = arith.truncf %136 : vector<16x32xf32> to vector<16x32xbf16>
    %c15 = arith.constant 15 : index
    %c0_72 = arith.constant 0 : index
    %c0_73 = arith.constant 0 : index
    %138 = vector.load %arg4[%c15, %c0_72, %c0_73] : memref<16x32x64xbf16, #tpu.memory_space<vmem>>, vector<1x32x64xbf16>
    %139 = vector.shape_cast %138 : vector<1x32x64xbf16> to vector<32x64xbf16>
    %cst_74 = arith.constant dense<0.000000e+00> : vector<16x64xf32>
    %140 = tpu.matmul %137, %139, %cst_74 {dimension_numbers = #tpu.dot_dimension_numbers<[1], [0], [0], [1], [0, 0, 1, 1], [], []>} : vector<16x32xbf16>, vector<32x64xbf16>, vector<16x64xf32> -> vector<16x64xf32>
    %141 = arith.addf %134, %140 : vector<16x64xf32>
    %cst_75 = arith.constant 0.000000e+00 : f32
    %142 = vector.broadcast %cst_75 : f32 to vector<16x64xf32>
    %143 = arith.maximumf %141, %142 : vector<16x64xf32>
    %144 = arith.truncf %143 : vector<16x64xf32> to vector<16x64xbf16>
    %c0_76 = arith.constant 0 : index
    %c0_77 = arith.constant 0 : index
    %145 = vector.load %arg6[%c0_76, %c0_77] : memref<64x10xbf16, #tpu.memory_space<vmem>>, vector<64x10xbf16>
    %cst_78 = arith.constant dense<0.000000e+00> : vector<16x10xf32>
    %146 = tpu.matmul %144, %145, %cst_78 {dimension_numbers = #tpu.dot_dimension_numbers<[1], [0], [0], [1], [0, 0, 1, 1], [], []>} : vector<16x64xbf16>, vector<64x10xbf16>, vector<16x10xf32> -> vector<16x10xf32>
    %c0_79 = arith.constant 0 : index
    %c0_80 = arith.constant 0 : index
    %147 = vector.load %arg7[%c0_79, %c0_80] : memref<1x10xf32, #tpu.memory_space<vmem>>, vector<1x10xf32>
    %148 = vector.broadcast %147 : vector<1x10xf32> to vector<16x10xf32>
    %149 = arith.addf %146, %148 : vector<16x10xf32>
    %cst_81 = arith.constant dense<0xFF800000> : vector<16xf32>
    %150 = vector.multi_reduction <maximumf>, %149, %cst_81 [1] : vector<16x10xf32> to vector<16xf32>
    %151 = vector.shape_cast %150 : vector<16xf32> to vector<16x1xf32>
    %152 = vector.broadcast %151 : vector<16x1xf32> to vector<16x10xf32>
    %153 = arith.subf %149, %152 : vector<16x10xf32>
    %154 = math.exp %153 : vector<16x10xf32>
    %cst_82 = arith.constant dense<0.000000e+00> : vector<16xf32>
    %155 = vector.multi_reduction <add>, %154, %cst_82 [1] : vector<16x10xf32> to vector<16xf32>
    %156 = vector.shape_cast %155 : vector<16xf32> to vector<16x1xf32>
    %157 = math.log %156 : vector<16x1xf32>
    %158 = arith.addf %151, %157 : vector<16x1xf32>
    %159 = vector.broadcast %158 : vector<16x1xf32> to vector<16x10xf32>
    %160 = arith.subf %149, %159 : vector<16x10xf32>
    %c0_83 = arith.constant 0 : index
    %c0_84 = arith.constant 0 : index
    %161 = vector.load %arg8[%c0_83, %c0_84] : memref<16x10xf32, #tpu.memory_space<vmem>>, vector<16x10xf32>
    tpu.vector_store %arg8[%c0_83, %c0_84], %160 {strides = array<i32>} : memref<16x10xf32, #tpu.memory_space<vmem>>, vector<16x10xf32>,
    return
  }
  func.func @transform_0(%arg0: i32) -> (i32, i32, i32, i32) {
    %c0_i32 = arith.constant 0 : i32
    %c0_i32_0 = arith.constant 0 : i32
    %c0_i32_1 = arith.constant 0 : i32
    %c0_i32_2 = arith.constant 0 : i32
    return %c0_i32, %c0_i32_0, %arg0, %c0_i32_1 : i32, i32, i32, i32
  }
  func.func @transform_1(%arg0: i32) -> (i32, i32) {
    %c0_i32 = arith.constant 0 : i32
    %c0_i32_0 = arith.constant 0 : i32
    %c0_i32_1 = arith.constant 0 : i32
    return %c0_i32, %c0_i32_0 : i32, i32
  }
  func.func @transform_2(%arg0: i32) -> (i32, i32) {
    %c0_i32 = arith.constant 0 : i32
    %c0_i32_0 = arith.constant 0 : i32
    %c0_i32_1 = arith.constant 0 : i32
    return %c0_i32, %c0_i32_0 : i32, i32
  }
  func.func @transform_3(%arg0: i32) -> (i32, i32, i32) {
    %c0_i32 = arith.constant 0 : i32
    %c0_i32_0 = arith.constant 0 : i32
    %c0_i32_1 = arith.constant 0 : i32
    %c0_i32_2 = arith.constant 0 : i32
    return %c0_i32, %c0_i32_0, %c0_i32_1 : i32, i32, i32
  }
  func.func @transform_4(%arg0: i32) -> (i32, i32) {
    %c0_i32 = arith.constant 0 : i32
    %c0_i32_0 = arith.constant 0 : i32
    %c0_i32_1 = arith.constant 0 : i32
    return %c0_i32, %c0_i32_0 : i32, i32
  }
  func.func @transform_5(%arg0: i32) -> (i32, i32) {
    %c0_i32 = arith.constant 0 : i32
    %c0_i32_0 = arith.constant 0 : i32
    %c0_i32_1 = arith.constant 0 : i32
    return %c0_i32, %c0_i32_0 : i32, i32
  }
  func.func @transform_6(%arg0: i32) -> (i32, i32) {
    %c0_i32 = arith.constant 0 : i32
    %c0_i32_0 = arith.constant 0 : i32
    %c0_i32_1 = arith.constant 0 : i32
    return %c0_i32, %c0_i32_0 : i32, i32
  }
  func.func @transform_7(%arg0: i32) -> (i32, i32) {
    %c0_i32 = arith.constant 0 : i32
    %c0_i32_0 = arith.constant 0 : i32
    return %arg0, %c0_i32 : i32, i32
  }
}

</mosaic_0001>

<llo_original>
// kernel: net_forward.2
$region0: #{net_forward.2}
  #allocation0 [shape = 'u32[]', space=smem, size = 0x4, offset = 0x4, fixed_abs, tag = 'smem constant byte address 0x4 - core index']
  #allocation1 [shape = 'u32[72,128]{1,0:T(1,128)}', space=vmem, size = 0x9000, scoped, tag = 'internal scratch']
  %s0 = inlined_call_operand.vmem [shape: bf16[4,25,512], index: 0, kind: input, shape index: {}]
  %s1 = inlined_call_operand.vmem [shape: bf16[10,25], index: 1, kind: input, shape index: {}]
  %s2 = inlined_call_operand.vmem [shape: f32[10,1], index: 2, kind: input, shape index: {}]
  %s3 = inlined_call_operand.vmem [shape: bf16[10,512], index: 3, kind: output, shape index: {}]
  %s4 = sld [smem:[#allocation0]]
  $region117: #{net_forward.2} parent=0
    _
  %s6 = ssub.s32 1, %s4
  %s7 = scalar_select 0, %s6, %s4
  $region1: #{net_forward.2} parent=0
    #allocation2 [shape = 'u8[131072]{0}', space=vmem, size = 0x20000, scoped, tag = 'input window, operand 0']
    #allocation3 [shape = 'u8[16384]{0}', space=vmem, size = 0x4000, scoped, tag = 'output window, operand 0']
    loop: start=0, step=1, limit=4
    $region2: #{net_forward.2} parent=1 // loop_pre_header
      _
    $region3: #{net_forward.2} parent=1 // loop_header
      %s9 = sphi 0, %s13
      %p10 = scmp.ge.s32.totalorder %s9, 4
      %s19 = sphi 0, %s21
      %s22 = sphi 0, %s19
      %s23 = sphi 0, %s22
      %s39 = sphi 0, %s23
      %s43 = sphi 0, %s43
      %s45 = sphi 0, %s43
      %s46 = sphi 0, %s45
      %s60 = sphi 0, %s46
      %s64 = sphi 0, %s64
      %s66 = sphi 0, %s64
      %s67 = sphi 0, %s66
      %s81 = sphi 0, %s67
      %s87 = sphi 0, %s89
      %s90 = sphi 0, %s87
      %s91 = sphi 0, %s90
      %s107 = sphi 0, %s91
    $region4: #{net_forward.2} parent=1 // loop_header_branch
      %12 = sbr.rel (%p10) target = $region8
    $region5: #{net_forward.2} parent=1 // loop_body
      %s14 = ssub.s32 %s9, 1
      %s15 = ssub.s32 %s9, 2
      %s16 = sadd.s32 %s9, 1
      %s17 = ssub.s32 %s9, %s16
      %p18 = scmp.eq.s32.totalorder %s17, 0
      %s20 = sadd.s32 %s19, 1
      %s21 = scalar_select %p18, %s19, %s20
      %p24 = pneg %p18
      %p25 = scmp.eq.s32.totalorder %s9, 1
      %p26 = por %p24, %p25
      %p27 = scmp.ne.s32.totalorder %s19, %s22
      %p28 = scmp.eq.s32.totalorder %s9, 0
      %p29 = por %p27, %p28
      %p30 = scmp.ne.s32.totalorder %s19, %s22
      %p31 = scmp.eq.s32.totalorder %s14, 1
      %p32 = por %p30, %p31
      %p33 = scmp.ne.s32.totalorder %s22, %s23
      %p34 = scmp.eq.s32.totalorder %s14, 0
      %p35 = por %p33, %p34
      %p36 = scmp.ne.s32.totalorder %s22, %s23
      %p37 = scmp.eq.s32.totalorder %s15, 1
      %p38 = por %p36, %p37
      %p40 = scmp.ne.s32.totalorder %s23, %s39
      %p41 = scmp.eq.s32.totalorder %s15, 0
      %p42 = por %p40, %p41
      %s44 = sadd.s32 %s43, 1
      %p47 = scmp.eq.s32.totalorder %s9, 1
      %p48 = scmp.ne.s32.totalorder %s43, %s45
      %p49 = scmp.eq.s32.totalorder %s9, 0
      %p50 = por %p48, %p49
      %p51 = scmp.ne.s32.totalorder %s43, %s45
      %p52 = scmp.eq.s32.totalorder %s14, 1
      %p53 = por %p51, %p52
      %p54 = scmp.ne.s32.totalorder %s45, %s46
      %p55 = scmp.eq.s32.totalorder %s14, 0
      %p56 = por %p54, %p55
      %p57 = scmp.ne.s32.totalorder %s45, %s46
      %p58 = scmp.eq.s32.totalorder %s15, 1
      %p59 = por %p57, %p58
      %p61 = scmp.ne.s32.totalorder %s46, %s60
      %p62 = scmp.eq.s32.totalorder %s15, 0
      %p63 = por %p61, %p62
      %s65 = sadd.s32 %s64, 1
      %p68 = scmp.eq.s32.totalorder %s9, 1
      %p69 = scmp.ne.s32.totalorder %s64, %s66
      %p70 = scmp.eq.s32.totalorder %s9, 0
      %p71 = por %p69, %p70
      %p72 = scmp.ne.s32.totalorder %s64, %s66
      %p73 = scmp.eq.s32.totalorder %s14, 1
      %p74 = por %p72, %p73
      %p75 = scmp.ne.s32.totalorder %s66, %s67
      %p76 = scmp.eq.s32.totalorder %s14, 0
      %p77 = por %p75, %p76
      %p78 = scmp.ne.s32.totalorder %s66, %s67
      %p79 = scmp.eq.s32.totalorder %s15, 1
      %p80 = por %p78, %p79
      %p82 = scmp.ne.s32.totalorder %s67, %s81
      %p83 = scmp.eq.s32.totalorder %s15, 0
      %p84 = por %p82, %p83
      %s85 = ssub.s32 %s9, %s16
      %p86 = scmp.eq.s32.totalorder %s85, 0
      %s88 = sadd.s32 %s87, 1
      %s89 = scalar_select %p86, %s87, %s88
      %p92 = pneg %p86
      %p93 = scmp.eq.s32.totalorder %s9, 1
      %p94 = por %p92, %p93
      %p95 = scmp.ne.s32.totalorder %s87, %s90
      %p96 = scmp.eq.s32.totalorder %s9, 0
      %p97 = por %p95, %p96
      %p98 = scmp.ne.s32.totalorder %s87, %s90
      %p99 = scmp.eq.s32.totalorder %s14, 1
      %p100 = por %p98, %p99
      %p101 = scmp.ne.s32.totalorder %s90, %s91
      %p102 = scmp.eq.s32.totalorder %s14, 0
      %p103 = por %p101, %p102
      %p104 = scmp.ne.s32.totalorder %s90, %s91
      %p105 = scmp.eq.s32.totalorder %s15, 1
      %p106 = por %p104, %p105
      %p108 = scmp.ne.s32.totalorder %s91, %s107
      %p109 = scmp.eq.s32.totalorder %s15, 0
      %p110 = por %p108, %p109
      %p111 = scmp.le.s32.totalorder 1, %s9
      %p112 = scmp.lt.s32.totalorder %s9, 3
      %p113 = pnand %p111, %p112
      %p114 = pneg %p113
      // Predicated region
      $region9: #{net_forward.2} parent=5 // pred_check
        _
      $region10: #{net_forward.2} parent=5 // pred_check_branch
        %116 = sbr.rel (%p113) target = $region12
      $region11: #{net_forward.2} parent=5 // pred_region
        %s117 = ssub.s32 %s9, 1
        // Predicated region
        $region13: #{net_forward.2} parent=11 // pred_check
          %p118 = pneg %p56
        $region14: #{net_forward.2} parent=11 // pred_check_branch
          %120 = sbr.rel (%p118) target = $region16
        $region15: #{net_forward.2} parent=11 // pred_region
          _
        $region16: #{net_forward.2} parent=11 // pred_fallthru
          _
        // Predicated region
        $region17: #{net_forward.2} parent=11 // pred_check
          %p121 = pneg %p77
        $region18: #{net_forward.2} parent=11 // pred_check_branch
          %123 = sbr.rel (%p121) target = $region20
        $region19: #{net_forward.2} parent=11 // pred_region
          _
        $region20: #{net_forward.2} parent=11 // pred_fallthru
          _
      $region12: #{net_forward.2} parent=5 // pred_fallthru
        _
      %p124 = scmp.lt.s32.totalorder %s9, 2
      // Predicated region
      $region21: #{net_forward.2} parent=5 // pred_check
        %p125 = pneg %p124
      $region22: #{net_forward.2} parent=5 // pred_check_branch
        %127 = sbr.rel (%p125) target = $region24
      $region23: #{net_forward.2} parent=5 // pred_region
        // Predicated region
        $region25: #{net_forward.2} parent=23 // pred_check
          %p128 = pneg %p29
        $region26: #{net_forward.2} parent=23 // pred_check_branch
          %130 = sbr.rel (%p128) target = $region28
        $region27: #{net_forward.2} parent=23 // pred_region
          %s131 = sand.u32 %s19, 1
          %s132 = sand.u32 %s19, 1
          %s133 = smul.addr %s132, 128
          %s134 = scalar_lea.vmem [#allocation2], %s133
          %s135 = smul.u32 2, %s9
          %s136 = smul.addr %s135, 4
          %s137 = scalar_lea.vmem %s0, %s136
          // Predicated region
          $region29: #{net_forward.2} parent=27 // pred_check
            _
          $region30: #{net_forward.2} parent=27 // pred_check_branch
            %139 = sbr.rel (0) target = $region32
          $region31: #{net_forward.2} parent=27 // pred_region
            // Predicated region
            $region33: #{net_forward.2} parent=31 // pred_check
              _
            $region34: #{net_forward.2} parent=31 // pred_check_branch
              %141 = sbr.rel (0) target = $region36
            $region35: #{net_forward.2} parent=31 // pred_region
              // Predicated region
              $region48: #{net_forward.2} parent=35 // pred_check
                _
              $region49: #{net_forward.2} parent=35 // pred_check_branch
                %187 = sbr.rel (0) target = $region51
              $region50: #{net_forward.2} parent=35 // pred_region
                loop: start=0, step=1, limit=1
                $region52: #{net_forward.2} parent=50 // loop_pre_header
                  _
                $region53: #{net_forward.2} parent=50 // loop_header
                  %s189 = sphi 0, %s193
                  %p190 = scmp.ge.s32.totalorder %s189, 1
                  %s194 = sphi %s137, %s137
                  %s195 = sphi %s134, %s134
                $region54: #{net_forward.2} parent=50 // loop_header_branch
                  %192 = sbr.rel (%p190) target = $region58
                $region55: #{net_forward.2} parent=50 // loop_body
                  %v196 = vld [vmem:[%s194] sm:$0xff]
                  %197 = vst [vmem:[%s195] sm:$0xff] %v196
                  %v198 = vld [vmem:[%s194 + $0x10] sm:$0xff]
                  %199 = vst [vmem:[%s195 + $0x8] sm:$0xff] %v198
                  %v200 = vld [vmem:[%s194 + $0x20] sm:$0xff]
                  %201 = vst [vmem:[%s195 + $0x10] sm:$0xff] %v200
                  %v202 = vld [vmem:[%s194 + $0x30] sm:$0xff]
                  %203 = vst [vmem:[%s195 + $0x18] sm:$0xff] %v202
                  %v204 = vld [vmem:[%s194 + $0x40] sm:$0xff]
                  %205 = vst [vmem:[%s195 + $0x20] sm:$0xff] %v204
                  %v206 = vld [vmem:[%s194 + $0x50] sm:$0xff]
                  %207 = vst [vmem:[%s195 + $0x28] sm:$0xff] %v206
                  %v208 = vld [vmem:[%s194 + $0x60] sm:$0xff]
                  %209 = vst [vmem:[%s195 + $0x30] sm:$0xff] %v208
                  %v210 = vld [vmem:[%s194 + $0x70] sm:$0xff]
                  %211 = vst [vmem:[%s195 + $0x38] sm:$0xff] %v210
                  %v212 = vld [vmem:[%s194 + $0x80] sm:$0xff]
                  %213 = vst [vmem:[%s195 + $0x40] sm:$0xff] %v212
                  %v214 = vld [vmem:[%s194 + $0x90] sm:$0xff]
                  %215 = vst [vmem:[%s195 + $0x48] sm:$0xff] %v214
                  %v216 = vld [vmem:[%s194 + $0xa0] sm:$0xff]
                  %217 = vst [vmem:[%s195 + $0x50] sm:$0xff] %v216
                  %v218 = vld [vmem:[%s194 + $0xb0] sm:$0xff]
                  %219 = vst [vmem:[%s195 + $0x58] sm:$0xff] %v218
                  %v220 = vld [vmem:[%s194 + $0xc0] sm:$0xff]
                  %221 = vst [vmem:[%s195 + $0x60] sm:$0xff] %v220
                  %v222 = vld [vmem:[%s194 + $0xd0] sm:$0xff]
                  %223 = vst [vmem:[%s195 + $0x68] sm:$0xff] %v222
                  %v224 = vld [vmem:[%s194 + $0xe0] sm:$0xff]
                  %225 = vst [vmem:[%s195 + $0x70] sm:$0xff] %v224
                  %v226 = vld [vmem:[%s194 + $0xf0] sm:$0xff]
                  %227 = vst [vmem:[%s195 + $0x78] sm:$0xff] %v226
                $region56: #{net_forward.2} parent=50 // loop_footer
                  %s193 = sadd.s32 1, %s189
                $region57: #{net_forward.2} parent=50 // loop_footer_branch
                  %188 = sbr.rel target = $region53
                $region58: #{net_forward.2} parent=50 // loop_exit
                  _
              $region51: #{net_forward.2} parent=35 // pred_fallthru
                _
              // Predicated region
              $region59: #{net_forward.2} parent=35 // pred_check
                _
              $region60: #{net_forward.2} parent=35 // pred_check_branch
                %229 = sbr.rel target = $region62
              $region61: #{net_forward.2} parent=35 // pred_region
                _
              $region62: #{net_forward.2} parent=35 // pred_fallthru
                _
            $region36: #{net_forward.2} parent=31 // pred_fallthru
              _
            // Predicated region
            $region37: #{net_forward.2} parent=31 // pred_check
              _
            $region38: #{net_forward.2} parent=31 // pred_check_branch
              %143 = sbr.rel target = $region40
            $region39: #{net_forward.2} parent=31 // pred_region
              %s145 = ssub.s32 256, 1
              loop: start=0, step=1, limit=1
              $region41: #{net_forward.2} parent=39 // loop_pre_header
                _
              $region42: #{net_forward.2} parent=39 // loop_header
                %s147 = sphi 0, %s151
                %p148 = scmp.ge.s32.totalorder %s147, 1
                %s152 = sphi %s137, %s137
                %s153 = sphi %s134, %s134
              $region43: #{net_forward.2} parent=39 // loop_header_branch
                %150 = sbr.rel (%p148) target = $region47
              $region44: #{net_forward.2} parent=39 // loop_body
                %v154 = vld [vmem:[%s152] sm:%s145]
                %155 = vst [vmem:[%s153] sm:%s145] %v154
                %v156 = vld [vmem:[%s152 + $0x10] sm:%s145]
                %157 = vst [vmem:[%s153 + $0x8] sm:%s145] %v156
                %v158 = vld [vmem:[%s152 + $0x20] sm:%s145]
                %159 = vst [vmem:[%s153 + $0x10] sm:%s145] %v158
                %v160 = vld [vmem:[%s152 + $0x30] sm:%s145]
                %161 = vst [vmem:[%s153 + $0x18] sm:%s145] %v160
                %v162 = vld [vmem:[%s152 + $0x40] sm:%s145]
                %163 = vst [vmem:[%s153 + $0x20] sm:%s145] %v162
                %v164 = vld [vmem:[%s152 + $0x50] sm:%s145]
                %165 = vst [vmem:[%s153 + $0x28] sm:%s145] %v164
                %v166 = vld [vmem:[%s152 + $0x60] sm:%s145]
                %167 = vst [vmem:[%s153 + $0x30] sm:%s145] %v166
                %v168 = vld [vmem:[%s152 + $0x70] sm:%s145]
                %169 = vst [vmem:[%s153 + $0x38] sm:%s145] %v168
                %v170 = vld [vmem:[%s152 + $0x80] sm:%s145]
                %171 = vst [vmem:[%s153 + $0x40] sm:%s145] %v170
                %v172 = vld [vmem:[%s152 + $0x90] sm:%s145]
                %173 = vst [vmem:[%s153 + $0x48] sm:%s145] %v172
                %v174 = vld [vmem:[%s152 + $0xa0] sm:%s145]
                %175 = vst [vmem:[%s153 + $0x50] sm:%s145] %v174
                %v176 = vld [vmem:[%s152 + $0xb0] sm:%s145]
                %177 = vst [vmem:[%s153 + $0x58] sm:%s145] %v176
                %v178 = vld [vmem:[%s152 + $0xc0] sm:%s145]
                %179 = vst [vmem:[%s153 + $0x60] sm:%s145] %v178
                %v180 = vld [vmem:[%s152 + $0xd0] sm:%s145]
                %181 = vst [vmem:[%s153 + $0x68] sm:%s145] %v180
                %v182 = vld [vmem:[%s152 + $0xe0] sm:%s145]
                %183 = vst [vmem:[%s153 + $0x70] sm:%s145] %v182
                %v184 = vld [vmem:[%s152 + $0xf0] sm:%s145]
                %185 = vst [vmem:[%s153 + $0x78] sm:%s145] %v184
              $region45: #{net_forward.2} parent=39 // loop_footer
                %s151 = sadd.s32 1, %s147
              $region46: #{net_forward.2} parent=39 // loop_footer_branch
                %146 = sbr.rel target = $region42
              $region47: #{net_forward.2} parent=39 // loop_exit
                _
            $region40: #{net_forward.2} parent=31 // pred_fallthru
              _
          $region32: #{net_forward.2} parent=27 // pred_fallthru
            _
          %230 = vnop
        $region28: #{net_forward.2} parent=23 // pred_fallthru
          _
      $region24: #{net_forward.2} parent=5 // pred_fallthru
        _
      %p231 = scmp.le.s32.totalorder 1, %s9
      %p232 = scmp.lt.s32.totalorder %s9, 3
      %p233 = pnand %p231, %p232
      %p234 = pneg %p233
      // Predicated region
      $region63: #{net_forward.2} parent=5 // pred_check
        _
      $region64: #{net_forward.2} parent=5 // pred_check_branch
        %236 = sbr.rel (%p233) target = $region66
      $region65: #{net_forward.2} parent=5 // pred_region
        %s237 = ssub.s32 %s9, 1
        %s238 = sand.u32 %s22, 1
        %s239 = sand.u32 %s22, 1
        %s240 = smul.addr %s239, 128
        %s241 = scalar_lea.vmem [#allocation2], %s240
        // Predicated region
        $region67: #{net_forward.2} parent=65 // pred_check
          %p242 = pneg %p35
        $region68: #{net_forward.2} parent=65 // pred_check_branch
          %244 = sbr.rel (%p242) target = $region70
        $region69: #{net_forward.2} parent=65 // pred_region
          _
        $region70: #{net_forward.2} parent=65 // pred_fallthru
          _
        %s245 = sand.u32 %s22, 1
        %s246 = sand.u32 %s22, 1
        %s247 = smul.addr %s246, 128
        %s248 = scalar_lea.vmem [#allocation2], %s247
        %p249 = pneg %p35
        %p250 = pneg %p32
        %p251 = pneg %p56
        %p252 = pneg %p53
        %p253 = pneg %p77
        %p254 = pneg %p74
        %p255 = pneg %p103
        %p256 = pneg %p100
        %s257 = sand.u32 %s90, 1
        %s258 = sand.u32 %s90, 1
        %s259 = smul.addr %s258, 16
        %s260 = scalar_lea.vmem [#allocation3], %s259
        %s261 = smul.u32 2, %s14
        %s262 = smul.u32 2, %s14
        %v264 = vld [vmem:[%s1] sm:$0xf]
        %v265 = vld [vmem:[%s1 + $0x4] sm:$0x1]
        %v266 = vld [vmem:[%s241] sm:$0xff]
        %v267 = vld [vmem:[%s241 + $0x8] sm:$0xff]
        %v268 = vld [vmem:[%s241 + $0x10] sm:$0xff]
        %v269 = vld [vmem:[%s241 + $0x18] sm:$0x11]
        %v272 = vunpack.c.l.b16 %v264
        %v273 = vunpack.c.l.b16 %v265
        %v274 = vpack.c.b16 %v273, %v272
        %v279 = vunpack.c.l.b16 %v266
        %v280 = vunpack.c.h.b16 %v266
        %v281 = vunpack.c.l.b16 %v267
        %v282 = vunpack.c.h.b16 %v267
        %v283 = vunpack.c.l.b16 %v268
        %v284 = vunpack.c.h.b16 %v268
        %v285 = vunpack.c.l.b16 %v269
        %v286 = vunpack.c.h.b16 %v269
        %v287 = vpack.c.b16 %v281, %v279
        %v288 = vpack.c.b16 %v282, %v280
        %v289 = vpack.c.b16 %v285, %v283
        %v290 = vpack.c.b16 %v286, %v284
        %vm293 = vcmask 203776
        %v295 = vsel %vm293, %v274, 0
        %vm297 = vcmask 1043456
        %vm298 = vcmask 1044480
        %v299 = vsel %vm297, 4294967295, 65535
        %v300 = vsel %vm298, %v299, 0
        %v302 = vand.u32 %v289, %v300
        %v305 = vand.u32 %v290, %v300
        %307 = vmatpush.bf16.msra.mxu0 0
        %308 = vmatpush.bf16.msra.mxu0 0
        %309 = vmatpush.bf16.msra.mxu0 0
        %310 = vmatpush.bf16.msra.mxu0 0
        %311 = vmatpush.bf16.msra.mxu0 0
        %312 = vmatpush.bf16.msra.mxu0 0
        %313 = vmatpush.bf16.msra.mxu0 %v302
        %314 = vmatpush.bf16.msra.mxu0 %v287
        %315 = vmatmul.bf16.gmra.mxu0 %v295
        %v316 = vpop.f32.mrf.mxu0
        %v317 = vadd.f32 0.0, %v316
        %v318 = vpop.f32.mrf.mxu0
        %v319 = vadd.f32 0.0, %v318
        %320 = vdwg.mxu0
        %321 = vmatpush.bf16.msra.mxu0 0
        %322 = vmatpush.bf16.msra.mxu0 0
        %323 = vmatpush.bf16.msra.mxu0 0
        %324 = vmatpush.bf16.msra.mxu0 0
        %325 = vmatpush.bf16.msra.mxu0 0
        %326 = vmatpush.bf16.msra.mxu0 0
        %327 = vmatpush.bf16.msra.mxu0 %v305
        %328 = vmatpush.bf16.msra.mxu0 %v288
        %329 = vmatmul.bf16.gmra.mxu0 %v295
        %v330 = vpop.f32.mrf.mxu0
        %v331 = vadd.f32 0.0, %v330
        %v332 = vpop.f32.mrf.mxu0
        %v333 = vadd.f32 0.0, %v332
        %334 = vdwg.mxu0
        %s335 = scalar_lea.vmem %s241, 32 [#allocation2]
        %v336 = vld [vmem:[%s335] sm:$0xff]
        %v337 = vld [vmem:[%s335 + $0x8] sm:$0xff]
        %v338 = vld [vmem:[%s335 + $0x10] sm:$0xff]
        %v339 = vld [vmem:[%s335 + $0x18] sm:$0x11]
        %v344 = vunpack.c.l.b16 %v336
        %v345 = vunpack.c.h.b16 %v336
        %v346 = vunpack.c.l.b16 %v337
        %v347 = vunpack.c.h.b16 %v337
        %v348 = vunpack.c.l.b16 %v338
        %v349 = vunpack.c.h.b16 %v338
        %v350 = vunpack.c.l.b16 %v339
        %v351 = vunpack.c.h.b16 %v339
        %v352 = vpack.c.b16 %v346, %v344
        %v353 = vpack.c.b16 %v347, %v345
        %v354 = vpack.c.b16 %v350, %v348
        %v355 = vpack.c.b16 %v351, %v349
        %v359 = vand.u32 %v354, %v300
        %v362 = vand.u32 %v355, %v300
        %364 = vmatpush.bf16.msra.mxu0 0
        %365 = vmatpush.bf16.msra.mxu0 0
        %366 = vmatpush.bf16.msra.mxu0 0
        %367 = vmatpush.bf16.msra.mxu0 0
        %368 = vmatpush.bf16.msra.mxu0 0
        %369 = vmatpush.bf16.msra.mxu0 0
        %370 = vmatpush.bf16.msra.mxu0 %v359
        %371 = vmatpush.bf16.msra.mxu0 %v352
        %372 = vmatmul.bf16.gmra.mxu0 %v295
        %v373 = vpop.f32.mrf.mxu0
        %v374 = vadd.f32 0.0, %v373
        %v375 = vpop.f32.mrf.mxu0
        %v376 = vadd.f32 0.0, %v375
        %377 = vdwg.mxu0
        %378 = vmatpush.bf16.msra.mxu0 0
        %379 = vmatpush.bf16.msra.mxu0 0
        %380 = vmatpush.bf16.msra.mxu0 0
        %381 = vmatpush.bf16.msra.mxu0 0
        %382 = vmatpush.bf16.msra.mxu0 0
        %383 = vmatpush.bf16.msra.mxu0 0
        %384 = vmatpush.bf16.msra.mxu0 %v362
        %385 = vmatpush.bf16.msra.mxu0 %v353
        %386 = vmatmul.bf16.gmra.mxu0 %v295
        %v387 = vpop.f32.mrf.mxu0
        %v388 = vadd.f32 0.0, %v387
        %v389 = vpop.f32.mrf.mxu0
        %v390 = vadd.f32 0.0, %v389
        %391 = vdwg.mxu0
        %v392 = vmax.f32 %v317, %v374
        %v393 = vmax.f32 %v331, %v388
        %v394 = vmax.f32 %v319, %v376
        %v395 = vmax.f32 %v333, %v390
        %s396 = scalar_lea.vmem %s241, 64 [#allocation2]
        %v397 = vld [vmem:[%s396] sm:$0xff]
        %v398 = vld [vmem:[%s396 + $0x8] sm:$0xff]
        %v399 = vld [vmem:[%s396 + $0x10] sm:$0xff]
        %v400 = vld [vmem:[%s396 + $0x18] sm:$0x11]
        %v405 = vunpack.c.l.b16 %v397
        %v406 = vunpack.c.h.b16 %v397
        %v407 = vunpack.c.l.b16 %v398
        %v408 = vunpack.c.h.b16 %v398
        %v409 = vunpack.c.l.b16 %v399
        %v410 = vunpack.c.h.b16 %v399
        %v411 = vunpack.c.l.b16 %v400
        %v412 = vunpack.c.h.b16 %v400
        %v413 = vpack.c.b16 %v407, %v405
        %v414 = vpack.c.b16 %v408, %v406
        %v415 = vpack.c.b16 %v411, %v409
        %v416 = vpack.c.b16 %v412, %v410
        %v420 = vand.u32 %v415, %v300
        %v423 = vand.u32 %v416, %v300
        %425 = vmatpush.bf16.msra.mxu0 0
        %426 = vmatpush.bf16.msra.mxu0 0
        %427 = vmatpush.bf16.msra.mxu0 0
        %428 = vmatpush.bf16.msra.mxu0 0
        %429 = vmatpush.bf16.msra.mxu0 0
        %430 = vmatpush.bf16.msra.mxu0 0
        %431 = vmatpush.bf16.msra.mxu0 %v420
        %432 = vmatpush.bf16.msra.mxu0 %v413
        %433 = vmatmul.bf16.gmra.mxu0 %v295
        %v434 = vpop.f32.mrf.mxu0
        %v435 = vadd.f32 0.0, %v434
        %v436 = vpop.f32.mrf.mxu0
        %v437 = vadd.f32 0.0, %v436
        %438 = vdwg.mxu0
        %439 = vmatpush.bf16.msra.mxu0 0
        %440 = vmatpush.bf16.msra.mxu0 0
        %441 = vmatpush.bf16.msra.mxu0 0
        %442 = vmatpush.bf16.msra.mxu0 0
        %443 = vmatpush.bf16.msra.mxu0 0
        %444 = vmatpush.bf16.msra.mxu0 0
        %445 = vmatpush.bf16.msra.mxu0 %v423
        %446 = vmatpush.bf16.msra.mxu0 %v414
        %447 = vmatmul.bf16.gmra.mxu0 %v295
        %v448 = vpop.f32.mrf.mxu0
        %v449 = vadd.f32 0.0, %v448
        %v450 = vpop.f32.mrf.mxu0
        %v451 = vadd.f32 0.0, %v450
        %452 = vdwg.mxu0
        %v453 = vmax.f32 %v392, %v435
        %v454 = vmax.f32 %v393, %v449
        %v455 = vmax.f32 %v394, %v437
        %v456 = vmax.f32 %v395, %v451
        %s457 = scalar_lea.vmem %s241, 96 [#allocation2]
        %v458 = vld [vmem:[%s457] sm:$0xff]
        %v459 = vld [vmem:[%s457 + $0x8] sm:$0xff]
        %v460 = vld [vmem:[%s457 + $0x10] sm:$0xff]
        %v461 = vld [vmem:[%s457 + $0x18] sm:$0x11]
        %v466 = vunpack.c.l.b16 %v458
        %v467 = vunpack.c.h.b16 %v458
        %v468 = vunpack.c.l.b16 %v459
        %v469 = vunpack.c.h.b16 %v459
        %v470 = vunpack.c.l.b16 %v460
        %v471 = vunpack.c.h.b16 %v460
        %v472 = vunpack.c.l.b16 %v461
        %v473 = vunpack.c.h.b16 %v461
        %v474 = vpack.c.b16 %v468, %v466
        %v475 = vpack.c.b16 %v469, %v467
        %v476 = vpack.c.b16 %v472, %v470
        %v477 = vpack.c.b16 %v473, %v471
        %v481 = vand.u32 %v476, %v300
        %v484 = vand.u32 %v477, %v300
        %486 = vmatpush.bf16.msra.mxu0 0
        %487 = vmatpush.bf16.msra.mxu0 0
        %488 = vmatpush.bf16.msra.mxu0 0
        %489 = vmatpush.bf16.msra.mxu0 0
        %490 = vmatpush.bf16.msra.mxu0 0
        %491 = vmatpush.bf16.msra.mxu0 0
        %492 = vmatpush.bf16.msra.mxu0 %v481
        %493 = vmatpush.bf16.msra.mxu0 %v474
        %494 = vmatmul.bf16.gmra.mxu0 %v295
        %v495 = vpop.f32.mrf.mxu0
        %v496 = vadd.f32 0.0, %v495
        %v497 = vpop.f32.mrf.mxu0
        %v498 = vadd.f32 0.0, %v497
        %499 = vdwg.mxu0
        %500 = vmatpush.bf16.msra.mxu0 0
        %501 = vmatpush.bf16.msra.mxu0 0
        %502 = vmatpush.bf16.msra.mxu0 0
        %503 = vmatpush.bf16.msra.mxu0 0
        %504 = vmatpush.bf16.msra.mxu0 0
        %505 = vmatpush.bf16.msra.mxu0 0
        %506 = vmatpush.bf16.msra.mxu0 %v484
        %507 = vmatpush.bf16.msra.mxu0 %v475
        %508 = vmatmul.bf16.gmra.mxu0 %v295
        %v509 = vpop.f32.mrf.mxu0
        %v510 = vadd.f32 0.0, %v509
        %v511 = vpop.f32.mrf.mxu0
        %v512 = vadd.f32 0.0, %v511
        %513 = vdwg.mxu0
        %v514 = vmax.f32 %v453, %v496
        %v515 = vmax.f32 %v454, %v510
        %v516 = vmax.f32 %v455, %v498
        %v517 = vmax.f32 %v456, %v512
        %v518 = vld [vmem:[%s2] sm:$0xff]
        %v519 = vld [vmem:[%s2 + $0x8] sm:$0x3]
        %521 = vset.pattern.permute.xlu0 0
        %522 = vperm.xlu0 %521, %v518
        %v523 = vpop.permute.xlu0 %522
        %526 = vset.pattern.permute.xlu0 0
        %527 = vperm.xlu0 %526, %v519
        %v528 = vpop.permute.xlu0 %527
        %v530 = vadd.f32 %v514, %v523
        %v531 = vadd.f32 %v515, %v523
        %v532 = vadd.f32 %v516, %v528
        %v533 = vadd.f32 %v517, %v528
        %v534 = vmax.f32 %v530, 0.0
        %v535 = vmax.f32 %v531, 0.0
        %v536 = vmax.f32 %v532, 0.0
        %v537 = vmax.f32 %v533, 0.0
        %v538 = vpack.c.bf16 %v535, %v534
        %v539 = vpack.c.bf16 %v537, %v536
        %540 = vst [vmem:[%s260] sm:$0xff] %v538
        %541 = vst [vmem:[%s260 + $0x8] sm:$0x11] %v539
        %s542 = sand.u32 %s90, 1
        %s543 = sand.u32 %s90, 1
        %s544 = smul.addr %s543, 16
        %s545 = scalar_lea.vmem [#allocation3], %s544
        // Predicated region
        $region71: #{net_forward.2} parent=65 // pred_check
          %p546 = pneg %p100
        $region72: #{net_forward.2} parent=65 // pred_check_branch
          %548 = sbr.rel (%p546) target = $region74
        $region73: #{net_forward.2} parent=65 // pred_region
          %s549 = smul.u32 2, %s14
          %s550 = smul.addr %s549, 4
          %s551 = scalar_lea.vmem %s3, %s550
          // Predicated region
          $region75: #{net_forward.2} parent=73 // pred_check
            _
          $region76: #{net_forward.2} parent=73 // pred_check_branch
            %553 = sbr.rel (0) target = $region78
          $region77: #{net_forward.2} parent=73 // pred_region
            // Predicated region
            $region79: #{net_forward.2} parent=77 // pred_check
              _
            $region80: #{net_forward.2} parent=77 // pred_check_branch
              %555 = sbr.rel (0) target = $region82
            $region81: #{net_forward.2} parent=77 // pred_region
              // Predicated region
              $region94: #{net_forward.2} parent=81 // pred_check
                _
              $region95: #{net_forward.2} parent=81 // pred_check_branch
                %573 = sbr.rel (0) target = $region97
              $region96: #{net_forward.2} parent=81 // pred_region
                loop: start=0, step=1, limit=1
                $region98: #{net_forward.2} parent=96 // loop_pre_header
                  _
                $region99: #{net_forward.2} parent=96 // loop_header
                  %s575 = sphi 0, %s579
                  %p576 = scmp.ge.s32.totalorder %s575, 1
                  %s580 = sphi %s545, %s545
                  %s581 = sphi %s551, %s551
                $region100: #{net_forward.2} parent=96 // loop_header_branch
                  %578 = sbr.rel (%p576) target = $region104
                $region101: #{net_forward.2} parent=96 // loop_body
                  %v582 = vld [vmem:[%s580] sm:$0xff]
                  %583 = vst [vmem:[%s581] sm:$0xff] %v582
                  %v584 = vld [vmem:[%s580 + $0x8] sm:$0xff]
                  %585 = vst [vmem:[%s581 + $0x10] sm:$0xff] %v584
                $region102: #{net_forward.2} parent=96 // loop_footer
                  %s579 = sadd.s32 1, %s575
                $region103: #{net_forward.2} parent=96 // loop_footer_branch
                  %574 = sbr.rel target = $region99
                $region104: #{net_forward.2} parent=96 // loop_exit
                  _
              $region97: #{net_forward.2} parent=81 // pred_fallthru
                _
              // Predicated region
              $region105: #{net_forward.2} parent=81 // pred_check
                _
              $region106: #{net_forward.2} parent=81 // pred_check_branch
                %587 = sbr.rel target = $region108
              $region107: #{net_forward.2} parent=81 // pred_region
                _
              $region108: #{net_forward.2} parent=81 // pred_fallthru
                _
            $region82: #{net_forward.2} parent=77 // pred_fallthru
              _
            // Predicated region
            $region83: #{net_forward.2} parent=77 // pred_check
              _
            $region84: #{net_forward.2} parent=77 // pred_check_branch
              %557 = sbr.rel target = $region86
            $region85: #{net_forward.2} parent=77 // pred_region
              %s559 = ssub.s32 256, 1
              loop: start=0, step=1, limit=1
              $region87: #{net_forward.2} parent=85 // loop_pre_header
                _
              $region88: #{net_forward.2} parent=85 // loop_header
                %s561 = sphi 0, %s565
                %p562 = scmp.ge.s32.totalorder %s561, 1
                %s566 = sphi %s545, %s545
                %s567 = sphi %s551, %s551
              $region89: #{net_forward.2} parent=85 // loop_header_branch
                %564 = sbr.rel (%p562) target = $region93
              $region90: #{net_forward.2} parent=85 // loop_body
                %v568 = vld [vmem:[%s566] sm:%s559]
                %569 = vst [vmem:[%s567] sm:%s559] %v568
                %v570 = vld [vmem:[%s566 + $0x8] sm:%s559]
                %571 = vst [vmem:[%s567 + $0x10] sm:%s559] %v570
              $region91: #{net_forward.2} parent=85 // loop_footer
                %s565 = sadd.s32 1, %s561
              $region92: #{net_forward.2} parent=85 // loop_footer_branch
                %560 = sbr.rel target = $region88
              $region93: #{net_forward.2} parent=85 // loop_exit
                _
            $region86: #{net_forward.2} parent=77 // pred_fallthru
              _
          $region78: #{net_forward.2} parent=73 // pred_fallthru
            _
          %588 = vnop
        $region74: #{net_forward.2} parent=65 // pred_fallthru
          _
      $region66: #{net_forward.2} parent=5 // pred_fallthru
        _
      %p589 = scmp.le.s32.totalorder 2, %s9
      // Predicated region
      $region109: #{net_forward.2} parent=5 // pred_check
        %p590 = pneg %p589
      $region110: #{net_forward.2} parent=5 // pred_check_branch
        %592 = sbr.rel (%p590) target = $region112
      $region111: #{net_forward.2} parent=5 // pred_region
        %s593 = ssub.s32 %s9, 2
        // Predicated region
        $region113: #{net_forward.2} parent=111 // pred_check
          %p594 = pneg %p106
        $region114: #{net_forward.2} parent=111 // pred_check_branch
          %596 = sbr.rel (%p594) target = $region116
        $region115: #{net_forward.2} parent=111 // pred_region
          %s597 = sand.u32 %s91, 1
          %s598 = sand.u32 %s91, 1
          %s599 = smul.addr %s598, 16
          %s600 = scalar_lea.vmem [#allocation3], %s599
        $region116: #{net_forward.2} parent=111 // pred_fallthru
          _
      $region112: #{net_forward.2} parent=5 // pred_fallthru
        _
    $region6: #{net_forward.2} parent=1 // loop_footer
      %s13 = sadd.s32 1, %s9
    $region7: #{net_forward.2} parent=1 // loop_footer_branch
      %8 = sbr.rel target = $region3
    $region8: #{net_forward.2} parent=1 // loop_exit
      _

// kernel: net_forward.3
$region0: #{net_forward.3}
  #allocation0 [shape = 'u32[]', space=smem, size = 0x4, offset = 0x4, fixed_abs, tag = 'smem constant byte address 0x4 - core index']
  #allocation1 [shape = 'u32[72,128]{1,0:T(1,128)}', space=vmem, size = 0x9000, scoped, tag = 'internal scratch']
  %s0 = inlined_call_operand.vmem [shape: bf16[4,16,16,256], index: 0, kind: input, shape index: {}]
  %s1 = inlined_call_operand.vmem [shape: bf16[256,32], index: 1, kind: input, shape index: {}]
  %s2 = inlined_call_operand.vmem [shape: f32[1,32], index: 2, kind: input, shape index: {}]
  %s3 = inlined_call_operand.vmem [shape: bf16[16,32,64], index: 3, kind: input, shape index: {}]
  %s4 = inlined_call_operand.vmem [shape: f32[1,64], index: 4, kind: input, shape index: {}]
  %s5 = inlined_call_operand.vmem [shape: bf16[64,10], index: 5, kind: input, shape index: {}]
  %s6 = inlined_call_operand.vmem [shape: f32[1,10], index: 6, kind: input, shape index: {}]
  %s7 = inlined_call_operand.vmem [shape: f32[16,10], index: 7, kind: output, shape index: {}]
  %s8 = sld [smem:[#allocation0]]
  $region38: #{net_forward.3} parent=0
    _
  %s10 = ssub.s32 1, %s8
  %s11 = scalar_select 0, %s10, %s8
  // Predicated region
  $region2: #{net_forward.3} parent=0 // pred_check
    _
  $region3: #{net_forward.3} parent=0 // pred_check_branch
    %13 = sbr.rel (0) target = $region5
  $region4: #{net_forward.3} parent=0 // pred_region
    _
  $region5: #{net_forward.3} parent=0 // pred_fallthru
    _
  // Predicated region
  $region6: #{net_forward.3} parent=0 // pred_check
    _
  $region7: #{net_forward.3} parent=0 // pred_check_branch
    %15 = sbr.rel (0) target = $region9
  $region8: #{net_forward.3} parent=0 // pred_region
    _
  $region9: #{net_forward.3} parent=0 // pred_fallthru
    _
  // Predicated region
  $region10: #{net_forward.3} parent=0 // pred_check
    _
  $region11: #{net_forward.3} parent=0 // pred_check_branch
    %17 = sbr.rel (0) target = $region13
  $region12: #{net_forward.3} parent=0 // pred_region
    _
  $region13: #{net_forward.3} parent=0 // pred_fallthru
    _
  // Predicated region
  $region14: #{net_forward.3} parent=0 // pred_check
    _
  $region15: #{net_forward.3} parent=0 // pred_check_branch
    %19 = sbr.rel (0) target = $region17
  $region16: #{net_forward.3} parent=0 // pred_region
    _
  $region17: #{net_forward.3} parent=0 // pred_fallthru
    _
  // Predicated region
  $region18: #{net_forward.3} parent=0 // pred_check
    _
  $region19: #{net_forward.3} parent=0 // pred_check_branch
    %21 = sbr.rel (0) target = $region21
  $region20: #{net_forward.3} parent=0 // pred_region
    _
  $region21: #{net_forward.3} parent=0 // pred_fallthru
    _
  // Predicated region
  $region22: #{net_forward.3} parent=0 // pred_check
    _
  $region23: #{net_forward.3} parent=0 // pred_check_branch
    %23 = sbr.rel (0) target = $region25
  $region24: #{net_forward.3} parent=0 // pred_region
    _
  $region25: #{net_forward.3} parent=0 // pred_fallthru
    _
  // Predicated region
  $region26: #{net_forward.3} parent=0 // pred_check
    _
  $region27: #{net_forward.3} parent=0 // pred_check_branch
    %25 = sbr.rel (0) target = $region29
  $region28: #{net_forward.3} parent=0 // pred_region
    _
  $region29: #{net_forward.3} parent=0 // pred_fallthru
    _
  %v27 = vld [vmem:[%s1] sm:$0xf]
  %v28 = vld [vmem:[%s1 + $0x4] sm:$0xf]
  %v29 = vld [vmem:[%s1 + $0x8] sm:$0xf]
  %v30 = vld [vmem:[%s1 + $0xc] sm:$0xf]
  %v31 = vld [vmem:[%s1 + $0x10] sm:$0xf]
  %v32 = vld [vmem:[%s1 + $0x14] sm:$0xf]
  %v33 = vld [vmem:[%s1 + $0x18] sm:$0xf]
  %v34 = vld [vmem:[%s1 + $0x1c] sm:$0xf]
  %v35 = vld [vmem:[%s1 + $0x20] sm:$0xf]
  %v36 = vld [vmem:[%s1 + $0x24] sm:$0xf]
  %v37 = vld [vmem:[%s1 + $0x28] sm:$0xf]
  %v38 = vld [vmem:[%s1 + $0x2c] sm:$0xf]
  %v39 = vld [vmem:[%s1 + $0x30] sm:$0xf]
  %v40 = vld [vmem:[%s1 + $0x34] sm:$0xf]
  %v41 = vld [vmem:[%s1 + $0x38] sm:$0xf]
  %v42 = vld [vmem:[%s1 + $0x3c] sm:$0xf]
  %v43 = vld [vmem:[%s1 + $0x40] sm:$0xf]
  %v44 = vld [vmem:[%s1 + $0x44] sm:$0xf]
  %v45 = vld [vmem:[%s1 + $0x48] sm:$0xf]
  %v46 = vld [vmem:[%s1 + $0x4c] sm:$0xf]
  %v47 = vld [vmem:[%s1 + $0x50] sm:$0xf]
  %v48 = vld [vmem:[%s1 + $0x54] sm:$0xf]
  %v49 = vld [vmem:[%s1 + $0x58] sm:$0xf]
  %v50 = vld [vmem:[%s1 + $0x5c] sm:$0xf]
  %v51 = vld [vmem:[%s1 + $0x60] sm:$0xf]
  %v52 = vld [vmem:[%s1 + $0x64] sm:$0xf]
  %v53 = vld [vmem:[%s1 + $0x68] sm:$0xf]
  %v54 = vld [vmem:[%s1 + $0x6c] sm:$0xf]
  %v55 = vld [vmem:[%s1 + $0x70] sm:$0xf]
  %v56 = vld [vmem:[%s1 + $0x74] sm:$0xf]
  %v57 = vld [vmem:[%s1 + $0x78] sm:$0xf]
  %v58 = vld [vmem:[%s1 + $0x7c] sm:$0xf]
  %v59 = vld [vmem:[%s0] sm:$0xff]
  %v60 = vld [vmem:[%s0 + $0x8] sm:$0xff]
  %v61 = vld [vmem:[%s0 + $0x10] sm:$0xff]
  %v62 = vld [vmem:[%s0 + $0x18] sm:$0xff]
  %v63 = vld [vmem:[%s0 + $0x20] sm:$0xff]
  %v64 = vld [vmem:[%s0 + $0x28] sm:$0xff]
  %v65 = vld [vmem:[%s0 + $0x30] sm:$0xff]
  %v66 = vld [vmem:[%s0 + $0x38] sm:$0xff]
  %v67 = vld [vmem:[%s0 + $0x40] sm:$0xff]
  %v68 = vld [vmem:[%s0 + $0x48] sm:$0xff]
  %v69 = vld [vmem:[%s0 + $0x50] sm:$0xff]
  %v70 = vld [vmem:[%s0 + $0x58] sm:$0xff]
  %v71 = vld [vmem:[%s0 + $0x60] sm:$0xff]
  %v72 = vld [vmem:[%s0 + $0x68] sm:$0xff]
  %v73 = vld [vmem:[%s0 + $0x70] sm:$0xff]
  %v74 = vld [vmem:[%s0 + $0x78] sm:$0xff]
  %v75 = vld [vmem:[%s0 + $0x80] sm:$0xff]
  %v76 = vld [vmem:[%s0 + $0x88] sm:$0xff]
  %v77 = vld [vmem:[%s0 + $0x90] sm:$0xff]
  %v78 = vld [vmem:[%s0 + $0x98] sm:$0xff]
  %v79 = vld [vmem:[%s0 + $0xa0] sm:$0xff]
  %v80 = vld [vmem:[%s0 + $0xa8] sm:$0xff]
  %v81 = vld [vmem:[%s0 + $0xb0] sm:$0xff]
  %v82 = vld [vmem:[%s0 + $0xb8] sm:$0xff]
  %v83 = vld [vmem:[%s0 + $0xc0] sm:$0xff]
  %v84 = vld [vmem:[%s0 + $0xc8] sm:$0xff]
  %v85 = vld [vmem:[%s0 + $0xd0] sm:$0xff]
  %v86 = vld [vmem:[%s0 + $0xd8] sm:$0xff]
  %v87 = vld [vmem:[%s0 + $0xe0] sm:$0xff]
  %v88 = vld [vmem:[%s0 + $0xe8] sm:$0xff]
  %v89 = vld [vmem:[%s0 + $0xf0] sm:$0xff]
  %v90 = vld [vmem:[%s0 + $0xf8] sm:$0xff]
  %v123 = vunpack.c.l.b16 %v59
  %v124 = vunpack.c.h.b16 %v59
  %v125 = vunpack.c.l.b16 %v60
  %v126 = vunpack.c.h.b16 %v60
  %v127 = vunpack.c.l.b16 %v61
  %v128 = vunpack.c.h.b16 %v61
  %v129 = vunpack.c.l.b16 %v62
  %v130 = vunpack.c.h.b16 %v62
  %v131 = vunpack.c.l.b16 %v63
  %v132 = vunpack.c.h.b16 %v63
  %v133 = vunpack.c.l.b16 %v64
  %v134 = vunpack.c.h.b16 %v64
  %v135 = vunpack.c.l.b16 %v65
  %v136 = vunpack.c.h.b16 %v65
  %v137 = vunpack.c.l.b16 %v66
  %v138 = vunpack.c.h.b16 %v66
  %v139 = vunpack.c.l.b16 %v67
  %v140 = vunpack.c.h.b16 %v67
  %v141 = vunpack.c.l.b16 %v68
  %v142 = vunpack.c.h.b16 %v68
  %v143 = vunpack.c.l.b16 %v69
  %v144 = vunpack.c.h.b16 %v69
  %v145 = vunpack.c.l.b16 %v70
  %v146 = vunpack.c.h.b16 %v70
  %v147 = vunpack.c.l.b16 %v71
  %v148 = vunpack.c.h.b16 %v71
  %v149 = vunpack.c.l.b16 %v72
  %v150 = vunpack.c.h.b16 %v72
  %v151 = vunpack.c.l.b16 %v73
  %v152 = vunpack.c.h.b16 %v73
  %v153 = vunpack.c.l.b16 %v74
  %v154 = vunpack.c.h.b16 %v74
  %v155 = vunpack.c.l.b16 %v75
  %v156 = vunpack.c.h.b16 %v75
  %v157 = vunpack.c.l.b16 %v76
  %v158 = vunpack.c.h.b16 %v76
  %v159 = vunpack.c.l.b16 %v77
  %v160 = vunpack.c.h.b16 %v77
  %v161 = vunpack.c.l.b16 %v78
  %v162 = vunpack.c.h.b16 %v78
  %v163 = vunpack.c.l.b16 %v79
  %v164 = vunpack.c.h.b16 %v79
  %v165 = vunpack.c.l.b16 %v80
  %v166 = vunpack.c.h.b16 %v80
  %v167 = vunpack.c.l.b16 %v81
  %v168 = vunpack.c.h.b16 %v81
  %v169 = vunpack.c.l.b16 %v82
  %v170 = vunpack.c.h.b16 %v82
  %v171 = vunpack.c.l.b16 %v83
  %v172 = vunpack.c.h.b16 %v83
  %v173 = vunpack.c.l.b16 %v84
  %v174 = vunpack.c.h.b16 %v84
  %v175 = vunpack.c.l.b16 %v85
  %v176 = vunpack.c.h.b16 %v85
  %v177 = vunpack.c.l.b16 %v86
  %v178 = vunpack.c.h.b16 %v86
  %v179 = vunpack.c.l.b16 %v87
  %v180 = vunpack.c.h.b16 %v87
  %v181 = vunpack.c.l.b16 %v88
  %v182 = vunpack.c.h.b16 %v88
  %v183 = vunpack.c.l.b16 %v89
  %v184 = vunpack.c.h.b16 %v89
  %v185 = vunpack.c.l.b16 %v90
  %v186 = vunpack.c.h.b16 %v90
  %v187 = vpack.c.b16 %v125, %v123
  %v188 = vpack.c.b16 %v126, %v124
  %v189 = vpack.c.b16 %v129, %v127
  %v190 = vpack.c.b16 %v130, %v128
  %v191 = vpack.c.b16 %v133, %v131
  %v192 = vpack.c.b16 %v134, %v132
  %v193 = vpack.c.b16 %v137, %v135
  %v194 = vpack.c.b16 %v138, %v136
  %v195 = vpack.c.b16 %v141, %v139
  %v196 = vpack.c.b16 %v142, %v140
  %v197 = vpack.c.b16 %v145, %v143
  %v198 = vpack.c.b16 %v146, %v144
  %v199 = vpack.c.b16 %v149, %v147
  %v200 = vpack.c.b16 %v150, %v148
  %v201 = vpack.c.b16 %v153, %v151
  %v202 = vpack.c.b16 %v154, %v152
  %v203 = vpack.c.b16 %v157, %v155
  %v204 = vpack.c.b16 %v158, %v156
  %v205 = vpack.c.b16 %v161, %v159
  %v206 = vpack.c.b16 %v162, %v160
  %v207 = vpack.c.b16 %v165, %v163
  %v208 = vpack.c.b16 %v166, %v164
  %v209 = vpack.c.b16 %v169, %v167
  %v210 = vpack.c.b16 %v170, %v168
  %v211 = vpack.c.b16 %v173, %v171
  %v212 = vpack.c.b16 %v174, %v172
  %v213 = vpack.c.b16 %v177, %v175
  %v214 = vpack.c.b16 %v178, %v176
  %v215 = vpack.c.b16 %v181, %v179
  %v216 = vpack.c.b16 %v182, %v180
  %v217 = vpack.c.b16 %v185, %v183
  %v218 = vpack.c.b16 %v186, %v184
  %v283 = vunpack.c.l.b16 %v27
  %v284 = vunpack.c.l.b16 %v28
  %v285 = vunpack.c.l.b16 %v29
  %v286 = vunpack.c.l.b16 %v30
  %v287 = vunpack.c.l.b16 %v31
  %v288 = vunpack.c.l.b16 %v32
  %v289 = vunpack.c.l.b16 %v33
  %v290 = vunpack.c.l.b16 %v34
  %v291 = vunpack.c.l.b16 %v35
  %v292 = vunpack.c.l.b16 %v36
  %v293 = vunpack.c.l.b16 %v37
  %v294 = vunpack.c.l.b16 %v38
  %v295 = vunpack.c.l.b16 %v39
  %v296 = vunpack.c.l.b16 %v40
  %v297 = vunpack.c.l.b16 %v41
  %v298 = vunpack.c.l.b16 %v42
  %v299 = vunpack.c.l.b16 %v43
  %v300 = vunpack.c.l.b16 %v44
  %v301 = vunpack.c.l.b16 %v45
  %v302 = vunpack.c.l.b16 %v46
  %v303 = vunpack.c.l.b16 %v47
  %v304 = vunpack.c.l.b16 %v48
  %v305 = vunpack.c.l.b16 %v49
  %v306 = vunpack.c.l.b16 %v50
  %v307 = vunpack.c.l.b16 %v51
  %v308 = vunpack.c.l.b16 %v52
  %v309 = vunpack.c.l.b16 %v53
  %v310 = vunpack.c.l.b16 %v54
  %v311 = vunpack.c.l.b16 %v55
  %v312 = vunpack.c.l.b16 %v56
  %v313 = vunpack.c.l.b16 %v57
  %v314 = vunpack.c.l.b16 %v58
  %v315 = vpack.c.b16 %v284, %v283
  %v316 = vpack.c.b16 %v286, %v285
  %v317 = vpack.c.b16 %v288, %v287
  %v318 = vpack.c.b16 %v290, %v289
  %v319 = vpack.c.b16 %v292, %v291
  %v320 = vpack.c.b16 %v294, %v293
  %v321 = vpack.c.b16 %v296, %v295
  %v322 = vpack.c.b16 %v298, %v297
  %v323 = vpack.c.b16 %v300, %v299
  %v324 = vpack.c.b16 %v302, %v301
  %v325 = vpack.c.b16 %v304, %v303
  %v326 = vpack.c.b16 %v306, %v305
  %v327 = vpack.c.b16 %v308, %v307
  %v328 = vpack.c.b16 %v310, %v309
  %v329 = vpack.c.b16 %v312, %v311
  %v330 = vpack.c.b16 %v314, %v313
  %347 = vmatpush.bf16.msra.mxu0 %v322
  %348 = vmatpush.bf16.msra.mxu0 %v321
  %349 = vmatpush.bf16.msra.mxu0 %v320
  %350 = vmatpush.bf16.msra.mxu0 %v319
  %351 = vmatpush.bf16.msra.mxu0 %v318
  %352 = vmatpush.bf16.msra.mxu0 %v317
  %353 = vmatpush.bf16.msra.mxu0 %v316
  %354 = vmatpush.bf16.msra.mxu0 %v315
  %355 = vmatmul.bf16.gmra.mxu0 %v187
  %v356 = vpop.f32.mrf.mxu0
  %v357 = vadd.f32 0.0, %v356
  %v358 = vpop.f32.mrf.mxu0
  %v359 = vadd.f32 0.0, %v358
  %360 = vmatmul.bf16.gmra.mxu0 %v189
  %v361 = vpop.f32.mrf.mxu0
  %v362 = vadd.f32 0.0, %v361
  %v363 = vpop.f32.mrf.mxu0
  %v364 = vadd.f32 0.0, %v363
  %365 = vmatmul.bf16.gmra.mxu0 %v191
  %v366 = vpop.f32.mrf.mxu0
  %v367 = vadd.f32 0.0, %v366
  %v368 = vpop.f32.mrf.mxu0
  %v369 = vadd.f32 0.0, %v368
  %370 = vmatmul.bf16.gmra.mxu0 %v193
  %v371 = vpop.f32.mrf.mxu0
  %v372 = vadd.f32 0.0, %v371
  %v373 = vpop.f32.mrf.mxu0
  %v374 = vadd.f32 0.0, %v373
  %375 = vmatmul.bf16.gmra.mxu0 %v195
  %v376 = vpop.f32.mrf.mxu0
  %v377 = vadd.f32 0.0, %v376
  %v378 = vpop.f32.mrf.mxu0
  %v379 = vadd.f32 0.0, %v378
  %380 = vmatmul.bf16.gmra.mxu0 %v197
  %v381 = vpop.f32.mrf.mxu0
  %v382 = vadd.f32 0.0, %v381
  %v383 = vpop.f32.mrf.mxu0
  %v384 = vadd.f32 0.0, %v383
  %385 = vmatmul.bf16.gmra.mxu0 %v199
  %v386 = vpop.f32.mrf.mxu0
  %v387 = vadd.f32 0.0, %v386
  %v388 = vpop.f32.mrf.mxu0
  %v389 = vadd.f32 0.0, %v388
  %390 = vmatmul.bf16.gmra.mxu0 %v201
  %v391 = vpop.f32.mrf.mxu0
  %v392 = vadd.f32 0.0, %v391
  %v393 = vpop.f32.mrf.mxu0
  %v394 = vadd.f32 0.0, %v393
  %395 = vmatmul.bf16.gmra.mxu0 %v203
  %v396 = vpop.f32.mrf.mxu0
  %v397 = vadd.f32 0.0, %v396
  %v398 = vpop.f32.mrf.mxu0
  %v399 = vadd.f32 0.0, %v398
  %400 = vmatmul.bf16.gmra.mxu0 %v205
  %v401 = vpop.f32.mrf.mxu0
  %v402 = vadd.f32 0.0, %v401
  %v403 = vpop.f32.mrf.mxu0
  %v404 = vadd.f32 0.0, %v403
  %405 = vmatmul.bf16.gmra.mxu0 %v207
  %v406 = vpop.f32.mrf.mxu0
  %v407 = vadd.f32 0.0, %v406
  %v408 = vpop.f32.mrf.mxu0
  %v409 = vadd.f32 0.0, %v408
  %410 = vmatmul.bf16.gmra.mxu0 %v209
  %v411 = vpop.f32.mrf.mxu0
  %v412 = vadd.f32 0.0, %v411
  %v413 = vpop.f32.mrf.mxu0
  %v414 = vadd.f32 0.0, %v413
  %415 = vmatmul.bf16.gmra.mxu0 %v211
  %v416 = vpop.f32.mrf.mxu0
  %v417 = vadd.f32 0.0, %v416
  %v418 = vpop.f32.mrf.mxu0
  %v419 = vadd.f32 0.0, %v418
  %420 = vmatmul.bf16.gmra.mxu0 %v213
  %v421 = vpop.f32.mrf.mxu0
  %v422 = vadd.f32 0.0, %v421
  %v423 = vpop.f32.mrf.mxu0
  %v424 = vadd.f32 0.0, %v423
  %425 = vmatmul.bf16.gmra.mxu0 %v215
  %v426 = vpop.f32.mrf.mxu0
  %v427 = vadd.f32 0.0, %v426
  %v428 = vpop.f32.mrf.mxu0
  %v429 = vadd.f32 0.0, %v428
  %430 = vmatmul.bf16.gmra.mxu0 %v217
  %v431 = vpop.f32.mrf.mxu0
  %v432 = vadd.f32 0.0, %v431
  %v433 = vpop.f32.mrf.mxu0
  %v434 = vadd.f32 0.0, %v433
  %435 = vdwg.mxu0
  %436 = vmatpush.bf16.msra.mxu0 %v330
  %437 = vmatpush.bf16.msra.mxu0 %v329
  %438 = vmatpush.bf16.msra.mxu0 %v328
  %439 = vmatpush.bf16.msra.mxu0 %v327
  %440 = vmatpush.bf16.msra.mxu0 %v326
  %441 = vmatpush.bf16.msra.mxu0 %v325
  %442 = vmatpush.bf16.msra.mxu0 %v324
  %443 = vmatpush.bf16.msra.mxu0 %v323
  %444 = vmatmul.bf16.gmra.mxu0 %v188
  %v445 = vpop.f32.mrf.mxu0
  %v446 = vadd.f32 %v357, %v445
  %v447 = vpop.f32.mrf.mxu0
  %v448 = vadd.f32 %v359, %v447
  %449 = vmatmul.bf16.gmra.mxu0 %v190
  %v450 = vpop.f32.mrf.mxu0
  %v451 = vadd.f32 %v362, %v450
  %v452 = vpop.f32.mrf.mxu0
  %v453 = vadd.f32 %v364, %v452
  %454 = vmatmul.bf16.gmra.mxu0 %v192
  %v455 = vpop.f32.mrf.mxu0
  %v456 = vadd.f32 %v367, %v455
  %v457 = vpop.f32.mrf.mxu0
  %v458 = vadd.f32 %v369, %v457
  %459 = vmatmul.bf16.gmra.mxu0 %v194
  %v460 = vpop.f32.mrf.mxu0
  %v461 = vadd.f32 %v372, %v460
  %v462 = vpop.f32.mrf.mxu0
  %v463 = vadd.f32 %v374, %v462
  %464 = vmatmul.bf16.gmra.mxu0 %v196
  %v465 = vpop.f32.mrf.mxu0
  %v466 = vadd.f32 %v377, %v465
  %v467 = vpop.f32.mrf.mxu0
  %v468 = vadd.f32 %v379, %v467
  %469 = vmatmul.bf16.gmra.mxu0 %v198
  %v470 = vpop.f32.mrf.mxu0
  %v471 = vadd.f32 %v382, %v470
  %v472 = vpop.f32.mrf.mxu0
  %v473 = vadd.f32 %v384, %v472
  %474 = vmatmul.bf16.gmra.mxu0 %v200
  %v475 = vpop.f32.mrf.mxu0
  %v476 = vadd.f32 %v387, %v475
  %v477 = vpop.f32.mrf.mxu0
  %v478 = vadd.f32 %v389, %v477
  %479 = vmatmul.bf16.gmra.mxu0 %v202
  %v480 = vpop.f32.mrf.mxu0
  %v481 = vadd.f32 %v392, %v480
  %v482 = vpop.f32.mrf.mxu0
  %v483 = vadd.f32 %v394, %v482
  %484 = vmatmul.bf16.gmra.mxu0 %v204
  %v485 = vpop.f32.mrf.mxu0
  %v486 = vadd.f32 %v397, %v485
  %v487 = vpop.f32.mrf.mxu0
  %v488 = vadd.f32 %v399, %v487
  %489 = vmatmul.bf16.gmra.mxu0 %v206
  %v490 = vpop.f32.mrf.mxu0
  %v491 = vadd.f32 %v402, %v490
  %v492 = vpop.f32.mrf.mxu0
  %v493 = vadd.f32 %v404, %v492
  %494 = vmatmul.bf16.gmra.mxu0 %v208
  %v495 = vpop.f32.mrf.mxu0
  %v496 = vadd.f32 %v407, %v495
  %v497 = vpop.f32.mrf.mxu0
  %v498 = vadd.f32 %v409, %v497
  %499 = vmatmul.bf16.gmra.mxu0 %v210
  %v500 = vpop.f32.mrf.mxu0
  %v501 = vadd.f32 %v412, %v500
  %v502 = vpop.f32.mrf.mxu0
  %v503 = vadd.f32 %v414, %v502
  %504 = vmatmul.bf16.gmra.mxu0 %v212
  %v505 = vpop.f32.mrf.mxu0
  %v506 = vadd.f32 %v417, %v505
  %v507 = vpop.f32.mrf.mxu0
  %v508 = vadd.f32 %v419, %v507
  %509 = vmatmul.bf16.gmra.mxu0 %v214
  %v510 = vpop.f32.mrf.mxu0
  %v511 = vadd.f32 %v422, %v510
  %v512 = vpop.f32.mrf.mxu0
  %v513 = vadd.f32 %v424, %v512
  %514 = vmatmul.bf16.gmra.mxu0 %v216
  %v515 = vpop.f32.mrf.mxu0
  %v516 = vadd.f32 %v427, %v515
  %v517 = vpop.f32.mrf.mxu0
  %v518 = vadd.f32 %v429, %v517
  %519 = vmatmul.bf16.gmra.mxu0 %v218
  %v520 = vpop.f32.mrf.mxu0
  %v521 = vadd.f32 %v432, %v520
  %v522 = vpop.f32.mrf.mxu0
  %v523 = vadd.f32 %v434, %v522
  %524 = vdwg.mxu0
  %s525 = scalar_lea.vmem %s0, 256
  %v526 = vld [vmem:[%s525] sm:$0xff]
  %v527 = vld [vmem:[%s525 + $0x8] sm:$0xff]
  %v528 = vld [vmem:[%s525 + $0x10] sm:$0xff]
  %v529 = vld [vmem:[%s525 + $0x18] sm:$0xff]
  %v530 = vld [vmem:[%s525 + $0x20] sm:$0xff]
  %v531 = vld [vmem:[%s525 + $0x28] sm:$0xff]
  %v532 = vld [vmem:[%s525 + $0x30] sm:$0xff]
  %v533 = vld [vmem:[%s525 + $0x38] sm:$0xff]
  %v534 = vld [vmem:[%s525 + $0x40] sm:$0xff]
  %v535 = vld [vmem:[%s525 + $0x48] sm:$0xff]
  %v536 = vld [vmem:[%s525 + $0x50] sm:$0xff]
  %v537 = vld [vmem:[%s525 + $0x58] sm:$0xff]
  %v538 = vld [vmem:[%s525 + $0x60] sm:$0xff]
  %v539 = vld [vmem:[%s525 + $0x68] sm:$0xff]
  %v540 = vld [vmem:[%s525 + $0x70] sm:$0xff]
  %v541 = vld [vmem:[%s525 + $0x78] sm:$0xff]
  %v542 = vld [vmem:[%s525 + $0x80] sm:$0xff]
  %v543 = vld [vmem:[%s525 + $0x88] sm:$0xff]
  %v544 = vld [vmem:[%s525 + $0x90] sm:$0xff]
  %v545 = vld [vmem:[%s525 + $0x98] sm:$0xff]
  %v546 = vld [vmem:[%s525 + $0xa0] sm:$0xff]
  %v547 = vld [vmem:[%s525 + $0xa8] sm:$0xff]
  %v548 = vld [vmem:[%s525 + $0xb0] sm:$0xff]
  %v549 = vld [vmem:[%s525 + $0xb8] sm:$0xff]
  %v550 = vld [vmem:[%s525 + $0xc0] sm:$0xff]
  %v551 = vld [vmem:[%s525 + $0xc8] sm:$0xff]
  %v552 = vld [vmem:[%s525 + $0xd0] sm:$0xff]
  %v553 = vld [vmem:[%s525 + $0xd8] sm:$0xff]
  %v554 = vld [vmem:[%s525 + $0xe0] sm:$0xff]
  %v555 = vld [vmem:[%s525 + $0xe8] sm:$0xff]
  %v556 = vld [vmem:[%s525 + $0xf0] sm:$0xff]
  %v557 = vld [vmem:[%s525 + $0xf8] sm:$0xff]
  %v590 = vunpack.c.l.b16 %v526
  %v591 = vunpack.c.h.b16 %v526
  %v592 = vunpack.c.l.b16 %v527
  %v593 = vunpack.c.h.b16 %v527
  %v594 = vunpack.c.l.b16 %v528
  %v595 = vunpack.c.h.b16 %v528
  %v596 = vunpack.c.l.b16 %v529
  %v597 = vunpack.c.h.b16 %v529
  %v598 = vunpack.c.l.b16 %v530
  %v599 = vunpack.c.h.b16 %v530
  %v600 = vunpack.c.l.b16 %v531
  %v601 = vunpack.c.h.b16 %v531
  %v602 = vunpack.c.l.b16 %v532
  %v603 = vunpack.c.h.b16 %v532
  %v604 = vunpack.c.l.b16 %v533
  %v605 = vunpack.c.h.b16 %v533
  %v606 = vunpack.c.l.b16 %v534
  %v607 = vunpack.c.h.b16 %v534
  %v608 = vunpack.c.l.b16 %v535
  %v609 = vunpack.c.h.b16 %v535
  %v610 = vunpack.c.l.b16 %v536
  %v611 = vunpack.c.h.b16 %v536
  %v612 = vunpack.c.l.b16 %v537
  %v613 = vunpack.c.h.b16 %v537
  %v614 = vunpack.c.l.b16 %v538
  %v615 = vunpack.c.h.b16 %v538
  %v616 = vunpack.c.l.b16 %v539
  %v617 = vunpack.c.h.b16 %v539
  %v618 = vunpack.c.l.b16 %v540
  %v619 = vunpack.c.h.b16 %v540
  %v620 = vunpack.c.l.b16 %v541
  %v621 = vunpack.c.h.b16 %v541
  %v622 = vunpack.c.l.b16 %v542
  %v623 = vunpack.c.h.b16 %v542
  %v624 = vunpack.c.l.b16 %v543
  %v625 = vunpack.c.h.b16 %v543
  %v626 = vunpack.c.l.b16 %v544
  %v627 = vunpack.c.h.b16 %v544
  %v628 = vunpack.c.l.b16 %v545
  %v629 = vunpack.c.h.b16 %v545
  %v630 = vunpack.c.l.b16 %v546
  %v631 = vunpack.c.h.b16 %v546
  %v632 = vunpack.c.l.b16 %v547
  %v633 = vunpack.c.h.b16 %v547
  %v634 = vunpack.c.l.b16 %v548
  %v635 = vunpack.c.h.b16 %v548
  %v636 = vunpack.c.l.b16 %v549
  %v637 = vunpack.c.h.b16 %v549
  %v638 = vunpack.c.l.b16 %v550
  %v639 = vunpack.c.h.b16 %v550
  %v640 = vunpack.c.l.b16 %v551
  %v641 = vunpack.c.h.b16 %v551
  %v642 = vunpack.c.l.b16 %v552
  %v643 = vunpack.c.h.b16 %v552
  %v644 = vunpack.c.l.b16 %v553
  %v645 = vunpack.c.h.b16 %v553
  %v646 = vunpack.c.l.b16 %v554
  %v647 = vunpack.c.h.b16 %v554
  %v648 = vunpack.c.l.b16 %v555
  %v649 = vunpack.c.h.b16 %v555
  %v650 = vunpack.c.l.b16 %v556
  %v651 = vunpack.c.h.b16 %v556
  %v652 = vunpack.c.l.b16 %v557
  %v653 = vunpack.c.h.b16 %v557
  %v654 = vpack.c.b16 %v592, %v590
  %v655 = vpack.c.b16 %v593, %v591
  %v656 = vpack.c.b16 %v596, %v594
  %v657 = vpack.c.b16 %v597, %v595
  %v658 = vpack.c.b16 %v600, %v598
  %v659 = vpack.c.b16 %v601, %v599
  %v660 = vpack.c.b16 %v604, %v602
  %v661 = vpack.c.b16 %v605, %v603
  %v662 = vpack.c.b16 %v608, %v606
  %v663 = vpack.c.b16 %v609, %v607
  %v664 = vpack.c.b16 %v612, %v610
  %v665 = vpack.c.b16 %v613, %v611
  %v666 = vpack.c.b16 %v616, %v614
  %v667 = vpack.c.b16 %v617, %v615
  %v668 = vpack.c.b16 %v620, %v618
  %v669 = vpack.c.b16 %v621, %v619
  %v670 = vpack.c.b16 %v624, %v622
  %v671 = vpack.c.b16 %v625, %v623
  %v672 = vpack.c.b16 %v628, %v626
  %v673 = vpack.c.b16 %v629, %v627
  %v674 = vpack.c.b16 %v632, %v630
  %v675 = vpack.c.b16 %v633, %v631
  %v676 = vpack.c.b16 %v636, %v634
  %v677 = vpack.c.b16 %v637, %v635
  %v678 = vpack.c.b16 %v640, %v638
  %v679 = vpack.c.b16 %v641, %v639
  %v680 = vpack.c.b16 %v644, %v642
  %v681 = vpack.c.b16 %v645, %v643
  %v682 = vpack.c.b16 %v648, %v646
  %v683 = vpack.c.b16 %v649, %v647
  %v684 = vpack.c.b16 %v652, %v650
  %v685 = vpack.c.b16 %v653, %v651
  %718 = vmatpush.bf16.msra.mxu0 %v322
  %719 = vmatpush.bf16.msra.mxu0 %v321
  %720 = vmatpush.bf16.msra.mxu0 %v320
  %721 = vmatpush.bf16.msra.mxu0 %v319
  %722 = vmatpush.bf16.msra.mxu0 %v318
  %723 = vmatpush.bf16.msra.mxu0 %v317
  %724 = vmatpush.bf16.msra.mxu0 %v316
  %725 = vmatpush.bf16.msra.mxu0 %v315
  %726 = vmatmul.bf16.gmra.mxu0 %v654
  %v727 = vpop.f32.mrf.mxu0
  %v728 = vadd.f32 0.0, %v727
  %v729 = vpop.f32.mrf.mxu0
  %v730 = vadd.f32 0.0, %v729
  %731 = vmatmul.bf16.gmra.mxu0 %v656
  %v732 = vpop.f32.mrf.mxu0
  %v733 = vadd.f32 0.0, %v732
  %v734 = vpop.f32.mrf.mxu0
  %v735 = vadd.f32 0.0, %v734
  %736 = vmatmul.bf16.gmra.mxu0 %v658
  %v737 = vpop.f32.mrf.mxu0
  %v738 = vadd.f32 0.0, %v737
  %v739 = vpop.f32.mrf.mxu0
  %v740 = vadd.f32 0.0, %v739
  %741 = vmatmul.bf16.gmra.mxu0 %v660
  %v742 = vpop.f32.mrf.mxu0
  %v743 = vadd.f32 0.0, %v742
  %v744 = vpop.f32.mrf.mxu0
  %v745 = vadd.f32 0.0, %v744
  %746 = vmatmul.bf16.gmra.mxu0 %v662
  %v747 = vpop.f32.mrf.mxu0
  %v748 = vadd.f32 0.0, %v747
  %v749 = vpop.f32.mrf.mxu0
  %v750 = vadd.f32 0.0, %v749
  %751 = vmatmul.bf16.gmra.mxu0 %v664
  %v752 = vpop.f32.mrf.mxu0
  %v753 = vadd.f32 0.0, %v752
  %v754 = vpop.f32.mrf.mxu0
  %v755 = vadd.f32 0.0, %v754
  %756 = vmatmul.bf16.gmra.mxu0 %v666
  %v757 = vpop.f32.mrf.mxu0
  %v758 = vadd.f32 0.0, %v757
  %v759 = vpop.f32.mrf.mxu0
  %v760 = vadd.f32 0.0, %v759
  %761 = vmatmul.bf16.gmra.mxu0 %v668
  %v762 = vpop.f32.mrf.mxu0
  %v763 = vadd.f32 0.0, %v762
  %v764 = vpop.f32.mrf.mxu0
  %v765 = vadd.f32 0.0, %v764
  %766 = vmatmul.bf16.gmra.mxu0 %v670
  %v767 = vpop.f32.mrf.mxu0
  %v768 = vadd.f32 0.0, %v767
  %v769 = vpop.f32.mrf.mxu0
  %v770 = vadd.f32 0.0, %v769
  %771 = vmatmul.bf16.gmra.mxu0 %v672
  %v772 = vpop.f32.mrf.mxu0
  %v773 = vadd.f32 0.0, %v772
  %v774 = vpop.f32.mrf.mxu0
  %v775 = vadd.f32 0.0, %v774
  %776 = vmatmul.bf16.gmra.mxu0 %v674
  %v777 = vpop.f32.mrf.mxu0
  %v778 = vadd.f32 0.0, %v777
  %v779 = vpop.f32.mrf.mxu0
  %v780 = vadd.f32 0.0, %v779
  %781 = vmatmul.bf16.gmra.mxu0 %v676
  %v782 = vpop.f32.mrf.mxu0
  %v783 = vadd.f32 0.0, %v782
  %v784 = vpop.f32.mrf.mxu0
  %v785 = vadd.f32 0.0, %v784
  %786 = vmatmul.bf16.gmra.mxu0 %v678
  %v787 = vpop.f32.mrf.mxu0
  %v788 = vadd.f32 0.0, %v787
  %v789 = vpop.f32.mrf.mxu0
  %v790 = vadd.f32 0.0, %v789
  %791 = vmatmul.bf16.gmra.mxu0 %v680
  %v792 = vpop.f32.mrf.mxu0
  %v793 = vadd.f32 0.0, %v792
  %v794 = vpop.f32.mrf.mxu0
  %v795 = vadd.f32 0.0, %v794
  %796 = vmatmul.bf16.gmra.mxu0 %v682
  %v797 = vpop.f32.mrf.mxu0
  %v798 = vadd.f32 0.0, %v797
  %v799 = vpop.f32.mrf.mxu0
  %v800 = vadd.f32 0.0, %v799
  %801 = vmatmul.bf16.gmra.mxu0 %v684
  %v802 = vpop.f32.mrf.mxu0
  %v803 = vadd.f32 0.0, %v802
  %v804 = vpop.f32.mrf.mxu0
  %v805 = vadd.f32 0.0, %v804
  %806 = vdwg.mxu0
  %807 = vmatpush.bf16.msra.mxu0 %v330
  %808 = vmatpush.bf16.msra.mxu0 %v329
  %809 = vmatpush.bf16.msra.mxu0 %v328
  %810 = vmatpush.bf16.msra.mxu0 %v327
  %811 = vmatpush.bf16.msra.mxu0 %v326
  %812 = vmatpush.bf16.msra.mxu0 %v325
  %813 = vmatpush.bf16.msra.mxu0 %v324
  %814 = vmatpush.bf16.msra.mxu0 %v323
  %815 = vmatmul.bf16.gmra.mxu0 %v655
  %v816 = vpop.f32.mrf.mxu0
  %v817 = vadd.f32 %v728, %v816
  %v818 = vpop.f32.mrf.mxu0
  %v819 = vadd.f32 %v730, %v818
  %820 = vmatmul.bf16.gmra.mxu0 %v657
  %v821 = vpop.f32.mrf.mxu0
  %v822 = vadd.f32 %v733, %v821
  %v823 = vpop.f32.mrf.mxu0
  %v824 = vadd.f32 %v735, %v823
  %825 = vmatmul.bf16.gmra.mxu0 %v659
  %v826 = vpop.f32.mrf.mxu0
  %v827 = vadd.f32 %v738, %v826
  %v828 = vpop.f32.mrf.mxu0
  %v829 = vadd.f32 %v740, %v828
  %830 = vmatmul.bf16.gmra.mxu0 %v661
  %v831 = vpop.f32.mrf.mxu0
  %v832 = vadd.f32 %v743, %v831
  %v833 = vpop.f32.mrf.mxu0
  %v834 = vadd.f32 %v745, %v833
  %835 = vmatmul.bf16.gmra.mxu0 %v663
  %v836 = vpop.f32.mrf.mxu0
  %v837 = vadd.f32 %v748, %v836
  %v838 = vpop.f32.mrf.mxu0
  %v839 = vadd.f32 %v750, %v838
  %840 = vmatmul.bf16.gmra.mxu0 %v665
  %v841 = vpop.f32.mrf.mxu0
  %v842 = vadd.f32 %v753, %v841
  %v843 = vpop.f32.mrf.mxu0
  %v844 = vadd.f32 %v755, %v843
  %845 = vmatmul.bf16.gmra.mxu0 %v667
  %v846 = vpop.f32.mrf.mxu0
  %v847 = vadd.f32 %v758, %v846
  %v848 = vpop.f32.mrf.mxu0
  %v849 = vadd.f32 %v760, %v848
  %850 = vmatmul.bf16.gmra.mxu0 %v669
  %v851 = vpop.f32.mrf.mxu0
  %v852 = vadd.f32 %v763, %v851
  %v853 = vpop.f32.mrf.mxu0
  %v854 = vadd.f32 %v765, %v853
  %855 = vmatmul.bf16.gmra.mxu0 %v671
  %v856 = vpop.f32.mrf.mxu0
  %v857 = vadd.f32 %v768, %v856
  %v858 = vpop.f32.mrf.mxu0
  %v859 = vadd.f32 %v770, %v858
  %860 = vmatmul.bf16.gmra.mxu0 %v673
  %v861 = vpop.f32.mrf.mxu0
  %v862 = vadd.f32 %v773, %v861
  %v863 = vpop.f32.mrf.mxu0
  %v864 = vadd.f32 %v775, %v863
  %865 = vmatmul.bf16.gmra.mxu0 %v675
  %v866 = vpop.f32.mrf.mxu0
  %v867 = vadd.f32 %v778, %v866
  %v868 = vpop.f32.mrf.mxu0
  %v869 = vadd.f32 %v780, %v868
  %870 = vmatmul.bf16.gmra.mxu0 %v677
  %v871 = vpop.f32.mrf.mxu0
  %v872 = vadd.f32 %v783, %v871
  %v873 = vpop.f32.mrf.mxu0
  %v874 = vadd.f32 %v785, %v873
  %875 = vmatmul.bf16.gmra.mxu0 %v679
  %v876 = vpop.f32.mrf.mxu0
  %v877 = vadd.f32 %v788, %v876
  %v878 = vpop.f32.mrf.mxu0
  %v879 = vadd.f32 %v790, %v878
  %880 = vmatmul.bf16.gmra.mxu0 %v681
  %v881 = vpop.f32.mrf.mxu0
  %v882 = vadd.f32 %v793, %v881
  %v883 = vpop.f32.mrf.mxu0
  %v884 = vadd.f32 %v795, %v883
  %885 = vmatmul.bf16.gmra.mxu0 %v683
  %v886 = vpop.f32.mrf.mxu0
  %v887 = vadd.f32 %v798, %v886
  %v888 = vpop.f32.mrf.mxu0
  %v889 = vadd.f32 %v800, %v888
  %890 = vmatmul.bf16.gmra.mxu0 %v685
  %v891 = vpop.f32.mrf.mxu0
  %v892 = vadd.f32 %v803, %v891
  %v893 = vpop.f32.mrf.mxu0
  %v894 = vadd.f32 %v805, %v893
  %895 = vdwg.mxu0
  %v896 = vmax.f32 %v446, %v817
  %v897 = vmax.f32 %v448, %v819
  %v898 = vmax.f32 %v451, %v822
  %v899 = vmax.f32 %v453, %v824
  %v900 = vmax.f32 %v456, %v827
  %v901 = vmax.f32 %v458, %v829
  %v902 = vmax.f32 %v461, %v832
  %v903 = vmax.f32 %v463, %v834
  %v904 = vmax.f32 %v466, %v837
  %v905 = vmax.f32 %v468, %v839
  %v906 = vmax.f32 %v471, %v842
  %v907 = vmax.f32 %v473, %v844
  %v908 = vmax.f32 %v476, %v847
  %v909 = vmax.f32 %v478, %v849
  %v910 = vmax.f32 %v481, %v852
  %v911 = vmax.f32 %v483, %v854
  %v912 = vmax.f32 %v486, %v857
  %v913 = vmax.f32 %v488, %v859
  %v914 = vmax.f32 %v491, %v862
  %v915 = vmax.f32 %v493, %v864
  %v916 = vmax.f32 %v496, %v867
  %v917 = vmax.f32 %v498, %v869
  %v918 = vmax.f32 %v501, %v872
  %v919 = vmax.f32 %v503, %v874
  %v920 = vmax.f32 %v506, %v877
  %v921 = vmax.f32 %v508, %v879
  %v922 = vmax.f32 %v511, %v882
  %v923 = vmax.f32 %v513, %v884
  %v924 = vmax.f32 %v516, %v887
  %v925 = vmax.f32 %v518, %v889
  %v926 = vmax.f32 %v521, %v892
  %v927 = vmax.f32 %v523, %v894
  %s928 = scalar_lea.vmem %s0, 512
  %v929 = vld [vmem:[%s928] sm:$0xff]
  %v930 = vld [vmem:[%s928 + $0x8] sm:$0xff]
  %v931 = vld [vmem:[%s928 + $0x10] sm:$0xff]
  %v932 = vld [vmem:[%s928 + $0x18] sm:$0xff]
  %v933 = vld [vmem:[%s928 + $0x20] sm:$0xff]
  %v934 = vld [vmem:[%s928 + $0x28] sm:$0xff]
  %v935 = vld [vmem:[%s928 + $0x30] sm:$0xff]
  %v936 = vld [vmem:[%s928 + $0x38] sm:$0xff]
  %v937 = vld [vmem:[%s928 + $0x40] sm:$0xff]
  %v938 = vld [vmem:[%s928 + $0x48] sm:$0xff]
  %v939 = vld [vmem:[%s928 + $0x50] sm:$0xff]
  %v940 = vld [vmem:[%s928 + $0x58] sm:$0xff]
  %v941 = vld [vmem:[%s928 + $0x60] sm:$0xff]
  %v942 = vld [vmem:[%s928 + $0x68] sm:$0xff]
  %v943 = vld [vmem:[%s928 + $0x70] sm:$0xff]
  %v944 = vld [vmem:[%s928 + $0x78] sm:$0xff]
  %v945 = vld [vmem:[%s928 + $0x80] sm:$0xff]
  %v946 = vld [vmem:[%s928 + $0x88] sm:$0xff]
  %v947 = vld [vmem:[%s928 + $0x90] sm:$0xff]
  %v948 = vld [vmem:[%s928 + $0x98] sm:$0xff]
  %v949 = vld [vmem:[%s928 + $0xa0] sm:$0xff]
  %v950 = vld [vmem:[%s928 + $0xa8] sm:$0xff]
  %v951 = vld [vmem:[%s928 + $0xb0] sm:$0xff]
  %v952 = vld [vmem:[%s928 + $0xb8] sm:$0xff]
  %v953 = vld [vmem:[%s928 + $0xc0] sm:$0xff]
  %v954 = vld [vmem:[%s928 + $0xc8] sm:$0xff]
  %v955 = vld [vmem:[%s928 + $0xd0] sm:$0xff]
  %v956 = vld [vmem:[%s928 + $0xd8] sm:$0xff]
  %v957 = vld [vmem:[%s928 + $0xe0] sm:$0xff]
  %v958 = vld [vmem:[%s928 + $0xe8] sm:$0xff]
  %v959 = vld [vmem:[%s928 + $0xf0] sm:$0xff]
  %v960 = vld [vmem:[%s928 + $0xf8] sm:$0xff]
  %v993 = vunpack.c.l.b16 %v929
  %v994 = vunpack.c.h.b16 %v929
  %v995 = vunpack.c.l.b16 %v930
  %v996 = vunpack.c.h.b16 %v930
  %v997 = vunpack.c.l.b16 %v931
  %v998 = vunpack.c.h.b16 %v931
  %v999 = vunpack.c.l.b16 %v932
  %v1000 = vunpack.c.h.b16 %v932
  %v1001 = vunpack.c.l.b16 %v933
  %v1002 = vunpack.c.h.b16 %v933
  %v1003 = vunpack.c.l.b16 %v934
  %v1004 = vunpack.c.h.b16 %v934
  %v1005 = vunpack.c.l.b16 %v935
  %v1006 = vunpack.c.h.b16 %v935
  %v1007 = vunpack.c.l.b16 %v936
  %v1008 = vunpack.c.h.b16 %v936
  %v1009 = vunpack.c.l.b16 %v937
  %v1010 = vunpack.c.h.b16 %v937
  %v1011 = vunpack.c.l.b16 %v938
  %v1012 = vunpack.c.h.b16 %v938
  %v1013 = vunpack.c.l.b16 %v939
  %v1014 = vunpack.c.h.b16 %v939
  %v1015 = vunpack.c.l.b16 %v940
  %v1016 = vunpack.c.h.b16 %v940
  %v1017 = vunpack.c.l.b16 %v941
  %v1018 = vunpack.c.h.b16 %v941
  %v1019 = vunpack.c.l.b16 %v942
  %v1020 = vunpack.c.h.b16 %v942
  %v1021 = vunpack.c.l.b16 %v943
  %v1022 = vunpack.c.h.b16 %v943
  %v1023 = vunpack.c.l.b16 %v944
  %v1024 = vunpack.c.h.b16 %v944
  %v1025 = vunpack.c.l.b16 %v945
  %v1026 = vunpack.c.h.b16 %v945
  %v1027 = vunpack.c.l.b16 %v946
  %v1028 = vunpack.c.h.b16 %v946
  %v1029 = vunpack.c.l.b16 %v947
  %v1030 = vunpack.c.h.b16 %v947
  %v1031 = vunpack.c.l.b16 %v948
  %v1032 = vunpack.c.h.b16 %v948
  %v1033 = vunpack.c.l.b16 %v949
  %v1034 = vunpack.c.h.b16 %v949
  %v1035 = vunpack.c.l.b16 %v950
  %v1036 = vunpack.c.h.b16 %v950
  %v1037 = vunpack.c.l.b16 %v951
  %v1038 = vunpack.c.h.b16 %v951
  %v1039 = vunpack.c.l.b16 %v952
  %v1040 = vunpack.c.h.b16 %v952
  %v1041 = vunpack.c.l.b16 %v953
  %v1042 = vunpack.c.h.b16 %v953
  %v1043 = vunpack.c.l.b16 %v954
  %v1044 = vunpack.c.h.b16 %v954
  %v1045 = vunpack.c.l.b16 %v955
  %v1046 = vunpack.c.h.b16 %v955
  %v1047 = vunpack.c.l.b16 %v956
  %v1048 = vunpack.c.h.b16 %v956
  %v1049 = vunpack.c.l.b16 %v957
  %v1050 = vunpack.c.h.b16 %v957
  %v1051 = vunpack.c.l.b16 %v958
  %v1052 = vunpack.c.h.b16 %v958
  %v1053 = vunpack.c.l.b16 %v959
  %v1054 = vunpack.c.h.b16 %v959
  %v1055 = vunpack.c.l.b16 %v960
  %v1056 = vunpack.c.h.b16 %v960
  %v1057 = vpack.c.b16 %v995, %v993
  %v1058 = vpack.c.b16 %v996, %v994
  %v1059 = vpack.c.b16 %v999, %v997
  %v1060 = vpack.c.b16 %v1000, %v998
  %v1061 = vpack.c.b16 %v1003, %v1001
  %v1062 = vpack.c.b16 %v1004, %v1002
  %v1063 = vpack.c.b16 %v1007, %v1005
  %v1064 = vpack.c.b16 %v1008, %v1006
  %v1065 = vpack.c.b16 %v1011, %v1009
  %v1066 = vpack.c.b16 %v1012, %v1010
  %v1067 = vpack.c.b16 %v1015, %v1013
  %v1068 = vpack.c.b16 %v1016, %v1014
  %v1069 = vpack.c.b16 %v1019, %v1017
  %v1070 = vpack.c.b16 %v1020, %v1018
  %v1071 = vpack.c.b16 %v1023, %v1021
  %v1072 = vpack.c.b16 %v1024, %v1022
  %v1073 = vpack.c.b16 %v1027, %v1025
  %v1074 = vpack.c.b16 %v1028, %v1026
  %v1075 = vpack.c.b16 %v1031, %v1029
  %v1076 = vpack.c.b16 %v1032, %v1030
  %v1077 = vpack.c.b16 %v1035, %v1033
  %v1078 = vpack.c.b16 %v1036, %v1034
  %v1079 = vpack.c.b16 %v1039, %v1037
  %v1080 = vpack.c.b16 %v1040, %v1038
  %v1081 = vpack.c.b16 %v1043, %v1041
  %v1082 = vpack.c.b16 %v1044, %v1042
  %v1083 = vpack.c.b16 %v1047, %v1045
  %v1084 = vpack.c.b16 %v1048, %v1046
  %v1085 = vpack.c.b16 %v1051, %v1049
  %v1086 = vpack.c.b16 %v1052, %v1050
  %v1087 = vpack.c.b16 %v1055, %v1053
  %v1088 = vpack.c.b16 %v1056, %v1054
  %1121 = vmatpush.bf16.msra.mxu0 %v322
  %1122 = vmatpush.bf16.msra.mxu0 %v321
  %1123 = vmatpush.bf16.msra.mxu0 %v320
  %1124 = vmatpush.bf16.msra.mxu0 %v319
  %1125 = vmatpush.bf16.msra.mxu0 %v318
  %1126 = vmatpush.bf16.msra.mxu0 %v317
  %1127 = vmatpush.bf16.msra.mxu0 %v316
  %1128 = vmatpush.bf16.msra.mxu0 %v315
  %1129 = vmatmul.bf16.gmra.mxu0 %v1057
  %v1130 = vpop.f32.mrf.mxu0
  %v1131 = vadd.f32 0.0, %v1130
  %v1132 = vpop.f32.mrf.mxu0
  %v1133 = vadd.f32 0.0, %v1132
  %1134 = vmatmul.bf16.gmra.mxu0 %v1059
  %v1135 = vpop.f32.mrf.mxu0
  %v1136 = vadd.f32 0.0, %v1135
  %v1137 = vpop.f32.mrf.mxu0
  %v1138 = vadd.f32 0.0, %v1137
  %1139 = vmatmul.bf16.gmra.mxu0 %v1061
  %v1140 = vpop.f32.mrf.mxu0
  %v1141 = vadd.f32 0.0, %v1140
  %v1142 = vpop.f32.mrf.mxu0
  %v1143 = vadd.f32 0.0, %v1142
  %1144 = vmatmul.bf16.gmra.mxu0 %v1063
  %v1145 = vpop.f32.mrf.mxu0
  %v1146 = vadd.f32 0.0, %v1145
  %v1147 = vpop.f32.mrf.mxu0
  %v1148 = vadd.f32 0.0, %v1147
  %1149 = vmatmul.bf16.gmra.mxu0 %v1065
  %v1150 = vpop.f32.mrf.mxu0
  %v1151 = vadd.f32 0.0, %v1150
  %v1152 = vpop.f32.mrf.mxu0
  %v1153 = vadd.f32 0.0, %v1152
  %1154 = vmatmul.bf16.gmra.mxu0 %v1067
  %v1155 = vpop.f32.mrf.mxu0
  %v1156 = vadd.f32 0.0, %v1155
  %v1157 = vpop.f32.mrf.mxu0
  %v1158 = vadd.f32 0.0, %v1157
  %1159 = vmatmul.bf16.gmra.mxu0 %v1069
  %v1160 = vpop.f32.mrf.mxu0
  %v1161 = vadd.f32 0.0, %v1160
  %v1162 = vpop.f32.mrf.mxu0
  %v1163 = vadd.f32 0.0, %v1162
  %1164 = vmatmul.bf16.gmra.mxu0 %v1071
  %v1165 = vpop.f32.mrf.mxu0
  %v1166 = vadd.f32 0.0, %v1165
  %v1167 = vpop.f32.mrf.mxu0
  %v1168 = vadd.f32 0.0, %v1167
  %1169 = vmatmul.bf16.gmra.mxu0 %v1073
  %v1170 = vpop.f32.mrf.mxu0
  %v1171 = vadd.f32 0.0, %v1170
  %v1172 = vpop.f32.mrf.mxu0
  %v1173 = vadd.f32 0.0, %v1172
  %1174 = vmatmul.bf16.gmra.mxu0 %v1075
  %v1175 = vpop.f32.mrf.mxu0
  %v1176 = vadd.f32 0.0, %v1175
  %v1177 = vpop.f32.mrf.mxu0
  %v1178 = vadd.f32 0.0, %v1177
  %1179 = vmatmul.bf16.gmra.mxu0 %v1077
  %v1180 = vpop.f32.mrf.mxu0
  %v1181 = vadd.f32 0.0, %v1180
  %v1182 = vpop.f32.mrf.mxu0
  %v1183 = vadd.f32 0.0, %v1182
  %1184 = vmatmul.bf16.gmra.mxu0 %v1079
  %v1185 = vpop.f32.mrf.mxu0
  %v1186 = vadd.f32 0.0, %v1185
  %v1187 = vpop.f32.mrf.mxu0
  %v1188 = vadd.f32 0.0, %v1187
  %1189 = vmatmul.bf16.gmra.mxu0 %v1081
  %v1190 = vpop.f32.mrf.mxu0
  %v1191 = vadd.f32 0.0, %v1190
  %v1192 = vpop.f32.mrf.mxu0
  %v1193 = vadd.f32 0.0, %v1192
  %1194 = vmatmul.bf16.gmra.mxu0 %v1083
  %v1195 = vpop.f32.mrf.mxu0
  %v1196 = vadd.f32 0.0, %v1195
  %v1197 = vpop.f32.mrf.mxu0
  %v1198 = vadd.f32 0.0, %v1197
  %1199 = vmatmul.bf16.gmra.mxu0 %v1085
  %v1200 = vpop.f32.mrf.mxu0
  %v1201 = vadd.f32 0.0, %v1200
  %v1202 = vpop.f32.mrf.mxu0
  %v1203 = vadd.f32 0.0, %v1202
  %1204 = vmatmul.bf16.gmra.mxu0 %v1087
  %v1205 = vpop.f32.mrf.mxu0
  %v1206 = vadd.f32 0.0, %v1205
  %v1207 = vpop.f32.mrf.mxu0
  %v1208 = vadd.f32 0.0, %v1207
  %1209 = vdwg.mxu0
  %1210 = vmatpush.bf16.msra.mxu0 %v330
  %1211 = vmatpush.bf16.msra.mxu0 %v329
  %1212 = vmatpush.bf16.msra.mxu0 %v328
  %1213 = vmatpush.bf16.msra.mxu0 %v327
  %1214 = vmatpush.bf16.msra.mxu0 %v326
  %1215 = vmatpush.bf16.msra.mxu0 %v325
  %1216 = vmatpush.bf16.msra.mxu0 %v324
  %1217 = vmatpush.bf16.msra.mxu0 %v323
  %1218 = vmatmul.bf16.gmra.mxu0 %v1058
  %v1219 = vpop.f32.mrf.mxu0
  %v1220 = vadd.f32 %v1131, %v1219
  %v1221 = vpop.f32.mrf.mxu0
  %v1222 = vadd.f32 %v1133, %v1221
  %1223 = vmatmul.bf16.gmra.mxu0 %v1060
  %v1224 = vpop.f32.mrf.mxu0
  %v1225 = vadd.f32 %v1136, %v1224
  %v1226 = vpop.f32.mrf.mxu0
  %v1227 = vadd.f32 %v1138, %v1226
  %1228 = vmatmul.bf16.gmra.mxu0 %v1062
  %v1229 = vpop.f32.mrf.mxu0
  %v1230 = vadd.f32 %v1141, %v1229
  %v1231 = vpop.f32.mrf.mxu0
  %v1232 = vadd.f32 %v1143, %v1231
  %1233 = vmatmul.bf16.gmra.mxu0 %v1064
  %v1234 = vpop.f32.mrf.mxu0
  %v1235 = vadd.f32 %v1146, %v1234
  %v1236 = vpop.f32.mrf.mxu0
  %v1237 = vadd.f32 %v1148, %v1236
  %1238 = vmatmul.bf16.gmra.mxu0 %v1066
  %v1239 = vpop.f32.mrf.mxu0
  %v1240 = vadd.f32 %v1151, %v1239
  %v1241 = vpop.f32.mrf.mxu0
  %v1242 = vadd.f32 %v1153, %v1241
  %1243 = vmatmul.bf16.gmra.mxu0 %v1068
  %v1244 = vpop.f32.mrf.mxu0
  %v1245 = vadd.f32 %v1156, %v1244
  %v1246 = vpop.f32.mrf.mxu0
  %v1247 = vadd.f32 %v1158, %v1246
  %1248 = vmatmul.bf16.gmra.mxu0 %v1070
  %v1249 = vpop.f32.mrf.mxu0
  %v1250 = vadd.f32 %v1161, %v1249
  %v1251 = vpop.f32.mrf.mxu0
  %v1252 = vadd.f32 %v1163, %v1251
  %1253 = vmatmul.bf16.gmra.mxu0 %v1072
  %v1254 = vpop.f32.mrf.mxu0
  %v1255 = vadd.f32 %v1166, %v1254
  %v1256 = vpop.f32.mrf.mxu0
  %v1257 = vadd.f32 %v1168, %v1256
  %1258 = vmatmul.bf16.gmra.mxu0 %v1074
  %v1259 = vpop.f32.mrf.mxu0
  %v1260 = vadd.f32 %v1171, %v1259
  %v1261 = vpop.f32.mrf.mxu0
  %v1262 = vadd.f32 %v1173, %v1261
  %1263 = vmatmul.bf16.gmra.mxu0 %v1076
  %v1264 = vpop.f32.mrf.mxu0
  %v1265 = vadd.f32 %v1176, %v1264
  %v1266 = vpop.f32.mrf.mxu0
  %v1267 = vadd.f32 %v1178, %v1266
  %1268 = vmatmul.bf16.gmra.mxu0 %v1078
  %v1269 = vpop.f32.mrf.mxu0
  %v1270 = vadd.f32 %v1181, %v1269
  %v1271 = vpop.f32.mrf.mxu0
  %v1272 = vadd.f32 %v1183, %v1271
  %1273 = vmatmul.bf16.gmra.mxu0 %v1080
  %v1274 = vpop.f32.mrf.mxu0
  %v1275 = vadd.f32 %v1186, %v1274
  %v1276 = vpop.f32.mrf.mxu0
  %v1277 = vadd.f32 %v1188, %v1276
  %1278 = vmatmul.bf16.gmra.mxu0 %v1082
  %v1279 = vpop.f32.mrf.mxu0
  %v1280 = vadd.f32 %v1191, %v1279
  %v1281 = vpop.f32.mrf.mxu0
  %v1282 = vadd.f32 %v1193, %v1281
  %1283 = vmatmul.bf16.gmra.mxu0 %v1084
  %v1284 = vpop.f32.mrf.mxu0
  %v1285 = vadd.f32 %v1196, %v1284
  %v1286 = vpop.f32.mrf.mxu0
  %v1287 = vadd.f32 %v1198, %v1286
  %1288 = vmatmul.bf16.gmra.mxu0 %v1086
  %v1289 = vpop.f32.mrf.mxu0
  %v1290 = vadd.f32 %v1201, %v1289
  %v1291 = vpop.f32.mrf.mxu0
  %v1292 = vadd.f32 %v1203, %v1291
  %1293 = vmatmul.bf16.gmra.mxu0 %v1088
  %v1294 = vpop.f32.mrf.mxu0
  %v1295 = vadd.f32 %v1206, %v1294
  %v1296 = vpop.f32.mrf.mxu0
  %v1297 = vadd.f32 %v1208, %v1296
  %1298 = vdwg.mxu0
  %v1299 = vmax.f32 %v896, %v1220
  %v1300 = vmax.f32 %v897, %v1222
  %v1301 = vmax.f32 %v898, %v1225
  %v1302 = vmax.f32 %v899, %v1227
  %v1303 = vmax.f32 %v900, %v1230
  %v1304 = vmax.f32 %v901, %v1232
  %v1305 = vmax.f32 %v902, %v1235
  %v1306 = vmax.f32 %v903, %v1237
  %v1307 = vmax.f32 %v904, %v1240
  %v1308 = vmax.f32 %v905, %v1242
  %v1309 = vmax.f32 %v906, %v1245
  %v1310 = vmax.f32 %v907, %v1247
  %v1311 = vmax.f32 %v908, %v1250
  %v1312 = vmax.f32 %v909, %v1252
  %v1313 = vmax.f32 %v910, %v1255
  %v1314 = vmax.f32 %v911, %v1257
  %v1315 = vmax.f32 %v912, %v1260
  %v1316 = vmax.f32 %v913, %v1262
  %v1317 = vmax.f32 %v914, %v1265
  %v1318 = vmax.f32 %v915, %v1267
  %v1319 = vmax.f32 %v916, %v1270
  %v1320 = vmax.f32 %v917, %v1272
  %v1321 = vmax.f32 %v918, %v1275
  %v1322 = vmax.f32 %v919, %v1277
  %v1323 = vmax.f32 %v920, %v1280
  %v1324 = vmax.f32 %v921, %v1282
  %v1325 = vmax.f32 %v922, %v1285
  %v1326 = vmax.f32 %v923, %v1287
  %v1327 = vmax.f32 %v924, %v1290
  %v1328 = vmax.f32 %v925, %v1292
  %v1329 = vmax.f32 %v926, %v1295
  %v1330 = vmax.f32 %v927, %v1297
  %s1331 = scalar_lea.vmem %s0, 768
  %v1332 = vld [vmem:[%s1331] sm:$0xff]
  %v1333 = vld [vmem:[%s1331 + $0x8] sm:$0xff]
  %v1334 = vld [vmem:[%s1331 + $0x10] sm:$0xff]
  %v1335 = vld [vmem:[%s1331 + $0x18] sm:$0xff]
  %v1336 = vld [vmem:[%s1331 + $0x20] sm:$0xff]
  %v1337 = vld [vmem:[%s1331 + $0x28] sm:$0xff]
  %v1338 = vld [vmem:[%s1331 + $0x30] sm:$0xff]
  %v1339 = vld [vmem:[%s1331 + $0x38] sm:$0xff]
  %v1340 = vld [vmem:[%s1331 + $0x40] sm:$0xff]
  %v1341 = vld [vmem:[%s1331 + $0x48] sm:$0xff]
  %v1342 = vld [vmem:[%s1331 + $0x50] sm:$0xff]
  %v1343 = vld [vmem:[%s1331 + $0x58] sm:$0xff]
  %v1344 = vld [vmem:[%s1331 + $0x60] sm:$0xff]
  %v1345 = vld [vmem:[%s1331 + $0x68] sm:$0xff]
  %v1346 = vld [vmem:[%s1331 + $0x70] sm:$0xff]
  %v1347 = vld [vmem:[%s1331 + $0x78] sm:$0xff]
  %v1348 = vld [vmem:[%s1331 + $0x80] sm:$0xff]
  %v1349 = vld [vmem:[%s1331 + $0x88] sm:$0xff]
  %v1350 = vld [vmem:[%s1331 + $0x90] sm:$0xff]
  %v1351 = vld [vmem:[%s1331 + $0x98] sm:$0xff]
  %v1352 = vld [vmem:[%s1331 + $0xa0] sm:$0xff]
  %v1353 = vld [vmem:[%s1331 + $0xa8] sm:$0xff]
  %v1354 = vld [vmem:[%s1331 + $0xb0] sm:$0xff]
  %v1355 = vld [vmem:[%s1331 + $0xb8] sm:$0xff]
  %v1356 = vld [vmem:[%s1331 + $0xc0] sm:$0xff]
  %v1357 = vld [vmem:[%s1331 + $0xc8] sm:$0xff]
  %v1358 = vld [vmem:[%s1331 + $0xd0] sm:$0xff]
  %v1359 = vld [vmem:[%s1331 + $0xd8] sm:$0xff]
  %v1360 = vld [vmem:[%s1331 + $0xe0] sm:$0xff]
  %v1361 = vld [vmem:[%s1331 + $0xe8] sm:$0xff]
  %v1362 = vld [vmem:[%s1331 + $0xf0] sm:$0xff]
  %v1363 = vld [vmem:[%s1331 + $0xf8] sm:$0xff]
  %v1396 = vunpack.c.l.b16 %v1332
  %v1397 = vunpack.c.h.b16 %v1332
  %v1398 = vunpack.c.l.b16 %v1333
  %v1399 = vunpack.c.h.b16 %v1333
  %v1400 = vunpack.c.l.b16 %v1334
  %v1401 = vunpack.c.h.b16 %v1334
  %v1402 = vunpack.c.l.b16 %v1335
  %v1403 = vunpack.c.h.b16 %v1335
  %v1404 = vunpack.c.l.b16 %v1336
  %v1405 = vunpack.c.h.b16 %v1336
  %v1406 = vunpack.c.l.b16 %v1337
  %v1407 = vunpack.c.h.b16 %v1337
  %v1408 = vunpack.c.l.b16 %v1338
  %v1409 = vunpack.c.h.b16 %v1338
  %v1410 = vunpack.c.l.b16 %v1339
  %v1411 = vunpack.c.h.b16 %v1339
  %v1412 = vunpack.c.l.b16 %v1340
  %v1413 = vunpack.c.h.b16 %v1340
  %v1414 = vunpack.c.l.b16 %v1341
  %v1415 = vunpack.c.h.b16 %v1341
  %v1416 = vunpack.c.l.b16 %v1342
  %v1417 = vunpack.c.h.b16 %v1342
  %v1418 = vunpack.c.l.b16 %v1343
  %v1419 = vunpack.c.h.b16 %v1343
  %v1420 = vunpack.c.l.b16 %v1344
  %v1421 = vunpack.c.h.b16 %v1344
  %v1422 = vunpack.c.l.b16 %v1345
  %v1423 = vunpack.c.h.b16 %v1345
  %v1424 = vunpack.c.l.b16 %v1346
  %v1425 = vunpack.c.h.b16 %v1346
  %v1426 = vunpack.c.l.b16 %v1347
  %v1427 = vunpack.c.h.b16 %v1347
  %v1428 = vunpack.c.l.b16 %v1348
  %v1429 = vunpack.c.h.b16 %v1348
  %v1430 = vunpack.c.l.b16 %v1349
  %v1431 = vunpack.c.h.b16 %v1349
  %v1432 = vunpack.c.l.b16 %v1350
  %v1433 = vunpack.c.h.b16 %v1350
  %v1434 = vunpack.c.l.b16 %v1351
  %v1435 = vunpack.c.h.b16 %v1351
  %v1436 = vunpack.c.l.b16 %v1352
  %v1437 = vunpack.c.h.b16 %v1352
  %v1438 = vunpack.c.l.b16 %v1353
  %v1439 = vunpack.c.h.b16 %v1353
  %v1440 = vunpack.c.l.b16 %v1354
  %v1441 = vunpack.c.h.b16 %v1354
  %v1442 = vunpack.c.l.b16 %v1355
  %v1443 = vunpack.c.h.b16 %v1355
  %v1444 = vunpack.c.l.b16 %v1356
  %v1445 = vunpack.c.h.b16 %v1356
  %v1446 = vunpack.c.l.b16 %v1357
  %v1447 = vunpack.c.h.b16 %v1357
  %v1448 = vunpack.c.l.b16 %v1358
  %v1449 = vunpack.c.h.b16 %v1358
  %v1450 = vunpack.c.l.b16 %v1359
  %v1451 = vunpack.c.h.b16 %v1359
  %v1452 = vunpack.c.l.b16 %v1360
  %v1453 = vunpack.c.h.b16 %v1360
  %v1454 = vunpack.c.l.b16 %v1361
  %v1455 = vunpack.c.h.b16 %v1361
  %v1456 = vunpack.c.l.b16 %v1362
  %v1457 = vunpack.c.h.b16 %v1362
  %v1458 = vunpack.c.l.b16 %v1363
  %v1459 = vunpack.c.h.b16 %v1363
  %v1460 = vpack.c.b16 %v1398, %v1396
  %v1461 = vpack.c.b16 %v1399, %v1397
  %v1462 = vpack.c.b16 %v1402, %v1400
  %v1463 = vpack.c.b16 %v1403, %v1401
  %v1464 = vpack.c.b16 %v1406, %v1404
  %v1465 = vpack.c.b16 %v1407, %v1405
  %v1466 = vpack.c.b16 %v1410, %v1408
  %v1467 = vpack.c.b16 %v1411, %v1409
  %v1468 = vpack.c.b16 %v1414, %v1412
  %v1469 = vpack.c.b16 %v1415, %v1413
  %v1470 = vpack.c.b16 %v1418, %v1416
  %v1471 = vpack.c.b16 %v1419, %v1417
  %v1472 = vpack.c.b16 %v1422, %v1420
  %v1473 = vpack.c.b16 %v1423, %v1421
  %v1474 = vpack.c.b16 %v1426, %v1424
  %v1475 = vpack.c.b16 %v1427, %v1425
  %v1476 = vpack.c.b16 %v1430, %v1428
  %v1477 = vpack.c.b16 %v1431, %v1429
  %v1478 = vpack.c.b16 %v1434, %v1432
  %v1479 = vpack.c.b16 %v1435, %v1433
  %v1480 = vpack.c.b16 %v1438, %v1436
  %v1481 = vpack.c.b16 %v1439, %v1437
  %v1482 = vpack.c.b16 %v1442, %v1440
  %v1483 = vpack.c.b16 %v1443, %v1441
  %v1484 = vpack.c.b16 %v1446, %v1444
  %v1485 = vpack.c.b16 %v1447, %v1445
  %v1486 = vpack.c.b16 %v1450, %v1448
  %v1487 = vpack.c.b16 %v1451, %v1449
  %v1488 = vpack.c.b16 %v1454, %v1452
  %v1489 = vpack.c.b16 %v1455, %v1453
  %v1490 = vpack.c.b16 %v1458, %v1456
  %v1491 = vpack.c.b16 %v1459, %v1457
  %1524 = vmatpush.bf16.msra.mxu0 %v322
  %1525 = vmatpush.bf16.msra.mxu0 %v321
  %1526 = vmatpush.bf16.msra.mxu0 %v320
  %1527 = vmatpush.bf16.msra.mxu0 %v319
  %1528 = vmatpush.bf16.msra.mxu0 %v318
  %1529 = vmatpush.bf16.msra.mxu0 %v317
  %1530 = vmatpush.bf16.msra.mxu0 %v316
  %1531 = vmatpush.bf16.msra.mxu0 %v315
  %1532 = vmatmul.bf16.gmra.mxu0 %v1460
  %v1533 = vpop.f32.mrf.mxu0
  %v1534 = vadd.f32 0.0, %v1533
  %v1535 = vpop.f32.mrf.mxu0
  %v1536 = vadd.f32 0.0, %v1535
  %1537 = vmatmul.bf16.gmra.mxu0 %v1462
  %v1538 = vpop.f32.mrf.mxu0
  %v1539 = vadd.f32 0.0, %v1538
  %v1540 = vpop.f32.mrf.mxu0
  %v1541 = vadd.f32 0.0, %v1540
  %1542 = vmatmul.bf16.gmra.mxu0 %v1464
  %v1543 = vpop.f32.mrf.mxu0
  %v1544 = vadd.f32 0.0, %v1543
  %v1545 = vpop.f32.mrf.mxu0
  %v1546 = vadd.f32 0.0, %v1545
  %1547 = vmatmul.bf16.gmra.mxu0 %v1466
  %v1548 = vpop.f32.mrf.mxu0
  %v1549 = vadd.f32 0.0, %v1548
  %v1550 = vpop.f32.mrf.mxu0
  %v1551 = vadd.f32 0.0, %v1550
  %1552 = vmatmul.bf16.gmra.mxu0 %v1468
  %v1553 = vpop.f32.mrf.mxu0
  %v1554 = vadd.f32 0.0, %v1553
  %v1555 = vpop.f32.mrf.mxu0
  %v1556 = vadd.f32 0.0, %v1555
  %1557 = vmatmul.bf16.gmra.mxu0 %v1470
  %v1558 = vpop.f32.mrf.mxu0
  %v1559 = vadd.f32 0.0, %v1558
  %v1560 = vpop.f32.mrf.mxu0
  %v1561 = vadd.f32 0.0, %v1560
  %1562 = vmatmul.bf16.gmra.mxu0 %v1472
  %v1563 = vpop.f32.mrf.mxu0
  %v1564 = vadd.f32 0.0, %v1563
  %v1565 = vpop.f32.mrf.mxu0
  %v1566 = vadd.f32 0.0, %v1565
  %1567 = vmatmul.bf16.gmra.mxu0 %v1474
  %v1568 = vpop.f32.mrf.mxu0
  %v1569 = vadd.f32 0.0, %v1568
  %v1570 = vpop.f32.mrf.mxu0
  %v1571 = vadd.f32 0.0, %v1570
  %1572 = vmatmul.bf16.gmra.mxu0 %v1476
  %v1573 = vpop.f32.mrf.mxu0
  %v1574 = vadd.f32 0.0, %v1573
  %v1575 = vpop.f32.mrf.mxu0
  %v1576 = vadd.f32 0.0, %v1575
  %1577 = vmatmul.bf16.gmra.mxu0 %v1478
  %v1578 = vpop.f32.mrf.mxu0
  %v1579 = vadd.f32 0.0, %v1578
  %v1580 = vpop.f32.mrf.mxu0
  %v1581 = vadd.f32 0.0, %v1580
  %1582 = vmatmul.bf16.gmra.mxu0 %v1480
  %v1583 = vpop.f32.mrf.mxu0
  %v1584 = vadd.f32 0.0, %v1583
  %v1585 = vpop.f32.mrf.mxu0
  %v1586 = vadd.f32 0.0, %v1585
  %1587 = vmatmul.bf16.gmra.mxu0 %v1482
  %v1588 = vpop.f32.mrf.mxu0
  %v1589 = vadd.f32 0.0, %v1588
  %v1590 = vpop.f32.mrf.mxu0
  %v1591 = vadd.f32 0.0, %v1590
  %1592 = vmatmul.bf16.gmra.mxu0 %v1484
  %v1593 = vpop.f32.mrf.mxu0
  %v1594 = vadd.f32 0.0, %v1593
  %v1595 = vpop.f32.mrf.mxu0
  %v1596 = vadd.f32 0.0, %v1595
  %1597 = vmatmul.bf16.gmra.mxu0 %v1486
  %v1598 = vpop.f32.mrf.mxu0
  %v1599 = vadd.f32 0.0, %v1598
  %v1600 = vpop.f32.mrf.mxu0
  %v1601 = vadd.f32 0.0, %v1600
  %1602 = vmatmul.bf16.gmra.mxu0 %v1488
  %v1603 = vpop.f32.mrf.mxu0
  %v1604 = vadd.f32 0.0, %v1603
  %v1605 = vpop.f32.mrf.mxu0
  %v1606 = vadd.f32 0.0, %v1605
  %1607 = vmatmul.bf16.gmra.mxu0 %v1490
  %v1608 = vpop.f32.mrf.mxu0
  %v1609 = vadd.f32 0.0, %v1608
  %v1610 = vpop.f32.mrf.mxu0
  %v1611 = vadd.f32 0.0, %v1610
  %1612 = vdwg.mxu0
  %1613 = vmatpush.bf16.msra.mxu0 %v330
  %1614 = vmatpush.bf16.msra.mxu0 %v329
  %1615 = vmatpush.bf16.msra.mxu0 %v328
  %1616 = vmatpush.bf16.msra.mxu0 %v327
  %1617 = vmatpush.bf16.msra.mxu0 %v326
  %1618 = vmatpush.bf16.msra.mxu0 %v325
  %1619 = vmatpush.bf16.msra.mxu0 %v324
  %1620 = vmatpush.bf16.msra.mxu0 %v323
  %1621 = vmatmul.bf16.gmra.mxu0 %v1461
  %v1622 = vpop.f32.mrf.mxu0
  %v1623 = vadd.f32 %v1534, %v1622
  %v1624 = vpop.f32.mrf.mxu0
  %v1625 = vadd.f32 %v1536, %v1624
  %1626 = vmatmul.bf16.gmra.mxu0 %v1463
  %v1627 = vpop.f32.mrf.mxu0
  %v1628 = vadd.f32 %v1539, %v1627
  %v1629 = vpop.f32.mrf.mxu0
  %v1630 = vadd.f32 %v1541, %v1629
  %1631 = vmatmul.bf16.gmra.mxu0 %v1465
  %v1632 = vpop.f32.mrf.mxu0
  %v1633 = vadd.f32 %v1544, %v1632
  %v1634 = vpop.f32.mrf.mxu0
  %v1635 = vadd.f32 %v1546, %v1634
  %1636 = vmatmul.bf16.gmra.mxu0 %v1467
  %v1637 = vpop.f32.mrf.mxu0
  %v1638 = vadd.f32 %v1549, %v1637
  %v1639 = vpop.f32.mrf.mxu0
  %v1640 = vadd.f32 %v1551, %v1639
  %1641 = vmatmul.bf16.gmra.mxu0 %v1469
  %v1642 = vpop.f32.mrf.mxu0
  %v1643 = vadd.f32 %v1554, %v1642
  %v1644 = vpop.f32.mrf.mxu0
  %v1645 = vadd.f32 %v1556, %v1644
  %1646 = vmatmul.bf16.gmra.mxu0 %v1471
  %v1647 = vpop.f32.mrf.mxu0
  %v1648 = vadd.f32 %v1559, %v1647
  %v1649 = vpop.f32.mrf.mxu0
  %v1650 = vadd.f32 %v1561, %v1649
  %1651 = vmatmul.bf16.gmra.mxu0 %v1473
  %v1652 = vpop.f32.mrf.mxu0
  %v1653 = vadd.f32 %v1564, %v1652
  %v1654 = vpop.f32.mrf.mxu0
  %v1655 = vadd.f32 %v1566, %v1654
  %1656 = vmatmul.bf16.gmra.mxu0 %v1475
  %v1657 = vpop.f32.mrf.mxu0
  %v1658 = vadd.f32 %v1569, %v1657
  %v1659 = vpop.f32.mrf.mxu0
  %v1660 = vadd.f32 %v1571, %v1659
  %1661 = vmatmul.bf16.gmra.mxu0 %v1477
  %v1662 = vpop.f32.mrf.mxu0
  %v1663 = vadd.f32 %v1574, %v1662
  %v1664 = vpop.f32.mrf.mxu0
  %v1665 = vadd.f32 %v1576, %v1664
  %1666 = vmatmul.bf16.gmra.mxu0 %v1479
  %v1667 = vpop.f32.mrf.mxu0
  %v1668 = vadd.f32 %v1579, %v1667
  %v1669 = vpop.f32.mrf.mxu0
  %v1670 = vadd.f32 %v1581, %v1669
  %1671 = vmatmul.bf16.gmra.mxu0 %v1481
  %v1672 = vpop.f32.mrf.mxu0
  %v1673 = vadd.f32 %v1584, %v1672
  %v1674 = vpop.f32.mrf.mxu0
  %v1675 = vadd.f32 %v1586, %v1674
  %1676 = vmatmul.bf16.gmra.mxu0 %v1483
  %v1677 = vpop.f32.mrf.mxu0
  %v1678 = vadd.f32 %v1589, %v1677
  %v1679 = vpop.f32.mrf.mxu0
  %v1680 = vadd.f32 %v1591, %v1679
  %1681 = vmatmul.bf16.gmra.mxu0 %v1485
  %v1682 = vpop.f32.mrf.mxu0
  %v1683 = vadd.f32 %v1594, %v1682
  %v1684 = vpop.f32.mrf.mxu0
  %v1685 = vadd.f32 %v1596, %v1684
  %1686 = vmatmul.bf16.gmra.mxu0 %v1487
  %v1687 = vpop.f32.mrf.mxu0
  %v1688 = vadd.f32 %v1599, %v1687
  %v1689 = vpop.f32.mrf.mxu0
  %v1690 = vadd.f32 %v1601, %v1689
  %1691 = vmatmul.bf16.gmra.mxu0 %v1489
  %v1692 = vpop.f32.mrf.mxu0
  %v1693 = vadd.f32 %v1604, %v1692
  %v1694 = vpop.f32.mrf.mxu0
  %v1695 = vadd.f32 %v1606, %v1694
  %1696 = vmatmul.bf16.gmra.mxu0 %v1491
  %v1697 = vpop.f32.mrf.mxu0
  %v1698 = vadd.f32 %v1609, %v1697
  %v1699 = vpop.f32.mrf.mxu0
  %v1700 = vadd.f32 %v1611, %v1699
  %1701 = vdwg.mxu0
  %v1702 = vmax.f32 %v1299, %v1623
  %v1703 = vmax.f32 %v1300, %v1625
  %v1704 = vmax.f32 %v1301, %v1628
  %v1705 = vmax.f32 %v1302, %v1630
  %v1706 = vmax.f32 %v1303, %v1633
  %v1707 = vmax.f32 %v1304, %v1635
  %v1708 = vmax.f32 %v1305, %v1638
  %v1709 = vmax.f32 %v1306, %v1640
  %v1710 = vmax.f32 %v1307, %v1643
  %v1711 = vmax.f32 %v1308, %v1645
  %v1712 = vmax.f32 %v1309, %v1648
  %v1713 = vmax.f32 %v1310, %v1650
  %v1714 = vmax.f32 %v1311, %v1653
  %v1715 = vmax.f32 %v1312, %v1655
  %v1716 = vmax.f32 %v1313, %v1658
  %v1717 = vmax.f32 %v1314, %v1660
  %v1718 = vmax.f32 %v1315, %v1663
  %v1719 = vmax.f32 %v1316, %v1665
  %v1720 = vmax.f32 %v1317, %v1668
  %v1721 = vmax.f32 %v1318, %v1670
  %v1722 = vmax.f32 %v1319, %v1673
  %v1723 = vmax.f32 %v1320, %v1675
  %v1724 = vmax.f32 %v1321, %v1678
  %v1725 = vmax.f32 %v1322, %v1680
  %v1726 = vmax.f32 %v1323, %v1683
  %v1727 = vmax.f32 %v1324, %v1685
  %v1728 = vmax.f32 %v1325, %v1688
  %v1729 = vmax.f32 %v1326, %v1690
  %v1730 = vmax.f32 %v1327, %v1693
  %v1731 = vmax.f32 %v1328, %v1695
  %v1732 = vmax.f32 %v1329, %v1698
  %v1733 = vmax.f32 %v1330, %v1700
  %v1734 = vld [vmem:[%s2] sm:$0x1]
  %v1736 = vperm.slane %v1734, 0
  %v1738 = vadd.f32 %v1702, %v1736
  %v1739 = vadd.f32 %v1703, %v1736
  %v1740 = vadd.f32 %v1704, %v1736
  %v1741 = vadd.f32 %v1705, %v1736
  %v1742 = vadd.f32 %v1706, %v1736
  %v1743 = vadd.f32 %v1707, %v1736
  %v1744 = vadd.f32 %v1708, %v1736
  %v1745 = vadd.f32 %v1709, %v1736
  %v1746 = vadd.f32 %v1710, %v1736
  %v1747 = vadd.f32 %v1711, %v1736
  %v1748 = vadd.f32 %v1712, %v1736
  %v1749 = vadd.f32 %v1713, %v1736
  %v1750 = vadd.f32 %v1714, %v1736
  %v1751 = vadd.f32 %v1715, %v1736
  %v1752 = vadd.f32 %v1716, %v1736
  %v1753 = vadd.f32 %v1717, %v1736
  %v1754 = vadd.f32 %v1718, %v1736
  %v1755 = vadd.f32 %v1719, %v1736
  %v1756 = vadd.f32 %v1720, %v1736
  %v1757 = vadd.f32 %v1721, %v1736
  %v1758 = vadd.f32 %v1722, %v1736
  %v1759 = vadd.f32 %v1723, %v1736
  %v1760 = vadd.f32 %v1724, %v1736
  %v1761 = vadd.f32 %v1725, %v1736
  %v1762 = vadd.f32 %v1726, %v1736
  %v1763 = vadd.f32 %v1727, %v1736
  %v1764 = vadd.f32 %v1728, %v1736
  %v1765 = vadd.f32 %v1729, %v1736
  %v1766 = vadd.f32 %v1730, %v1736
  %v1767 = vadd.f32 %v1731, %v1736
  %v1768 = vadd.f32 %v1732, %v1736
  %v1769 = vadd.f32 %v1733, %v1736
  %v1770 = vmax.f32 %v1738, 0.0
  %v1771 = vmax.f32 %v1739, 0.0
  %v1772 = vmax.f32 %v1740, 0.0
  %v1773 = vmax.f32 %v1741, 0.0
  %v1774 = vmax.f32 %v1742, 0.0
  %v1775 = vmax.f32 %v1743, 0.0
  %v1776 = vmax.f32 %v1744, 0.0
  %v1777 = vmax.f32 %v1745, 0.0
  %v1778 = vmax.f32 %v1746, 0.0
  %v1779 = vmax.f32 %v1747, 0.0
  %v1780 = vmax.f32 %v1748, 0.0
  %v1781 = vmax.f32 %v1749, 0.0
  %v1782 = vmax.f32 %v1750, 0.0
  %v1783 = vmax.f32 %v1751, 0.0
  %v1784 = vmax.f32 %v1752, 0.0
  %v1785 = vmax.f32 %v1753, 0.0
  %v1786 = vmax.f32 %v1754, 0.0
  %v1787 = vmax.f32 %v1755, 0.0
  %v1788 = vmax.f32 %v1756, 0.0
  %v1789 = vmax.f32 %v1757, 0.0
  %v1790 = vmax.f32 %v1758, 0.0
  %v1791 = vmax.f32 %v1759, 0.0
  %v1792 = vmax.f32 %v1760, 0.0
  %v1793 = vmax.f32 %v1761, 0.0
  %v1794 = vmax.f32 %v1762, 0.0
  %v1795 = vmax.f32 %v1763, 0.0
  %v1796 = vmax.f32 %v1764, 0.0
  %v1797 = vmax.f32 %v1765, 0.0
  %v1798 = vmax.f32 %v1766, 0.0
  %v1799 = vmax.f32 %v1767, 0.0
  %v1800 = vmax.f32 %v1768, 0.0
  %v1801 = vmax.f32 %v1769, 0.0
  %v1802 = vld [vmem:[%s4] sm:$0x1]
  %v1804 = vperm.slane %v1802, 0
  %v1806 = vadd.f32 %v1804, 0.0
  %v1807 = vpack.c.bf16 %v1771, %v1770
  %v1808 = vld [vmem:[%s3] sm:$0xf]
  %v1809 = vld [vmem:[%s3 + $0x4] sm:$0xf]
  %v1810 = vld [vmem:[%s3 + $0x8] sm:$0xf]
  %v1811 = vld [vmem:[%s3 + $0xc] sm:$0xf]
  %v1816 = vunpack.c.l.b16 %v1808
  %v1817 = vunpack.c.l.b16 %v1809
  %v1818 = vunpack.c.l.b16 %v1810
  %v1819 = vunpack.c.l.b16 %v1811
  %v1820 = vpack.c.b16 %v1817, %v1816
  %v1821 = vpack.c.b16 %v1819, %v1818
  %vm1824 = vcmask 261120
  %v1826 = vsel %vm1824, %v1807, 0
  %1828 = vmatpush.bf16.msra.mxu0 0
  %1829 = vmatpush.bf16.msra.mxu0 0
  %1830 = vmatpush.bf16.msra.mxu0 0
  %1831 = vmatpush.bf16.msra.mxu0 0
  %1832 = vmatpush.bf16.msra.mxu0 0
  %1833 = vmatpush.bf16.msra.mxu0 0
  %1834 = vmatpush.bf16.msra.mxu0 %v1821
  %1835 = vmatpush.bf16.msra.mxu0 %v1820
  %1836 = vmatmul.bf16.gmra.mxu0 %v1826
  %v1837 = vpop.f32.mrf.mxu0
  %v1838 = vadd.f32 0.0, %v1837
  %v1839 = vpop.f32.mrf.mxu0
  %v1840 = vadd.f32 0.0, %v1839
  %1841 = vdwg.mxu0
  %v1842 = vadd.f32 %v1806, %v1838
  %v1843 = vadd.f32 %v1806, %v1840
  %v1844 = vpack.c.bf16 %v1773, %v1772
  %s1845 = scalar_lea.vmem %s3, 16
  %v1846 = vld [vmem:[%s1845] sm:$0xf]
  %v1847 = vld [vmem:[%s1845 + $0x4] sm:$0xf]
  %v1848 = vld [vmem:[%s1845 + $0x8] sm:$0xf]
  %v1849 = vld [vmem:[%s1845 + $0xc] sm:$0xf]
  %v1854 = vunpack.c.l.b16 %v1846
  %v1855 = vunpack.c.l.b16 %v1847
  %v1856 = vunpack.c.l.b16 %v1848
  %v1857 = vunpack.c.l.b16 %v1849
  %v1858 = vpack.c.b16 %v1855, %v1854
  %v1859 = vpack.c.b16 %v1857, %v1856
  %v1863 = vsel %vm1824, %v1844, 0
  %1865 = vmatpush.bf16.msra.mxu0 0
  %1866 = vmatpush.bf16.msra.mxu0 0
  %1867 = vmatpush.bf16.msra.mxu0 0
  %1868 = vmatpush.bf16.msra.mxu0 0
  %1869 = vmatpush.bf16.msra.mxu0 0
  %1870 = vmatpush.bf16.msra.mxu0 0
  %1871 = vmatpush.bf16.msra.mxu0 %v1859
  %1872 = vmatpush.bf16.msra.mxu0 %v1858
  %1873 = vmatmul.bf16.gmra.mxu0 %v1863
  %v1874 = vpop.f32.mrf.mxu0
  %v1875 = vadd.f32 0.0, %v1874
  %v1876 = vpop.f32.mrf.mxu0
  %v1877 = vadd.f32 0.0, %v1876
  %1878 = vdwg.mxu0
  %v1879 = vadd.f32 %v1842, %v1875
  %v1880 = vadd.f32 %v1843, %v1877
  %v1881 = vpack.c.bf16 %v1775, %v1774
  %s1882 = scalar_lea.vmem %s3, 32
  %v1883 = vld [vmem:[%s1882] sm:$0xf]
  %v1884 = vld [vmem:[%s1882 + $0x4] sm:$0xf]
  %v1885 = vld [vmem:[%s1882 + $0x8] sm:$0xf]
  %v1886 = vld [vmem:[%s1882 + $0xc] sm:$0xf]
  %v1891 = vunpack.c.l.b16 %v1883
  %v1892 = vunpack.c.l.b16 %v1884
  %v1893 = vunpack.c.l.b16 %v1885
  %v1894 = vunpack.c.l.b16 %v1886
  %v1895 = vpack.c.b16 %v1892, %v1891
  %v1896 = vpack.c.b16 %v1894, %v1893
  %v1900 = vsel %vm1824, %v1881, 0
  %1902 = vmatpush.bf16.msra.mxu0 0
  %1903 = vmatpush.bf16.msra.mxu0 0
  %1904 = vmatpush.bf16.msra.mxu0 0
  %1905 = vmatpush.bf16.msra.mxu0 0
  %1906 = vmatpush.bf16.msra.mxu0 0
  %1907 = vmatpush.bf16.msra.mxu0 0
  %1908 = vmatpush.bf16.msra.mxu0 %v1896
  %1909 = vmatpush.bf16.msra.mxu0 %v1895
  %1910 = vmatmul.bf16.gmra.mxu0 %v1900
  %v1911 = vpop.f32.mrf.mxu0
  %v1912 = vadd.f32 0.0, %v1911
  %v1913 = vpop.f32.mrf.mxu0
  %v1914 = vadd.f32 0.0, %v1913
  %1915 = vdwg.mxu0
  %v1916 = vadd.f32 %v1879, %v1912
  %v1917 = vadd.f32 %v1880, %v1914
  %v1918 = vpack.c.bf16 %v1777, %v1776
  %s1919 = scalar_lea.vmem %s3, 48
  %v1920 = vld [vmem:[%s1919] sm:$0xf]
  %v1921 = vld [vmem:[%s1919 + $0x4] sm:$0xf]
  %v1922 = vld [vmem:[%s1919 + $0x8] sm:$0xf]
  %v1923 = vld [vmem:[%s1919 + $0xc] sm:$0xf]
  %v1928 = vunpack.c.l.b16 %v1920
  %v1929 = vunpack.c.l.b16 %v1921
  %v1930 = vunpack.c.l.b16 %v1922
  %v1931 = vunpack.c.l.b16 %v1923
  %v1932 = vpack.c.b16 %v1929, %v1928
  %v1933 = vpack.c.b16 %v1931, %v1930
  %v1937 = vsel %vm1824, %v1918, 0
  %1939 = vmatpush.bf16.msra.mxu0 0
  %1940 = vmatpush.bf16.msra.mxu0 0
  %1941 = vmatpush.bf16.msra.mxu0 0
  %1942 = vmatpush.bf16.msra.mxu0 0
  %1943 = vmatpush.bf16.msra.mxu0 0
  %1944 = vmatpush.bf16.msra.mxu0 0
  %1945 = vmatpush.bf16.msra.mxu0 %v1933
  %1946 = vmatpush.bf16.msra.mxu0 %v1932
  %1947 = vmatmul.bf16.gmra.mxu0 %v1937
  %v1948 = vpop.f32.mrf.mxu0
  %v1949 = vadd.f32 0.0, %v1948
  %v1950 = vpop.f32.mrf.mxu0
  %v1951 = vadd.f32 0.0, %v1950
  %1952 = vdwg.mxu0
  %v1953 = vadd.f32 %v1916, %v1949
  %v1954 = vadd.f32 %v1917, %v1951
  %v1955 = vpack.c.bf16 %v1779, %v1778
  %s1956 = scalar_lea.vmem %s3, 64
  %v1957 = vld [vmem:[%s1956] sm:$0xf]
  %v1958 = vld [vmem:[%s1956 + $0x4] sm:$0xf]
  %v1959 = vld [vmem:[%s1956 + $0x8] sm:$0xf]
  %v1960 = vld [vmem:[%s1956 + $0xc] sm:$0xf]
  %v1965 = vunpack.c.l.b16 %v1957
  %v1966 = vunpack.c.l.b16 %v1958
  %v1967 = vunpack.c.l.b16 %v1959
  %v1968 = vunpack.c.l.b16 %v1960
  %v1969 = vpack.c.b16 %v1966, %v1965
  %v1970 = vpack.c.b16 %v1968, %v1967
  %v1974 = vsel %vm1824, %v1955, 0
  %1976 = vmatpush.bf16.msra.mxu0 0
  %1977 = vmatpush.bf16.msra.mxu0 0
  %1978 = vmatpush.bf16.msra.mxu0 0
  %1979 = vmatpush.bf16.msra.mxu0 0
  %1980 = vmatpush.bf16.msra.mxu0 0
  %1981 = vmatpush.bf16.msra.mxu0 0
  %1982 = vmatpush.bf16.msra.mxu0 %v1970
  %1983 = vmatpush.bf16.msra.mxu0 %v1969
  %1984 = vmatmul.bf16.gmra.mxu0 %v1974
  %v1985 = vpop.f32.mrf.mxu0
  %v1986 = vadd.f32 0.0, %v1985
  %v1987 = vpop.f32.mrf.mxu0
  %v1988 = vadd.f32 0.0, %v1987
  %1989 = vdwg.mxu0
  %v1990 = vadd.f32 %v1953, %v1986
  %v1991 = vadd.f32 %v1954, %v1988
  %v1992 = vpack.c.bf16 %v1781, %v1780
  %s1993 = scalar_lea.vmem %s3, 80
  %v1994 = vld [vmem:[%s1993] sm:$0xf]
  %v1995 = vld [vmem:[%s1993 + $0x4] sm:$0xf]
  %v1996 = vld [vmem:[%s1993 + $0x8] sm:$0xf]
  %v1997 = vld [vmem:[%s1993 + $0xc] sm:$0xf]
  %v2002 = vunpack.c.l.b16 %v1994
  %v2003 = vunpack.c.l.b16 %v1995
  %v2004 = vunpack.c.l.b16 %v1996
  %v2005 = vunpack.c.l.b16 %v1997
  %v2006 = vpack.c.b16 %v2003, %v2002
  %v2007 = vpack.c.b16 %v2005, %v2004
  %v2011 = vsel %vm1824, %v1992, 0
  %2013 = vmatpush.bf16.msra.mxu0 0
  %2014 = vmatpush.bf16.msra.mxu0 0
  %2015 = vmatpush.bf16.msra.mxu0 0
  %2016 = vmatpush.bf16.msra.mxu0 0
  %2017 = vmatpush.bf16.msra.mxu0 0
  %2018 = vmatpush.bf16.msra.mxu0 0
  %2019 = vmatpush.bf16.msra.mxu0 %v2007
  %2020 = vmatpush.bf16.msra.mxu0 %v2006
  %2021 = vmatmul.bf16.gmra.mxu0 %v2011
  %v2022 = vpop.f32.mrf.mxu0
  %v2023 = vadd.f32 0.0, %v2022
  %v2024 = vpop.f32.mrf.mxu0
  %v2025 = vadd.f32 0.0, %v2024
  %2026 = vdwg.mxu0
  %v2027 = vadd.f32 %v1990, %v2023
  %v2028 = vadd.f32 %v1991, %v2025
  %v2029 = vpack.c.bf16 %v1783, %v1782
  %s2030 = scalar_lea.vmem %s3, 96
  %v2031 = vld [vmem:[%s2030] sm:$0xf]
  %v2032 = vld [vmem:[%s2030 + $0x4] sm:$0xf]
  %v2033 = vld [vmem:[%s2030 + $0x8] sm:$0xf]
  %v2034 = vld [vmem:[%s2030 + $0xc] sm:$0xf]
  %v2039 = vunpack.c.l.b16 %v2031
  %v2040 = vunpack.c.l.b16 %v2032
  %v2041 = vunpack.c.l.b16 %v2033
  %v2042 = vunpack.c.l.b16 %v2034
  %v2043 = vpack.c.b16 %v2040, %v2039
  %v2044 = vpack.c.b16 %v2042, %v2041
  %v2048 = vsel %vm1824, %v2029, 0
  %2050 = vmatpush.bf16.msra.mxu0 0
  %2051 = vmatpush.bf16.msra.mxu0 0
  %2052 = vmatpush.bf16.msra.mxu0 0
  %2053 = vmatpush.bf16.msra.mxu0 0
  %2054 = vmatpush.bf16.msra.mxu0 0
  %2055 = vmatpush.bf16.msra.mxu0 0
  %2056 = vmatpush.bf16.msra.mxu0 %v2044
  %2057 = vmatpush.bf16.msra.mxu0 %v2043
  %2058 = vmatmul.bf16.gmra.mxu0 %v2048
  %v2059 = vpop.f32.mrf.mxu0
  %v2060 = vadd.f32 0.0, %v2059
  %v2061 = vpop.f32.mrf.mxu0
  %v2062 = vadd.f32 0.0, %v2061
  %2063 = vdwg.mxu0
  %v2064 = vadd.f32 %v2027, %v2060
  %v2065 = vadd.f32 %v2028, %v2062
  %v2066 = vpack.c.bf16 %v1785, %v1784
  %s2067 = scalar_lea.vmem %s3, 112
  %v2068 = vld [vmem:[%s2067] sm:$0xf]
  %v2069 = vld [vmem:[%s2067 + $0x4] sm:$0xf]
  %v2070 = vld [vmem:[%s2067 + $0x8] sm:$0xf]
  %v2071 = vld [vmem:[%s2067 + $0xc] sm:$0xf]
  %v2076 = vunpack.c.l.b16 %v2068
  %v2077 = vunpack.c.l.b16 %v2069
  %v2078 = vunpack.c.l.b16 %v2070
  %v2079 = vunpack.c.l.b16 %v2071
  %v2080 = vpack.c.b16 %v2077, %v2076
  %v2081 = vpack.c.b16 %v2079, %v2078
  %v2085 = vsel %vm1824, %v2066, 0
  %2087 = vmatpush.bf16.msra.mxu0 0
  %2088 = vmatpush.bf16.msra.mxu0 0
  %2089 = vmatpush.bf16.msra.mxu0 0
  %2090 = vmatpush.bf16.msra.mxu0 0
  %2091 = vmatpush.bf16.msra.mxu0 0
  %2092 = vmatpush.bf16.msra.mxu0 0
  %2093 = vmatpush.bf16.msra.mxu0 %v2081
  %2094 = vmatpush.bf16.msra.mxu0 %v2080
  %2095 = vmatmul.bf16.gmra.mxu0 %v2085
  %v2096 = vpop.f32.mrf.mxu0
  %v2097 = vadd.f32 0.0, %v2096
  %v2098 = vpop.f32.mrf.mxu0
  %v2099 = vadd.f32 0.0, %v2098
  %2100 = vdwg.mxu0
  %v2101 = vadd.f32 %v2064, %v2097
  %v2102 = vadd.f32 %v2065, %v2099
  %v2103 = vpack.c.bf16 %v1787, %v1786
  %s2104 = scalar_lea.vmem %s3, 128
  %v2105 = vld [vmem:[%s2104] sm:$0xf]
  %v2106 = vld [vmem:[%s2104 + $0x4] sm:$0xf]
  %v2107 = vld [vmem:[%s2104 + $0x8] sm:$0xf]
  %v2108 = vld [vmem:[%s2104 + $0xc] sm:$0xf]
  %v2113 = vunpack.c.l.b16 %v2105
  %v2114 = vunpack.c.l.b16 %v2106
  %v2115 = vunpack.c.l.b16 %v2107
  %v2116 = vunpack.c.l.b16 %v2108
  %v2117 = vpack.c.b16 %v2114, %v2113
  %v2118 = vpack.c.b16 %v2116, %v2115
  %v2122 = vsel %vm1824, %v2103, 0
  %2124 = vmatpush.bf16.msra.mxu0 0
  %2125 = vmatpush.bf16.msra.mxu0 0
  %2126 = vmatpush.bf16.msra.mxu0 0
  %2127 = vmatpush.bf16.msra.mxu0 0
  %2128 = vmatpush.bf16.msra.mxu0 0
  %2129 = vmatpush.bf16.msra.mxu0 0
  %2130 = vmatpush.bf16.msra.mxu0 %v2118
  %2131 = vmatpush.bf16.msra.mxu0 %v2117
  %2132 = vmatmul.bf16.gmra.mxu0 %v2122
  %v2133 = vpop.f32.mrf.mxu0
  %v2134 = vadd.f32 0.0, %v2133
  %v2135 = vpop.f32.mrf.mxu0
  %v2136 = vadd.f32 0.0, %v2135
  %2137 = vdwg.mxu0
  %v2138 = vadd.f32 %v2101, %v2134
  %v2139 = vadd.f32 %v2102, %v2136
  %v2140 = vpack.c.bf16 %v1789, %v1788
  %s2141 = scalar_lea.vmem %s3, 144
  %v2142 = vld [vmem:[%s2141] sm:$0xf]
  %v2143 = vld [vmem:[%s2141 + $0x4] sm:$0xf]
  %v2144 = vld [vmem:[%s2141 + $0x8] sm:$0xf]
  %v2145 = vld [vmem:[%s2141 + $0xc] sm:$0xf]
  %v2150 = vunpack.c.l.b16 %v2142
  %v2151 = vunpack.c.l.b16 %v2143
  %v2152 = vunpack.c.l.b16 %v2144
  %v2153 = vunpack.c.l.b16 %v2145
  %v2154 = vpack.c.b16 %v2151, %v2150
  %v2155 = vpack.c.b16 %v2153, %v2152
  %v2159 = vsel %vm1824, %v2140, 0
  %2161 = vmatpush.bf16.msra.mxu0 0
  %2162 = vmatpush.bf16.msra.mxu0 0
  %2163 = vmatpush.bf16.msra.mxu0 0
  %2164 = vmatpush.bf16.msra.mxu0 0
  %2165 = vmatpush.bf16.msra.mxu0 0
  %2166 = vmatpush.bf16.msra.mxu0 0
  %2167 = vmatpush.bf16.msra.mxu0 %v2155
  %2168 = vmatpush.bf16.msra.mxu0 %v2154
  %2169 = vmatmul.bf16.gmra.mxu0 %v2159
  %v2170 = vpop.f32.mrf.mxu0
  %v2171 = vadd.f32 0.0, %v2170
  %v2172 = vpop.f32.mrf.mxu0
  %v2173 = vadd.f32 0.0, %v2172
  %2174 = vdwg.mxu0
  %v2175 = vadd.f32 %v2138, %v2171
  %v2176 = vadd.f32 %v2139, %v2173
  %v2177 = vpack.c.bf16 %v1791, %v1790
  %s2178 = scalar_lea.vmem %s3, 160
  %v2179 = vld [vmem:[%s2178] sm:$0xf]
  %v2180 = vld [vmem:[%s2178 + $0x4] sm:$0xf]
  %v2181 = vld [vmem:[%s2178 + $0x8] sm:$0xf]
  %v2182 = vld [vmem:[%s2178 + $0xc] sm:$0xf]
  %v2187 = vunpack.c.l.b16 %v2179
  %v2188 = vunpack.c.l.b16 %v2180
  %v2189 = vunpack.c.l.b16 %v2181
  %v2190 = vunpack.c.l.b16 %v2182
  %v2191 = vpack.c.b16 %v2188, %v2187
  %v2192 = vpack.c.b16 %v2190, %v2189
  %v2196 = vsel %vm1824, %v2177, 0
  %2198 = vmatpush.bf16.msra.mxu0 0
  %2199 = vmatpush.bf16.msra.mxu0 0
  %2200 = vmatpush.bf16.msra.mxu0 0
  %2201 = vmatpush.bf16.msra.mxu0 0
  %2202 = vmatpush.bf16.msra.mxu0 0
  %2203 = vmatpush.bf16.msra.mxu0 0
  %2204 = vmatpush.bf16.msra.mxu0 %v2192
  %2205 = vmatpush.bf16.msra.mxu0 %v2191
  %2206 = vmatmul.bf16.gmra.mxu0 %v2196
  %v2207 = vpop.f32.mrf.mxu0
  %v2208 = vadd.f32 0.0, %v2207
  %v2209 = vpop.f32.mrf.mxu0
  %v2210 = vadd.f32 0.0, %v2209
  %2211 = vdwg.mxu0
  %v2212 = vadd.f32 %v2175, %v2208
  %v2213 = vadd.f32 %v2176, %v2210
  %v2214 = vpack.c.bf16 %v1793, %v1792
  %s2215 = scalar_lea.vmem %s3, 176
  %v2216 = vld [vmem:[%s2215] sm:$0xf]
  %v2217 = vld [vmem:[%s2215 + $0x4] sm:$0xf]
  %v2218 = vld [vmem:[%s2215 + $0x8] sm:$0xf]
  %v2219 = vld [vmem:[%s2215 + $0xc] sm:$0xf]
  %v2224 = vunpack.c.l.b16 %v2216
  %v2225 = vunpack.c.l.b16 %v2217
  %v2226 = vunpack.c.l.b16 %v2218
  %v2227 = vunpack.c.l.b16 %v2219
  %v2228 = vpack.c.b16 %v2225, %v2224
  %v2229 = vpack.c.b16 %v2227, %v2226
  %v2233 = vsel %vm1824, %v2214, 0
  %2235 = vmatpush.bf16.msra.mxu0 0
  %2236 = vmatpush.bf16.msra.mxu0 0
  %2237 = vmatpush.bf16.msra.mxu0 0
  %2238 = vmatpush.bf16.msra.mxu0 0
  %2239 = vmatpush.bf16.msra.mxu0 0
  %2240 = vmatpush.bf16.msra.mxu0 0
  %2241 = vmatpush.bf16.msra.mxu0 %v2229
  %2242 = vmatpush.bf16.msra.mxu0 %v2228
  %2243 = vmatmul.bf16.gmra.mxu0 %v2233
  %v2244 = vpop.f32.mrf.mxu0
  %v2245 = vadd.f32 0.0, %v2244
  %v2246 = vpop.f32.mrf.mxu0
  %v2247 = vadd.f32 0.0, %v2246
  %2248 = vdwg.mxu0
  %v2249 = vadd.f32 %v2212, %v2245
  %v2250 = vadd.f32 %v2213, %v2247
  %v2251 = vpack.c.bf16 %v1795, %v1794
  %s2252 = scalar_lea.vmem %s3, 192
  %v2253 = vld [vmem:[%s2252] sm:$0xf]
  %v2254 = vld [vmem:[%s2252 + $0x4] sm:$0xf]
  %v2255 = vld [vmem:[%s2252 + $0x8] sm:$0xf]
  %v2256 = vld [vmem:[%s2252 + $0xc] sm:$0xf]
  %v2261 = vunpack.c.l.b16 %v2253
  %v2262 = vunpack.c.l.b16 %v2254
  %v2263 = vunpack.c.l.b16 %v2255
  %v2264 = vunpack.c.l.b16 %v2256
  %v2265 = vpack.c.b16 %v2262, %v2261
  %v2266 = vpack.c.b16 %v2264, %v2263
  %v2270 = vsel %vm1824, %v2251, 0
  %2272 = vmatpush.bf16.msra.mxu0 0
  %2273 = vmatpush.bf16.msra.mxu0 0
  %2274 = vmatpush.bf16.msra.mxu0 0
  %2275 = vmatpush.bf16.msra.mxu0 0
  %2276 = vmatpush.bf16.msra.mxu0 0
  %2277 = vmatpush.bf16.msra.mxu0 0
  %2278 = vmatpush.bf16.msra.mxu0 %v2266
  %2279 = vmatpush.bf16.msra.mxu0 %v2265
  %2280 = vmatmul.bf16.gmra.mxu0 %v2270
  %v2281 = vpop.f32.mrf.mxu0
  %v2282 = vadd.f32 0.0, %v2281
  %v2283 = vpop.f32.mrf.mxu0
  %v2284 = vadd.f32 0.0, %v2283
  %2285 = vdwg.mxu0
  %v2286 = vadd.f32 %v2249, %v2282
  %v2287 = vadd.f32 %v2250, %v2284
  %v2288 = vpack.c.bf16 %v1797, %v1796
  %s2289 = scalar_lea.vmem %s3, 208
  %v2290 = vld [vmem:[%s2289] sm:$0xf]
  %v2291 = vld [vmem:[%s2289 + $0x4] sm:$0xf]
  %v2292 = vld [vmem:[%s2289 + $0x8] sm:$0xf]
  %v2293 = vld [vmem:[%s2289 + $0xc] sm:$0xf]
  %v2298 = vunpack.c.l.b16 %v2290
  %v2299 = vunpack.c.l.b16 %v2291
  %v2300 = vunpack.c.l.b16 %v2292
  %v2301 = vunpack.c.l.b16 %v2293
  %v2302 = vpack.c.b16 %v2299, %v2298
  %v2303 = vpack.c.b16 %v2301, %v2300
  %v2307 = vsel %vm1824, %v2288, 0
  %2309 = vmatpush.bf16.msra.mxu0 0
  %2310 = vmatpush.bf16.msra.mxu0 0
  %2311 = vmatpush.bf16.msra.mxu0 0
  %2312 = vmatpush.bf16.msra.mxu0 0
  %2313 = vmatpush.bf16.msra.mxu0 0
  %2314 = vmatpush.bf16.msra.mxu0 0
  %2315 = vmatpush.bf16.msra.mxu0 %v2303
  %2316 = vmatpush.bf16.msra.mxu0 %v2302
  %2317 = vmatmul.bf16.gmra.mxu0 %v2307
  %v2318 = vpop.f32.mrf.mxu0
  %v2319 = vadd.f32 0.0, %v2318
  %v2320 = vpop.f32.mrf.mxu0
  %v2321 = vadd.f32 0.0, %v2320
  %2322 = vdwg.mxu0
  %v2323 = vadd.f32 %v2286, %v2319
  %v2324 = vadd.f32 %v2287, %v2321
  %v2325 = vpack.c.bf16 %v1799, %v1798
  %s2326 = scalar_lea.vmem %s3, 224
  %v2327 = vld [vmem:[%s2326] sm:$0xf]
  %v2328 = vld [vmem:[%s2326 + $0x4] sm:$0xf]
  %v2329 = vld [vmem:[%s2326 + $0x8] sm:$0xf]
  %v2330 = vld [vmem:[%s2326 + $0xc] sm:$0xf]
  %v2335 = vunpack.c.l.b16 %v2327
  %v2336 = vunpack.c.l.b16 %v2328
  %v2337 = vunpack.c.l.b16 %v2329
  %v2338 = vunpack.c.l.b16 %v2330
  %v2339 = vpack.c.b16 %v2336, %v2335
  %v2340 = vpack.c.b16 %v2338, %v2337
  %v2344 = vsel %vm1824, %v2325, 0
  %2346 = vmatpush.bf16.msra.mxu0 0
  %2347 = vmatpush.bf16.msra.mxu0 0
  %2348 = vmatpush.bf16.msra.mxu0 0
  %2349 = vmatpush.bf16.msra.mxu0 0
  %2350 = vmatpush.bf16.msra.mxu0 0
  %2351 = vmatpush.bf16.msra.mxu0 0
  %2352 = vmatpush.bf16.msra.mxu0 %v2340
  %2353 = vmatpush.bf16.msra.mxu0 %v2339
  %2354 = vmatmul.bf16.gmra.mxu0 %v2344
  %v2355 = vpop.f32.mrf.mxu0
  %v2356 = vadd.f32 0.0, %v2355
  %v2357 = vpop.f32.mrf.mxu0
  %v2358 = vadd.f32 0.0, %v2357
  %2359 = vdwg.mxu0
  %v2360 = vadd.f32 %v2323, %v2356
  %v2361 = vadd.f32 %v2324, %v2358
  %v2362 = vpack.c.bf16 %v1801, %v1800
  %s2363 = scalar_lea.vmem %s3, 240
  %v2364 = vld [vmem:[%s2363] sm:$0xf]
  %v2365 = vld [vmem:[%s2363 + $0x4] sm:$0xf]
  %v2366 = vld [vmem:[%s2363 + $0x8] sm:$0xf]
  %v2367 = vld [vmem:[%s2363 + $0xc] sm:$0xf]
  %v2372 = vunpack.c.l.b16 %v2364
  %v2373 = vunpack.c.l.b16 %v2365
  %v2374 = vunpack.c.l.b16 %v2366
  %v2375 = vunpack.c.l.b16 %v2367
  %v2376 = vpack.c.b16 %v2373, %v2372
  %v2377 = vpack.c.b16 %v2375, %v2374
  %v2381 = vsel %vm1824, %v2362, 0
  %2383 = vmatpush.bf16.msra.mxu0 0
  %2384 = vmatpush.bf16.msra.mxu0 0
  %2385 = vmatpush.bf16.msra.mxu0 0
  %2386 = vmatpush.bf16.msra.mxu0 0
  %2387 = vmatpush.bf16.msra.mxu0 0
  %2388 = vmatpush.bf16.msra.mxu0 0
  %2389 = vmatpush.bf16.msra.mxu0 %v2377
  %2390 = vmatpush.bf16.msra.mxu0 %v2376
  %2391 = vmatmul.bf16.gmra.mxu0 %v2381
  %v2392 = vpop.f32.mrf.mxu0
  %v2393 = vadd.f32 0.0, %v2392
  %v2394 = vpop.f32.mrf.mxu0
  %v2395 = vadd.f32 0.0, %v2394
  %2396 = vdwg.mxu0
  %v2397 = vadd.f32 %v2360, %v2393
  %v2398 = vadd.f32 %v2361, %v2395
  %v2399 = vmax.f32 %v2397, 0.0
  %v2400 = vmax.f32 %v2398, 0.0
  %v2401 = vpack.c.bf16 %v2400, %v2399
  %v2402 = vld [vmem:[%s5] sm:$0xf]
  %v2403 = vld [vmem:[%s5 + $0x4] sm:$0xf]
  %v2404 = vld [vmem:[%s5 + $0x8] sm:$0xf]
  %v2405 = vld [vmem:[%s5 + $0xc] sm:$0xf]
  %v2406 = vld [vmem:[%s5 + $0x10] sm:$0xf]
  %v2407 = vld [vmem:[%s5 + $0x14] sm:$0xf]
  %v2408 = vld [vmem:[%s5 + $0x18] sm:$0xf]
  %v2409 = vld [vmem:[%s5 + $0x1c] sm:$0xf]
  %v2410 = vld [vmem:[%s6] sm:$0x1]
  %v2412 = vperm.slane %v2410, 0
  %v2422 = vunpack.c.l.b16 %v2402
  %v2423 = vunpack.c.l.b16 %v2403
  %v2424 = vunpack.c.l.b16 %v2404
  %v2425 = vunpack.c.l.b16 %v2405
  %v2426 = vunpack.c.l.b16 %v2406
  %v2427 = vunpack.c.l.b16 %v2407
  %v2428 = vunpack.c.l.b16 %v2408
  %v2429 = vunpack.c.l.b16 %v2409
  %v2430 = vpack.c.b16 %v2423, %v2422
  %v2431 = vpack.c.b16 %v2425, %v2424
  %v2432 = vpack.c.b16 %v2427, %v2426
  %v2433 = vpack.c.b16 %v2429, %v2428
  %vm2438 = vcmask 523264
  %v2440 = vsel %vm2438, %v2401, 0
  %2442 = vmatpush.bf16.msra.mxu0 0
  %2443 = vmatpush.bf16.msra.mxu0 0
  %2444 = vmatpush.bf16.msra.mxu0 0
  %2445 = vmatpush.bf16.msra.mxu0 0
  %2446 = vmatpush.bf16.msra.mxu0 %v2433
  %2447 = vmatpush.bf16.msra.mxu0 %v2432
  %2448 = vmatpush.bf16.msra.mxu0 %v2431
  %2449 = vmatpush.bf16.msra.mxu0 %v2430
  %2450 = vmatmul.bf16.gmra.mxu0 %v2440
  %v2451 = vpop.f32.mrf.mxu0
  %v2452 = vadd.f32 %v2412, %v2451
  %v2453 = vpop.f32.mrf.mxu0
  %v2454 = vadd.f32 %v2412, %v2453
  %2455 = vdwg.mxu0
  %vm2456 = vcmask 80896
  %v2457 = vsel %vm2456, %v2452, -inf
  %2458 = vmax.xlane.f32.xlu0 %v2457
  %v2459 = vpop.xlane.xlu0 %2458
  %v2460 = vsel %vm2456, %v2454, -inf
  %2461 = vmax.xlane.f32.xlu0 %v2460
  %v2462 = vpop.xlane.xlu0 %2461
  %v2463 = vsub.f32 %v2452, %v2459
  %v2464 = vsub.f32 %v2454, %v2462
  %v2465 = vmul.f32 %v2463, 1.442695
  %v2466 = vpow.pop %v2465
  %v2467 = vmul.f32 %v2464, 1.442695
  %v2468 = vpow.pop %v2467
  %v2469 = vsel %vm2456, %v2466, 0.0
  %2470 = vadd.xlane.f32.xlu0 %v2469
  %v2471 = vpop.xlane.xlu0 %2470
  %v2472 = vsel %vm2456, %v2468, 0.0
  %2473 = vadd.xlane.f32.xlu0 %v2472
  %v2474 = vpop.xlane.xlu0 %2473
  %v2475 = vlog2.pop %v2471
  %v2476 = vmul.f32 %v2475, 0.6931472
  %v2477 = vlog2.pop %v2474
  %v2478 = vmul.f32 %v2477, 0.6931472
  %v2479 = vadd.f32 %v2459, %v2476
  %v2480 = vadd.f32 %v2462, %v2478
  %v2481 = vsub.f32 %v2452, %v2479
  %v2482 = vsub.f32 %v2454, %v2480
  %2483 = vst.msk [vmem:[%s7] sm:$0xff] %vm2456, %v2481
  %2484 = vst.msk [vmem:[%s7 + $0x8] sm:$0xff] %vm2456, %v2482
  // Predicated region
  $region30: #{net_forward.3} parent=0 // pred_check
    _
  $region31: #{net_forward.3} parent=0 // pred_check_branch
    %2486 = sbr.rel (0) target = $region33
  $region32: #{net_forward.3} parent=0 // pred_region
    _
  $region33: #{net_forward.3} parent=0 // pred_fallthru
    _
  // Predicated region
  $region34: #{net_forward.3} parent=0 // pred_check
    _
  $region35: #{net_forward.3} parent=0 // pred_check_branch
    %2488 = sbr.rel (0) target = $region37
  $region36: #{net_forward.3} parent=0 // pred_region
    _
  $region37: #{net_forward.3} parent=0 // pred_fallthru
    _

</llo_original>
